<compile_context>
chip_gen: v7x
topology: tpu7x:2x2x1
jax: 0.10.0
libtpu: 0.0.40
codegen_flags: <defaults>
</compile_context>

<pallas_src>
import functools
import math

import jax
import jax.numpy as jnp
from jax.experimental import pallas as pl
from jax.experimental.pallas import tpu as pltpu

_HALO = 8  # halo rows fetched below each input row tile (>= k - stride for k <= 7)


@functools.lru_cache(maxsize=None)
def _vmem_limit_bytes():
    cap = 128 * 1024 * 1024
    try:
        cap = int(pltpu.get_tpu_info().vmem_capacity_bytes)
    except Exception:  # pragma: no cover - defensive (older jax / CPU tracing)
        pass
    # Leave headroom; v7x only has 64 MiB physical VMEM per TensorCore.
    return min((cap * 3) // 4, 100 * 1024 * 1024)


def _round_up(x, m):
    return -(-x // m) * m


def _ky_groups(k, cin_p, target_k=1024):
    """Group kernel rows so each MXU matmul gets contraction depth ~target_k."""
    g = max(1, min(k, target_k // (k * cin_p)))
    groups, ky = [], 0
    while ky < k:
        cur = min(g, k - ky)
        groups.append((ky, cur))
        ky += cur
    return tuple(groups)


def _pick_tile_h(ho, wo_p, wp, cin_p, cout, k, stride, g_max, has_res):
    """Pick an output-row tile height that fits the per-generation VMEM budget."""
    th_unit = _HALO // math.gcd(stride, _HALO)      # keeps 8 | (tile_h * stride)
    max_units = max(1, -(-ho // th_unit))
    units = min(4, max_units)                        # start at <= 32 output rows
    budget = int(_vmem_limit_bytes() * 0.8)
    while True:
        th = units * th_unit
        th_in = th * stride
        est = (2 * (th_in + _HALO) * wp * cin_p * 2      # main+halo blocks (x2 buffers), bf16
               + (th_in + _HALO) * wp * cin_p * 2        # in-kernel row-window temporary
               + th * wo_p * (g_max * k * cin_p) * 2     # im2col slab (bf16)
               + th * wo_p * cout * 4                    # f32 accumulator
               + 2 * th * wo_p * cout * 2                # output blocks (x2 buffers), bf16
               + (2 * th * wo_p * cout * 2 if has_res else 0)
               + 2 * k * k * cin_p * cout * 2)           # weights (x2 buffers), bf16
        if est <= budget or units <= 1:
            return th
        units -= 1
    # TODO(synk): very wide + very deep layers (e.g. the 1152->500 conv at 224px)
    # would additionally need W tiling to fit v7x's 64 MiB VMEM.


# ----------------------------------------------------------------------------
# Pallas kernels
# ----------------------------------------------------------------------------
def _conv_bn_kernel(*refs, k, stride, th, wo, cin_p, groups, relu, has_res):
    """Fused conv(k x k, H-strided) + folded BN + optional residual + ReLU.

    refs = (x_main, x_halo, w, scale, bias, [residual,] out)
      x_main : (1, th*stride, Wp, Cin_p)  bf16 row tile of the zero-padded input
      x_halo : (1, 8, Wp, Cin_p)          bf16 rows just below the tile
      w      : (k*k*Cin_p, Cout)          bf16, tap-major im2col layout
      scale,bias : (1, Cout) f32          folded BatchNorm
      res    : (1, th, wo, Cout)          bf16 (added before ReLU)
      out    : (1, th, wo, Cout)          bf16 (stride-1 along W; H already strided)
    """
    x_ref, halo_ref, w_ref, scale_ref, bias_ref = refs[:5]
    res_ref = refs[5] if has_res else None
    o_ref = refs[5 + (1 if has_res else 0)]

    cout = o_ref.shape[-1]
    wp = x_ref.shape[2]
    th_in = th * stride

    # Assemble the row window (main + halo).  Fold the H stride into the leading
    # axis so every tap is a plain (cheap, non-sublane) H slice.
    x = jnp.concatenate([x_ref[0], halo_ref[0]], axis=0)        # (th_in+8, Wp, Cin_p)
    xr = x.reshape(th + _HALO // stride, stride, wp, cin_p)

    acc = jnp.zeros((th * wo, cout), jnp.float32)
    for ky0, g in groups:
        pieces = []
        for ky in range(ky0, ky0 + g):
            q, ph = divmod(ky, stride)
            rows = xr[q:q + th, ph]                             # (th, Wp, Cin_p)
            for kx in range(k):
                pieces.append(rows[:, kx:kx + wo, :])
        slab = pieces[0] if len(pieces) == 1 else jnp.concatenate(pieces, axis=-1)
        slab = slab.reshape(th * wo, g * k * cin_p)             # im2col: K = g*k*Cin
        wmat = w_ref[ky0 * k * cin_p:(ky0 + g) * k * cin_p, :]
        acc = acc + jnp.dot(slab, wmat, preferred_element_type=jnp.float32)

    y = acc * scale_ref[...] + bias_ref[...]                    # folded BN, f32 epilogue
    y = y.reshape(th, wo, cout)
    if has_res:
        y = y + res_ref[0].astype(jnp.float32)
    if relu:
        y = jnp.maximum(y, 0.0)
    o_ref[0] = y.astype(o_ref.dtype)                            # keep Cout on the lane axis


def _maxpool_kernel(x_ref, halo_ref, o_ref, *, k, stride, th, wo):
    wp, c = x_ref.shape[2], x_ref.shape[3]
    x = jnp.concatenate([x_ref[0], halo_ref[0]], axis=0)
    xr = x.reshape(th + _HALO // stride, stride, wp, c)
    acc = None
    for ky in range(k):
        q, ph = divmod(ky, stride)
        rows = xr[q:q + th, ph]
        for kx in range(k):
            piece = rows[:, kx:kx + wo, :]
            acc = piece if acc is None else jnp.maximum(acc, piece)
    o_ref[0] = acc


# ----------------------------------------------------------------------------
# Wrappers around pallas_call
# ----------------------------------------------------------------------------
def conv_bn(x, w, scale, bias, *, k, stride=1, pad=0, relu=True, residual=None):
    """x: (N,H,W,Cin) -> (N,Ho,Wo,Cout) with PyTorch conv arithmetic (bf16 activations).

    H stride is applied inside the kernel; W stride is applied by subsampling the
    stride-1 W output in the wrapper (mathematically identical).
    """
    n, h, wi, cin = x.shape
    cout = w.shape[-1]
    assert w.shape == (k * k, cin, cout)

    cin_p = _round_up(cin, 128 if cin > 64 else 8)   # lane-aligned im2col blocks
    ho = (h + 2 * pad - k) // stride + 1             # true strided output height
    wo1 = wi + 2 * pad - k + 1                       # stride-1 output width
    wo_p = _round_up(wo1, 8)
    wp = wo_p + k - 1

    groups = _ky_groups(k, cin_p)
    has_res = residual is not None
    th = _pick_tile_h(ho, wo_p, wp, cin_p, cout, k, stride, groups[0][1], has_res)
    t_tiles = -(-ho // th)
    th_in = th * stride
    hp_total = t_tiles * th_in + _HALO               # covers all tiles + halo rows

    # One fused pad (H pad + W pad + channel zero-pad) per conv.
    xp = jnp.pad(x.astype(jnp.bfloat16),
                 ((0, 0), (pad, hp_total - pad - h),
                  (pad, wp - pad - wi), (0, cin_p - cin)))

    wf = jnp.pad(w, ((0, 0), (0, cin_p - cin), (0, 0)))
    wf = wf.reshape(k * k * cin_p, cout).astype(jnp.bfloat16)
    sc = scale.reshape(1, cout).astype(jnp.float32)
    bs = bias.reshape(1, cout).astype(jnp.float32)

    halo_blk = th_in // _HALO
    in_specs = [
        pl.BlockSpec((1, th_in, wp, cin_p), lambda nb, t: (nb, t, 0, 0)),
        pl.BlockSpec((1, _HALO, wp, cin_p),
                     lambda nb, t: (nb, (t + 1) * halo_blk, 0, 0)),
        # Constant block indices keep weights / scale / bias resident across tiles.
        pl.BlockSpec((k * k * cin_p, cout), lambda nb, t: (0, 0)),
        pl.BlockSpec((1, cout), lambda nb, t: (0, 0)),
        pl.BlockSpec((1, cout), lambda nb, t: (0, 0)),
    ]
    args = [xp, xp, wf, sc, bs]
    if has_res:
        assert stride == 1
        rp = jnp.pad(residual.astype(jnp.bfloat16),
                     ((0, 0), (0, t_tiles * th - ho), (0, wo_p - wo1), (0, 0)))
        args.append(rp)
        in_specs.append(pl.BlockSpec((1, th, wo_p, cout), lambda nb, t: (nb, t, 0, 0)))

    kern = functools.partial(_conv_bn_kernel, k=k, stride=stride, th=th, wo=wo_p,
                             cin_p=cin_p, groups=groups, relu=relu, has_res=has_res)
    out = pl.pallas_call(
        kern,
        out_shape=jax.ShapeDtypeStruct((n, t_tiles * th, wo_p, cout), jnp.bfloat16),
        grid_spec=pltpu.PrefetchScalarGridSpec(
            num_scalar_prefetch=0,
            grid=(n, t_tiles),
            in_specs=in_specs,
            out_specs=pl.BlockSpec((1, th, wo_p, cout), lambda nb, t: (nb, t, 0, 0)),
        ),
        compiler_params=pltpu.CompilerParams(
            dimension_semantics=("parallel", "parallel"),   # both axes independent
            vmem_limit_bytes=_vmem_limit_bytes()),
    )(*args)

    out = out[:, :ho, :wo1, :]
    if stride > 1:
        out = out[:, :, ::stride, :]   # exact: W computed at stride 1, then subsampled
    return out


def maxpool(x, *, k=3, stride=2, pad=1):
    n, h, wi, c = x.shape
    ho = (h + 2 * pad - k) // stride + 1
    wo1 = wi + 2 * pad - k + 1
    wo_p = _round_up(wo1, 8)
    wp = wo_p + k - 1
    th_unit = _HALO // math.gcd(stride, _HALO)
    th = th_unit * max(1, min(4, -(-ho // th_unit)))
    t_tiles = -(-ho // th)
    th_in = th * stride
    hp_total = t_tiles * th_in + _HALO
    neg = float(jnp.finfo(jnp.bfloat16).min)          # PyTorch pools over -inf padding
    xp = jnp.pad(x.astype(jnp.bfloat16),
                 ((0, 0), (pad, hp_total - pad - h), (pad, wp - pad - wi), (0, 0)),
                 constant_values=neg)
    halo_blk = th_in // _HALO
    kern = functools.partial(_maxpool_kernel, k=k, stride=stride, th=th, wo=wo_p)
    out = pl.pallas_call(
        kern,
        out_shape=jax.ShapeDtypeStruct((n, t_tiles * th, wo_p, c), jnp.bfloat16),
        grid_spec=pltpu.PrefetchScalarGridSpec(
            num_scalar_prefetch=0,
            grid=(n, t_tiles),
            in_specs=[
                pl.BlockSpec((1, th_in, wp, c), lambda nb, t: (nb, t, 0, 0)),
                pl.BlockSpec((1, _HALO, wp, c),
                             lambda nb, t: (nb, (t + 1) * halo_blk, 0, 0)),
            ],
            out_specs=pl.BlockSpec((1, th, wo_p, c), lambda nb, t: (nb, t, 0, 0)),
        ),
        compiler_params=pltpu.CompilerParams(
            dimension_semantics=("parallel", "parallel"),
            vmem_limit_bytes=_vmem_limit_bytes()),
    )(xp, xp)
    out = out[:, :ho, :wo1, :]
    if stride > 1:
        out = out[:, :, ::stride, :]
    return out


# ----------------------------------------------------------------------------
# Bilinear upsample as two small interpolation matmuls (no gathers)
# ----------------------------------------------------------------------------
def _interp_matrix(out_size, in_size):
    # Matches torch F.interpolate(mode='bilinear', align_corners=False).
    s = in_size / out_size
    src = (jnp.arange(out_size, dtype=jnp.float32) + 0.5) * s - 0.5
    src = jnp.clip(src, 0.0, float(in_size - 1))
    i0 = jnp.floor(src).astype(jnp.int32)
    i1 = jnp.minimum(i0 + 1, in_size - 1)
    f = src - i0.astype(jnp.float32)
    return (jax.nn.one_hot(i0, in_size, dtype=jnp.float32) * (1.0 - f)[:, None]
            + jax.nn.one_hot(i1, in_size, dtype=jnp.float32) * f[:, None])


def bilinear_resize_nhwc(x, out_h, out_w):
    n, h, w, c = x.shape
    ry = _interp_matrix(out_h, h)          # (out_h, h)
    rx = _interp_matrix(out_w, w)          # (out_w, w)
    y = jnp.einsum('ip,npwc->niwc', ry, x)
    return jnp.einsum('jq,niqc->nijc', rx, y)


# ----------------------------------------------------------------------------
# Deterministic synthetic parameters (no checkpoint load)
# ----------------------------------------------------------------------------
class ParamGen:
    def __init__(self, key):
        self._key = key
        self._i = 0

    def _next(self):
        k = jax.random.fold_in(self._key, self._i)
        self._i += 1
        return k

    def conv(self, k, cin, cout):
        fan_in = k * k * cin
        w = jax.random.normal(self._next(), (k * k, cin, cout), jnp.float32)
        return w * jnp.sqrt(2.0 / fan_in)

    def bn(self, c):
        # folded eval-mode BatchNorm: gamma=1, beta=0, running_mean=0, running_var=1
        eps = 1e-5
        scale = jnp.full((c,), 1.0 / jnp.sqrt(1.0 + eps), jnp.float32)
        bias = jnp.zeros((c,), jnp.float32)
        return scale, bias


def conv_bn_params(pg, k, cin, cout):
    w = pg.conv(k, cin, cout)
    s, b = pg.bn(cout)
    return (w, s, b)


def make_params(key, feature_dim):
    pg = ParamGen(key)
    backbone = {'conv1': conv_bn_params(pg, 7, 3, 64)}
    layers = []
    cin = 64
    for cout, stride in ((64, 1), (128, 2), (256, 2), (512, 2)):
        blocks = []
        for bstride, bcin in ((stride, cin), (1, cout)):
            blk = {
                'stride': bstride,
                'conv1': conv_bn_params(pg, 3, bcin, cout),
                'conv2': conv_bn_params(pg, 3, cout, cout),
            }
            if bstride != 1 or bcin != cout:
                blk['down'] = conv_bn_params(pg, 1, bcin, cout)
            blocks.append(blk)
        layers.append(blocks)
        cin = cout
    backbone['layers'] = layers
    # NOTE: resnet18's avgpool/fc output is computed but unused by
    # feature_extract (only hooked features are consumed) -> omitted.
    output_conv = [
        conv_bn_params(pg, 3, 1029, 500),
        conv_bn_params(pg, 3, 500, 100),
        conv_bn_params(pg, 3, 100, feature_dim - 5),
    ]
    return {'backbone': backbone, 'output_conv': output_conv}


# ----------------------------------------------------------------------------
# Model forward
# ----------------------------------------------------------------------------
def basic_block(x, blk):
    stride = blk['stride']
    w1, s1, b1 = blk['conv1']
    out = conv_bn(x, w1, s1, b1, k=3, stride=stride, pad=1, relu=True)
    if 'down' in blk:
        wd, sd, bd = blk['down']
        identity = conv_bn(x, wd, sd, bd, k=1, stride=stride, pad=0, relu=False)
    else:
        identity = x
    w2, s2, b2 = blk['conv2']
    return conv_bn(out, w2, s2, b2, k=3, stride=1, pad=1,
                   relu=True, residual=identity)


def backbone_features(x, p):
    w, s, b = p['conv1']
    relu_out = conv_bn(x, w, s, b, k=7, stride=2, pad=3, relu=True)  # hook 'relu'
    out = maxpool(relu_out, k=3, stride=2, pad=1)
    feats = {'relu': relu_out}
    for name, blocks in zip(('layer1', 'layer2', 'layer3', 'layer4'), p['layers']):
        for blk in blocks:
            out = basic_block(out, blk)
        feats[name] = out
    return feats


def feature_extract(x_nchw, coords_nchw, params):
    x32 = jnp.transpose(x_nchw, (0, 2, 3, 1)).astype(jnp.float32)       # NHWC
    c32 = jnp.transpose(coords_nchw, (0, 2, 3, 1)).astype(jnp.float32)
    H, W = x32.shape[1], x32.shape[2]

    feats = backbone_features(x32.astype(jnp.bfloat16), params['backbone'])
    ups = [bilinear_resize_nhwc(feats[name].astype(jnp.float32), H, W)
           for name in ('relu', 'layer1', 'layer2', 'layer3', 'layer4')]
    # TODO(synk): the 1029-channel concat + first output_conv could be fused
    # (split the conv per source and sum, with the bilinear matmuls inlined) to
    # avoid materializing the full-resolution slab in HBM.
    features = jnp.concatenate([x32, c32] + ups, axis=-1).astype(jnp.bfloat16)
    for (w, s, b) in params['output_conv']:
        features = conv_bn(features, w, s, b, k=3, stride=1, pad=1, relu=True)
    pixel_f = jnp.concatenate([features.astype(jnp.float32), x32, c32], axis=-1)
    return jnp.transpose(pixel_f, (0, 3, 1, 2))                          # back to NCHW


def ssn_resnet_forward(x, coords, params, nspix=25, n_iter=10, training=True):
    pixel_f = feature_extract(x, coords, params)
    # TODO(synk): ssn_iter / sparse_ssn_iter are external functions not defined
    # in the reference module; returning the extracted pixel features instead.
    return pixel_f


# ----------------------------------------------------------------------------
if __name__ == "__main__":
    key = jax.random.PRNGKey(0)
    N, C, H, W = 2, 3, 16, 16
    feature_dim = 20

    kx_, kp = jax.random.split(key)
    x = jax.random.normal(kx_, (N, C, H, W), jnp.float32)
    yy, xx = jnp.meshgrid(jnp.arange(H, dtype=jnp.float32),
                          jnp.arange(W, dtype=jnp.float32), indexing="ij")
    coords = jnp.broadcast_to(jnp.stack([yy, xx], axis=0)[None], (N, 2, H, W))

    params = make_params(kp, feature_dim)
    out = ssn_resnet_forward(x, coords, params, nspix=25, n_iter=10, training=True)
    out = jax.block_until_ready(out)

    assert out.shape == (N, feature_dim, H, W), out.shape
    assert bool(jnp.all(jnp.isfinite(out)))
    print("KERNEL_OK")
</pallas_src>

<mosaic_0001>
module attributes {stable_mosaic.version = 11 : i64} {
  func.func @_conv_bn_kernel(%arg0: i32, %arg1: i32, %arg2: memref<1x16x22x8xbf16, #tpu.memory_space<vmem>>, %arg3: memref<1x8x22x8xbf16, #tpu.memory_space<vmem>>, %arg4: memref<392x64xbf16, #tpu.memory_space<vmem>>, %arg5: memref<1x64xf32, #tpu.memory_space<vmem>>, %arg6: memref<1x64xf32, #tpu.memory_space<vmem>>, %arg7: memref<1x8x16x64xbf16, #tpu.memory_space<vmem>>) attributes {dimension_semantics = [#tpu.dimension_semantics<parallel>, #tpu.dimension_semantics<parallel>], iteration_bounds = array<i64: 2, 1>, scalar_prefetch = 0 : i64, scratch_operands = 0 : i64, tpu.core_type = #tpu.core_type<tc>, window_params = [{transform_indices = @transform_0, window_bounds = array<i64: 1, 16, 22, 8>}, {transform_indices = @transform_1, window_bounds = array<i64: 1, 8, 22, 8>}, {pipeline_mode = #tpu.pipeline_mode<synchronous>, transform_indices = @transform_2, window_bounds = array<i64: 392, 64>}, {pipeline_mode = #tpu.pipeline_mode<synchronous>, transform_indices = @transform_3, window_bounds = array<i64: 1, 64>}, {pipeline_mode = #tpu.pipeline_mode<synchronous>, transform_indices = @transform_4, window_bounds = array<i64: 1, 64>}, {transform_indices = @transform_5, window_bounds = array<i64: 1, 8, 16, 64>}]} {
    %c0 = arith.constant 0 : index
    %c0_0 = arith.constant 0 : index
    %c0_1 = arith.constant 0 : index
    %c0_2 = arith.constant 0 : index
    %0 = vector.load %arg2[%c0, %c0_0, %c0_1, %c0_2] : memref<1x16x22x8xbf16, #tpu.memory_space<vmem>>, vector<1x16x22x8xbf16>
    %1 = vector.shape_cast %0 : vector<1x16x22x8xbf16> to vector<16x22x8xbf16>
    %c0_3 = arith.constant 0 : index
    %c0_4 = arith.constant 0 : index
    %c0_5 = arith.constant 0 : index
    %c0_6 = arith.constant 0 : index
    %2 = vector.load %arg3[%c0_3, %c0_4, %c0_5, %c0_6] : memref<1x8x22x8xbf16, #tpu.memory_space<vmem>>, vector<1x8x22x8xbf16>
    %3 = vector.shape_cast %2 : vector<1x8x22x8xbf16> to vector<8x22x8xbf16>
    %4 = tpu.concatenate %1, %3 in 0 : vector<16x22x8xbf16>, vector<8x22x8xbf16> -> vector<24x22x8xbf16>
    %5 = vector.shape_cast %4 : vector<24x22x8xbf16> to vector<12x2x22x8xbf16>
    %cst = arith.constant 0.000000e+00 : f32
    %6 = vector.broadcast %cst : f32 to vector<128x64xf32>
    %7 = vector.extract_strided_slice %5 {offsets = [0, 0, 0, 0], sizes = [8, 1, 22, 8], strides = [1, 1, 1, 1]} : vector<12x2x22x8xbf16> to vector<8x1x22x8xbf16>
    %8 = vector.shape_cast %7 : vector<8x1x22x8xbf16> to vector<8x22x8xbf16>
    %9 = vector.extract_strided_slice %8 {offsets = [0, 0, 0], sizes = [8, 16, 8], strides = [1, 1, 1]} : vector<8x22x8xbf16> to vector<8x16x8xbf16>
    %10 = vector.extract_strided_slice %8 {offsets = [0, 1, 0], sizes = [8, 16, 8], strides = [1, 1, 1]} : vector<8x22x8xbf16> to vector<8x16x8xbf16>
    %11 = vector.extract_strided_slice %8 {offsets = [0, 2, 0], sizes = [8, 16, 8], strides = [1, 1, 1]} : vector<8x22x8xbf16> to vector<8x16x8xbf16>
    %12 = vector.extract_strided_slice %8 {offsets = [0, 3, 0], sizes = [8, 16, 8], strides = [1, 1, 1]} : vector<8x22x8xbf16> to vector<8x16x8xbf16>
    %13 = vector.extract_strided_slice %8 {offsets = [0, 4, 0], sizes = [8, 16, 8], strides = [1, 1, 1]} : vector<8x22x8xbf16> to vector<8x16x8xbf16>
    %14 = vector.extract_strided_slice %8 {offsets = [0, 5, 0], sizes = [8, 16, 8], strides = [1, 1, 1]} : vector<8x22x8xbf16> to vector<8x16x8xbf16>
    %15 = vector.extract_strided_slice %8 {offsets = [0, 6, 0], sizes = [8, 16, 8], strides = [1, 1, 1]} : vector<8x22x8xbf16> to vector<8x16x8xbf16>
    %16 = vector.extract_strided_slice %5 {offsets = [0, 1, 0, 0], sizes = [8, 1, 22, 8], strides = [1, 1, 1, 1]} : vector<12x2x22x8xbf16> to vector<8x1x22x8xbf16>
    %17 = vector.shape_cast %16 : vector<8x1x22x8xbf16> to vector<8x22x8xbf16>
    %18 = vector.extract_strided_slice %17 {offsets = [0, 0, 0], sizes = [8, 16, 8], strides = [1, 1, 1]} : vector<8x22x8xbf16> to vector<8x16x8xbf16>
    %19 = vector.extract_strided_slice %17 {offsets = [0, 1, 0], sizes = [8, 16, 8], strides = [1, 1, 1]} : vector<8x22x8xbf16> to vector<8x16x8xbf16>
    %20 = vector.extract_strided_slice %17 {offsets = [0, 2, 0], sizes = [8, 16, 8], strides = [1, 1, 1]} : vector<8x22x8xbf16> to vector<8x16x8xbf16>
    %21 = vector.extract_strided_slice %17 {offsets = [0, 3, 0], sizes = [8, 16, 8], strides = [1, 1, 1]} : vector<8x22x8xbf16> to vector<8x16x8xbf16>
    %22 = vector.extract_strided_slice %17 {offsets = [0, 4, 0], sizes = [8, 16, 8], strides = [1, 1, 1]} : vector<8x22x8xbf16> to vector<8x16x8xbf16>
    %23 = vector.extract_strided_slice %17 {offsets = [0, 5, 0], sizes = [8, 16, 8], strides = [1, 1, 1]} : vector<8x22x8xbf16> to vector<8x16x8xbf16>
    %24 = vector.extract_strided_slice %17 {offsets = [0, 6, 0], sizes = [8, 16, 8], strides = [1, 1, 1]} : vector<8x22x8xbf16> to vector<8x16x8xbf16>
    %25 = vector.extract_strided_slice %5 {offsets = [1, 0, 0, 0], sizes = [8, 1, 22, 8], strides = [1, 1, 1, 1]} : vector<12x2x22x8xbf16> to vector<8x1x22x8xbf16>
    %26 = vector.shape_cast %25 : vector<8x1x22x8xbf16> to vector<8x22x8xbf16>
    %27 = vector.extract_strided_slice %26 {offsets = [0, 0, 0], sizes = [8, 16, 8], strides = [1, 1, 1]} : vector<8x22x8xbf16> to vector<8x16x8xbf16>
    %28 = vector.extract_strided_slice %26 {offsets = [0, 1, 0], sizes = [8, 16, 8], strides = [1, 1, 1]} : vector<8x22x8xbf16> to vector<8x16x8xbf16>
    %29 = vector.extract_strided_slice %26 {offsets = [0, 2, 0], sizes = [8, 16, 8], strides = [1, 1, 1]} : vector<8x22x8xbf16> to vector<8x16x8xbf16>
    %30 = vector.extract_strided_slice %26 {offsets = [0, 3, 0], sizes = [8, 16, 8], strides = [1, 1, 1]} : vector<8x22x8xbf16> to vector<8x16x8xbf16>
    %31 = vector.extract_strided_slice %26 {offsets = [0, 4, 0], sizes = [8, 16, 8], strides = [1, 1, 1]} : vector<8x22x8xbf16> to vector<8x16x8xbf16>
    %32 = vector.extract_strided_slice %26 {offsets = [0, 5, 0], sizes = [8, 16, 8], strides = [1, 1, 1]} : vector<8x22x8xbf16> to vector<8x16x8xbf16>
    %33 = vector.extract_strided_slice %26 {offsets = [0, 6, 0], sizes = [8, 16, 8], strides = [1, 1, 1]} : vector<8x22x8xbf16> to vector<8x16x8xbf16>
    %34 = vector.extract_strided_slice %5 {offsets = [1, 1, 0, 0], sizes = [8, 1, 22, 8], strides = [1, 1, 1, 1]} : vector<12x2x22x8xbf16> to vector<8x1x22x8xbf16>
    %35 = vector.shape_cast %34 : vector<8x1x22x8xbf16> to vector<8x22x8xbf16>
    %36 = vector.extract_strided_slice %35 {offsets = [0, 0, 0], sizes = [8, 16, 8], strides = [1, 1, 1]} : vector<8x22x8xbf16> to vector<8x16x8xbf16>
    %37 = vector.extract_strided_slice %35 {offsets = [0, 1, 0], sizes = [8, 16, 8], strides = [1, 1, 1]} : vector<8x22x8xbf16> to vector<8x16x8xbf16>
    %38 = vector.extract_strided_slice %35 {offsets = [0, 2, 0], sizes = [8, 16, 8], strides = [1, 1, 1]} : vector<8x22x8xbf16> to vector<8x16x8xbf16>
    %39 = vector.extract_strided_slice %35 {offsets = [0, 3, 0], sizes = [8, 16, 8], strides = [1, 1, 1]} : vector<8x22x8xbf16> to vector<8x16x8xbf16>
    %40 = vector.extract_strided_slice %35 {offsets = [0, 4, 0], sizes = [8, 16, 8], strides = [1, 1, 1]} : vector<8x22x8xbf16> to vector<8x16x8xbf16>
    %41 = vector.extract_strided_slice %35 {offsets = [0, 5, 0], sizes = [8, 16, 8], strides = [1, 1, 1]} : vector<8x22x8xbf16> to vector<8x16x8xbf16>
    %42 = vector.extract_strided_slice %35 {offsets = [0, 6, 0], sizes = [8, 16, 8], strides = [1, 1, 1]} : vector<8x22x8xbf16> to vector<8x16x8xbf16>
    %43 = vector.extract_strided_slice %5 {offsets = [2, 0, 0, 0], sizes = [8, 1, 22, 8], strides = [1, 1, 1, 1]} : vector<12x2x22x8xbf16> to vector<8x1x22x8xbf16>
    %44 = vector.shape_cast %43 : vector<8x1x22x8xbf16> to vector<8x22x8xbf16>
    %45 = vector.extract_strided_slice %44 {offsets = [0, 0, 0], sizes = [8, 16, 8], strides = [1, 1, 1]} : vector<8x22x8xbf16> to vector<8x16x8xbf16>
    %46 = vector.extract_strided_slice %44 {offsets = [0, 1, 0], sizes = [8, 16, 8], strides = [1, 1, 1]} : vector<8x22x8xbf16> to vector<8x16x8xbf16>
    %47 = vector.extract_strided_slice %44 {offsets = [0, 2, 0], sizes = [8, 16, 8], strides = [1, 1, 1]} : vector<8x22x8xbf16> to vector<8x16x8xbf16>
    %48 = vector.extract_strided_slice %44 {offsets = [0, 3, 0], sizes = [8, 16, 8], strides = [1, 1, 1]} : vector<8x22x8xbf16> to vector<8x16x8xbf16>
    %49 = vector.extract_strided_slice %44 {offsets = [0, 4, 0], sizes = [8, 16, 8], strides = [1, 1, 1]} : vector<8x22x8xbf16> to vector<8x16x8xbf16>
    %50 = vector.extract_strided_slice %44 {offsets = [0, 5, 0], sizes = [8, 16, 8], strides = [1, 1, 1]} : vector<8x22x8xbf16> to vector<8x16x8xbf16>
    %51 = vector.extract_strided_slice %44 {offsets = [0, 6, 0], sizes = [8, 16, 8], strides = [1, 1, 1]} : vector<8x22x8xbf16> to vector<8x16x8xbf16>
    %52 = vector.extract_strided_slice %5 {offsets = [2, 1, 0, 0], sizes = [8, 1, 22, 8], strides = [1, 1, 1, 1]} : vector<12x2x22x8xbf16> to vector<8x1x22x8xbf16>
    %53 = vector.shape_cast %52 : vector<8x1x22x8xbf16> to vector<8x22x8xbf16>
    %54 = vector.extract_strided_slice %53 {offsets = [0, 0, 0], sizes = [8, 16, 8], strides = [1, 1, 1]} : vector<8x22x8xbf16> to vector<8x16x8xbf16>
    %55 = vector.extract_strided_slice %53 {offsets = [0, 1, 0], sizes = [8, 16, 8], strides = [1, 1, 1]} : vector<8x22x8xbf16> to vector<8x16x8xbf16>
    %56 = vector.extract_strided_slice %53 {offsets = [0, 2, 0], sizes = [8, 16, 8], strides = [1, 1, 1]} : vector<8x22x8xbf16> to vector<8x16x8xbf16>
    %57 = vector.extract_strided_slice %53 {offsets = [0, 3, 0], sizes = [8, 16, 8], strides = [1, 1, 1]} : vector<8x22x8xbf16> to vector<8x16x8xbf16>
    %58 = vector.extract_strided_slice %53 {offsets = [0, 4, 0], sizes = [8, 16, 8], strides = [1, 1, 1]} : vector<8x22x8xbf16> to vector<8x16x8xbf16>
    %59 = vector.extract_strided_slice %53 {offsets = [0, 5, 0], sizes = [8, 16, 8], strides = [1, 1, 1]} : vector<8x22x8xbf16> to vector<8x16x8xbf16>
    %60 = vector.extract_strided_slice %53 {offsets = [0, 6, 0], sizes = [8, 16, 8], strides = [1, 1, 1]} : vector<8x22x8xbf16> to vector<8x16x8xbf16>
    %61 = vector.extract_strided_slice %5 {offsets = [3, 0, 0, 0], sizes = [8, 1, 22, 8], strides = [1, 1, 1, 1]} : vector<12x2x22x8xbf16> to vector<8x1x22x8xbf16>
    %62 = vector.shape_cast %61 : vector<8x1x22x8xbf16> to vector<8x22x8xbf16>
    %63 = vector.extract_strided_slice %62 {offsets = [0, 0, 0], sizes = [8, 16, 8], strides = [1, 1, 1]} : vector<8x22x8xbf16> to vector<8x16x8xbf16>
    %64 = vector.extract_strided_slice %62 {offsets = [0, 1, 0], sizes = [8, 16, 8], strides = [1, 1, 1]} : vector<8x22x8xbf16> to vector<8x16x8xbf16>
    %65 = vector.extract_strided_slice %62 {offsets = [0, 2, 0], sizes = [8, 16, 8], strides = [1, 1, 1]} : vector<8x22x8xbf16> to vector<8x16x8xbf16>
    %66 = vector.extract_strided_slice %62 {offsets = [0, 3, 0], sizes = [8, 16, 8], strides = [1, 1, 1]} : vector<8x22x8xbf16> to vector<8x16x8xbf16>
    %67 = vector.extract_strided_slice %62 {offsets = [0, 4, 0], sizes = [8, 16, 8], strides = [1, 1, 1]} : vector<8x22x8xbf16> to vector<8x16x8xbf16>
    %68 = vector.extract_strided_slice %62 {offsets = [0, 5, 0], sizes = [8, 16, 8], strides = [1, 1, 1]} : vector<8x22x8xbf16> to vector<8x16x8xbf16>
    %69 = vector.extract_strided_slice %62 {offsets = [0, 6, 0], sizes = [8, 16, 8], strides = [1, 1, 1]} : vector<8x22x8xbf16> to vector<8x16x8xbf16>
    %70 = tpu.concatenate %9, %10, %11, %12, %13, %14, %15, %18, %19, %20, %21, %22, %23, %24, %27, %28 in 2 : vector<8x16x8xbf16>, vector<8x16x8xbf16>, vector<8x16x8xbf16>, vector<8x16x8xbf16>, vector<8x16x8xbf16>, vector<8x16x8xbf16>, vector<8x16x8xbf16>, vector<8x16x8xbf16>, vector<8x16x8xbf16>, vector<8x16x8xbf16>, vector<8x16x8xbf16>, vector<8x16x8xbf16>, vector<8x16x8xbf16>, vector<8x16x8xbf16>, vector<8x16x8xbf16>, vector<8x16x8xbf16> -> vector<8x16x128xbf16>
    %71 = tpu.concatenate %29, %30, %31, %32, %33, %36, %37, %38, %39, %40, %41, %42, %45, %46, %47, %48 in 2 : vector<8x16x8xbf16>, vector<8x16x8xbf16>, vector<8x16x8xbf16>, vector<8x16x8xbf16>, vector<8x16x8xbf16>, vector<8x16x8xbf16>, vector<8x16x8xbf16>, vector<8x16x8xbf16>, vector<8x16x8xbf16>, vector<8x16x8xbf16>, vector<8x16x8xbf16>, vector<8x16x8xbf16>, vector<8x16x8xbf16>, vector<8x16x8xbf16>, vector<8x16x8xbf16>, vector<8x16x8xbf16> -> vector<8x16x128xbf16>
    %72 = tpu.concatenate %49, %50, %51, %54, %55, %56, %57, %58, %59, %60, %63, %64, %65, %66, %67, %68 in 2 : vector<8x16x8xbf16>, vector<8x16x8xbf16>, vector<8x16x8xbf16>, vector<8x16x8xbf16>, vector<8x16x8xbf16>, vector<8x16x8xbf16>, vector<8x16x8xbf16>, vector<8x16x8xbf16>, vector<8x16x8xbf16>, vector<8x16x8xbf16>, vector<8x16x8xbf16>, vector<8x16x8xbf16>, vector<8x16x8xbf16>, vector<8x16x8xbf16>, vector<8x16x8xbf16>, vector<8x16x8xbf16> -> vector<8x16x128xbf16>
    %73 = tpu.concatenate %70, %71, %72, %69 in 2 : vector<8x16x128xbf16>, vector<8x16x128xbf16>, vector<8x16x128xbf16>, vector<8x16x8xbf16> -> vector<8x16x392xbf16>
    %74 = vector.shape_cast %73 : vector<8x16x392xbf16> to vector<128x392xbf16>
    %c0_7 = arith.constant 0 : index
    %c0_8 = arith.constant 0 : index
    %75 = vector.load %arg4[%c0_7, %c0_8] : memref<392x64xbf16, #tpu.memory_space<vmem>>, vector<392x64xbf16>
    %cst_9 = arith.constant dense<0.000000e+00> : vector<128x64xf32>
    %76 = tpu.matmul %74, %75, %cst_9 {dimension_numbers = #tpu.dot_dimension_numbers<[1], [0], [0], [1], [0, 0, 1, 1], [], []>} : vector<128x392xbf16>, vector<392x64xbf16>, vector<128x64xf32> -> vector<128x64xf32>
    %77 = arith.addf %6, %76 : vector<128x64xf32>
    %c0_10 = arith.constant 0 : index
    %c0_11 = arith.constant 0 : index
    %78 = vector.load %arg5[%c0_10, %c0_11] : memref<1x64xf32, #tpu.memory_space<vmem>>, vector<1x64xf32>
    %79 = vector.broadcast %78 : vector<1x64xf32> to vector<128x64xf32>
    %80 = arith.mulf %77, %79 : vector<128x64xf32>
    %c0_12 = arith.constant 0 : index
    %c0_13 = arith.constant 0 : index
    %81 = vector.load %arg6[%c0_12, %c0_13] : memref<1x64xf32, #tpu.memory_space<vmem>>, vector<1x64xf32>
    %82 = vector.broadcast %81 : vector<1x64xf32> to vector<128x64xf32>
    %83 = arith.addf %80, %82 : vector<128x64xf32>
    %84 = vector.shape_cast %83 : vector<128x64xf32> to vector<8x16x64xf32>
    %cst_14 = arith.constant 0.000000e+00 : f32
    %85 = vector.broadcast %cst_14 : f32 to vector<8x16x64xf32>
    %86 = arith.maximumf %84, %85 : vector<8x16x64xf32>
    %87 = arith.truncf %86 : vector<8x16x64xf32> to vector<8x16x64xbf16>
    %c0_15 = arith.constant 0 : index
    %c0_16 = arith.constant 0 : index
    %c0_17 = arith.constant 0 : index
    %c0_18 = arith.constant 0 : index
    %88 = vector.load %arg7[%c0_15, %c0_16, %c0_17, %c0_18] : memref<1x8x16x64xbf16, #tpu.memory_space<vmem>>, vector<1x8x16x64xbf16>
    %89 = vector.shape_cast %88 : vector<1x8x16x64xbf16> to vector<8x16x64xbf16>
    %90 = vector.shape_cast %87 : vector<8x16x64xbf16> to vector<1x8x16x64xbf16>
    tpu.vector_store %arg7[%c0_15, %c0_16, %c0_17, %c0_18], %90 {strides = array<i32>} : memref<1x8x16x64xbf16, #tpu.memory_space<vmem>>, vector<1x8x16x64xbf16>,
    return
  }
  func.func @transform_0(%arg0: i32, %arg1: i32) -> (i32, i32, i32, i32) {
    %c0_i32 = arith.constant 0 : i32
    %c0_i32_0 = arith.constant 0 : i32
    %c0_i32_1 = arith.constant 0 : i32
    return %arg0, %arg1, %c0_i32, %c0_i32_0 : i32, i32, i32, i32
  }
  func.func @transform_1(%arg0: i32, %arg1: i32) -> (i32, i32, i32, i32) {
    %c1_i32 = arith.constant 1 : i32
    %0 = arith.addi %arg1, %c1_i32 : i32
    %c2_i32 = arith.constant 2 : i32
    %1 = arith.muli %0, %c2_i32 : i32
    %c0_i32 = arith.constant 0 : i32
    %c0_i32_0 = arith.constant 0 : i32
    %c0_i32_1 = arith.constant 0 : i32
    return %arg0, %1, %c0_i32, %c0_i32_0 : i32, i32, i32, i32
  }
  func.func @transform_2(%arg0: i32, %arg1: i32) -> (i32, i32) {
    %c0_i32 = arith.constant 0 : i32
    %c0_i32_0 = arith.constant 0 : i32
    %c0_i32_1 = arith.constant 0 : i32
    return %c0_i32, %c0_i32_0 : i32, i32
  }
  func.func @transform_3(%arg0: i32, %arg1: i32) -> (i32, i32) {
    %c0_i32 = arith.constant 0 : i32
    %c0_i32_0 = arith.constant 0 : i32
    %c0_i32_1 = arith.constant 0 : i32
    return %c0_i32, %c0_i32_0 : i32, i32
  }
  func.func @transform_4(%arg0: i32, %arg1: i32) -> (i32, i32) {
    %c0_i32 = arith.constant 0 : i32
    %c0_i32_0 = arith.constant 0 : i32
    %c0_i32_1 = arith.constant 0 : i32
    return %c0_i32, %c0_i32_0 : i32, i32
  }
  func.func @transform_5(%arg0: i32, %arg1: i32) -> (i32, i32, i32, i32) {
    %c0_i32 = arith.constant 0 : i32
    %c0_i32_0 = arith.constant 0 : i32
    %c0_i32_1 = arith.constant 0 : i32
    return %arg0, %arg1, %c0_i32, %c0_i32_0 : i32, i32, i32, i32
  }
}

</mosaic_0001>

<llo_original>
// kernel: tpu_custom_call.1
$region0: #{tpu_custom_call.1}
  #allocation0 [shape = 'u32[]', space=smem, size = 0x4, offset = 0x4, fixed_abs, tag = 'smem constant byte address 0x4 - core index']
  #allocation1 [shape = 'u32[144,128]{1,0:T(1,128)}', space=vmem, size = 0x12000, scoped, tag = 'internal scratch']
  %s0 = inlined_call_operand.hbm [shape: bf16[2,24,22,8], index: 0, kind: input, shape index: {}]
  %s1 = inlined_call_operand.hbm [shape: bf16[2,24,22,8], index: 1, kind: input, shape index: {}]
  %s2 = inlined_call_operand.hbm [shape: bf16[392,64], index: 2, kind: input, shape index: {}]
  %s3 = inlined_call_operand.hbm [shape: f32[1,64], index: 3, kind: input, shape index: {}]
  %s4 = inlined_call_operand.hbm [shape: f32[1,64], index: 4, kind: input, shape index: {}]
  %s5 = inlined_call_operand.hbm [shape: bf16[2,8,16,64], index: 5, kind: output, shape index: {}]
  %s6 = sld [smem:[#allocation0]]
  $region73: #{tpu_custom_call.1} parent=0
    _
  %s8 = ssub.s32 1, %s6
  %s9 = scalar_select 0, %s8, %s6
  $region1: #{tpu_custom_call.1} parent=0
    #allocation2 [shape = 'u8[196608]{0}', space=vmem, size = 0x30000, scoped, tag = 'input window, operand 0']
    #allocation3 [shape = 's32[2]{0}', space=sflag, size = 0x8, scoped, tag = 'scoped memory for tpu_custom_call.1']
    #allocation4 [shape = 's32[2]{0}', space=sflag, size = 0x8, scoped, tag = 'scoped memory for tpu_custom_call.1']
    #allocation5 [shape = 'u8[98304]{0}', space=vmem, size = 0x18000, scoped, tag = 'input window, operand 1']
    #allocation6 [shape = 's32[2]{0}', space=sflag, size = 0x8, scoped, tag = 'scoped memory for tpu_custom_call.1']
    #allocation7 [shape = 'u8[100352]{0}', space=vmem, size = 0x18800, scoped, tag = 'input window, operand 2, single buffered']
    #allocation8 [shape = 'u8[512]{0}', space=vmem, size = 0x400, scoped, tag = 'input window, operand 3, single buffered']
    #allocation9 [shape = 's32[1]{0}', space=sflag, size = 0x4, scoped, tag = 'scoped memory for tpu_custom_call.1']
    #allocation10 [shape = 'u8[512]{0}', space=vmem, size = 0x400, scoped, tag = 'input window, operand 4, single buffered']
    #allocation11 [shape = 'u8[65536]{0}', space=vmem, size = 0x10000, scoped, tag = 'output window, operand 0']
    %10 = vsyncpa [#allocation3], 0
    %s11 = scalar_lea.sflag [#allocation3], 1
    %12 = vsyncpa %s11, 0
    %13 = vsyncpa [#allocation6], 0
    %s14 = scalar_lea.sflag [#allocation6], 1
    %15 = vsyncpa %s14, 0
    %16 = vsyncpa [#allocation9], 0
    %17 = vsyncpa [#allocation4], 0
    %s18 = scalar_lea.sflag [#allocation4], 1
    %19 = vsyncpa %s18, 0
    loop: start=0, step=1, limit=4
    $region2: #{tpu_custom_call.1} parent=1 // loop_pre_header
      _
    $region3: #{tpu_custom_call.1} parent=1 // loop_header
      %s21 = sphi 0, %s25
      %p22 = scmp.ge.s32.totalorder %s21, 4
      %s28 = sphi 0, %s40
      %s29 = sphi 0, %s36
      %s30 = sphi 0, %s28
      %s31 = sphi 0, %s29
      %s32 = sphi 0, %s30
      %s33 = sphi 0, %s31
      %s45 = sphi 0, %s47
      %s48 = sphi 0, %s45
      %s49 = sphi 0, %s48
      %s65 = sphi 0, %s49
      %s77 = sphi 0, %s79
      %s80 = sphi 0, %s77
      %s81 = sphi 0, %s80
      %s97 = sphi 0, %s81
      %s101 = sphi 0, %s101
      %s103 = sphi 0, %s101
      %s104 = sphi 0, %s103
      %s118 = sphi 0, %s104
      %s122 = sphi 0, %s122
      %s124 = sphi 0, %s122
      %s125 = sphi 0, %s124
      %s139 = sphi 0, %s125
      %s143 = sphi 0, %s143
      %s145 = sphi 0, %s143
      %s146 = sphi 0, %s145
      %s160 = sphi 0, %s146
      %s168 = sphi 0, %s170
      %s171 = sphi 0, %s168
      %s172 = sphi 0, %s171
      %s188 = sphi 0, %s172
    $region4: #{tpu_custom_call.1} parent=1 // loop_header_branch
      %24 = sbr.rel (%p22) target = $region8
    $region5: #{tpu_custom_call.1} parent=1 // loop_body
      %s26 = ssub.s32 %s21, 1
      %s27 = ssub.s32 %s21, 2
      %s34 = sadd.s32 1, %s29
      %p35 = scmp.ge.s32.totalorder %s34, 1
      %s36 = scalar_select %p35, 0, %s34
      %s37 = sadd.s32 1, %s28
      %s38 = scalar_select %p35, %s37, %s28
      %p39 = scmp.ge.s32.totalorder %s38, 2
      %s40 = scalar_select %p39, 0, %s38
      %s41 = ssub.s32 %s28, %s40
      %s42 = ssub.s32 %s29, %s36
      %s43 = sor.u32 %s41, %s42
      %p44 = scmp.eq.s32.totalorder %s43, 0
      %s46 = sadd.s32 %s45, 1
      %s47 = scalar_select %p44, %s45, %s46
      %p50 = pneg %p44
      %p51 = scmp.eq.s32.totalorder %s21, 1
      %p52 = por %p50, %p51
      %p53 = scmp.ne.s32.totalorder %s45, %s48
      %p54 = scmp.eq.s32.totalorder %s21, 0
      %p55 = por %p53, %p54
      %p56 = scmp.ne.s32.totalorder %s45, %s48
      %p57 = scmp.eq.s32.totalorder %s26, 1
      %p58 = por %p56, %p57
      %p59 = scmp.ne.s32.totalorder %s48, %s49
      %p60 = scmp.eq.s32.totalorder %s26, 0
      %p61 = por %p59, %p60
      %p62 = scmp.ne.s32.totalorder %s48, %s49
      %p63 = scmp.eq.s32.totalorder %s27, 1
      %p64 = por %p62, %p63
      %p66 = scmp.ne.s32.totalorder %s49, %s65
      %p67 = scmp.eq.s32.totalorder %s27, 0
      %p68 = por %p66, %p67
      %s69 = sadd.s32 %s29, 1
      %s70 = smul.u32 %s69, 2
      %s71 = sadd.s32 %s36, 1
      %s72 = smul.u32 %s71, 2
      %s73 = ssub.s32 %s28, %s40
      %s74 = ssub.s32 %s70, %s72
      %s75 = sor.u32 %s73, %s74
      %p76 = scmp.eq.s32.totalorder %s75, 0
      %s78 = sadd.s32 %s77, 1
      %s79 = scalar_select %p76, %s77, %s78
      %p82 = pneg %p76
      %p83 = scmp.eq.s32.totalorder %s21, 1
      %p84 = por %p82, %p83
      %p85 = scmp.ne.s32.totalorder %s77, %s80
      %p86 = scmp.eq.s32.totalorder %s21, 0
      %p87 = por %p85, %p86
      %p88 = scmp.ne.s32.totalorder %s77, %s80
      %p89 = scmp.eq.s32.totalorder %s26, 1
      %p90 = por %p88, %p89
      %p91 = scmp.ne.s32.totalorder %s80, %s81
      %p92 = scmp.eq.s32.totalorder %s26, 0
      %p93 = por %p91, %p92
      %p94 = scmp.ne.s32.totalorder %s80, %s81
      %p95 = scmp.eq.s32.totalorder %s27, 1
      %p96 = por %p94, %p95
      %p98 = scmp.ne.s32.totalorder %s81, %s97
      %p99 = scmp.eq.s32.totalorder %s27, 0
      %p100 = por %p98, %p99
      %s102 = sadd.s32 %s101, 1
      %p105 = scmp.eq.s32.totalorder %s21, 1
      %p106 = scmp.ne.s32.totalorder %s101, %s103
      %p107 = scmp.eq.s32.totalorder %s21, 0
      %p108 = por %p106, %p107
      %p109 = scmp.ne.s32.totalorder %s101, %s103
      %p110 = scmp.eq.s32.totalorder %s26, 1
      %p111 = por %p109, %p110
      %p112 = scmp.ne.s32.totalorder %s103, %s104
      %p113 = scmp.eq.s32.totalorder %s26, 0
      %p114 = por %p112, %p113
      %p115 = scmp.ne.s32.totalorder %s103, %s104
      %p116 = scmp.eq.s32.totalorder %s27, 1
      %p117 = por %p115, %p116
      %p119 = scmp.ne.s32.totalorder %s104, %s118
      %p120 = scmp.eq.s32.totalorder %s27, 0
      %p121 = por %p119, %p120
      %s123 = sadd.s32 %s122, 1
      %p126 = scmp.eq.s32.totalorder %s21, 1
      %p127 = scmp.ne.s32.totalorder %s122, %s124
      %p128 = scmp.eq.s32.totalorder %s21, 0
      %p129 = por %p127, %p128
      %p130 = scmp.ne.s32.totalorder %s122, %s124
      %p131 = scmp.eq.s32.totalorder %s26, 1
      %p132 = por %p130, %p131
      %p133 = scmp.ne.s32.totalorder %s124, %s125
      %p134 = scmp.eq.s32.totalorder %s26, 0
      %p135 = por %p133, %p134
      %p136 = scmp.ne.s32.totalorder %s124, %s125
      %p137 = scmp.eq.s32.totalorder %s27, 1
      %p138 = por %p136, %p137
      %p140 = scmp.ne.s32.totalorder %s125, %s139
      %p141 = scmp.eq.s32.totalorder %s27, 0
      %p142 = por %p140, %p141
      %s144 = sadd.s32 %s143, 1
      %p147 = scmp.eq.s32.totalorder %s21, 1
      %p148 = scmp.ne.s32.totalorder %s143, %s145
      %p149 = scmp.eq.s32.totalorder %s21, 0
      %p150 = por %p148, %p149
      %p151 = scmp.ne.s32.totalorder %s143, %s145
      %p152 = scmp.eq.s32.totalorder %s26, 1
      %p153 = por %p151, %p152
      %p154 = scmp.ne.s32.totalorder %s145, %s146
      %p155 = scmp.eq.s32.totalorder %s26, 0
      %p156 = por %p154, %p155
      %p157 = scmp.ne.s32.totalorder %s145, %s146
      %p158 = scmp.eq.s32.totalorder %s27, 1
      %p159 = por %p157, %p158
      %p161 = scmp.ne.s32.totalorder %s146, %s160
      %p162 = scmp.eq.s32.totalorder %s27, 0
      %p163 = por %p161, %p162
      %s164 = ssub.s32 %s28, %s40
      %s165 = ssub.s32 %s29, %s36
      %s166 = sor.u32 %s164, %s165
      %p167 = scmp.eq.s32.totalorder %s166, 0
      %s169 = sadd.s32 %s168, 1
      %s170 = scalar_select %p167, %s168, %s169
      %p173 = pneg %p167
      %p174 = scmp.eq.s32.totalorder %s21, 1
      %p175 = por %p173, %p174
      %p176 = scmp.ne.s32.totalorder %s168, %s171
      %p177 = scmp.eq.s32.totalorder %s21, 0
      %p178 = por %p176, %p177
      %p179 = scmp.ne.s32.totalorder %s168, %s171
      %p180 = scmp.eq.s32.totalorder %s26, 1
      %p181 = por %p179, %p180
      %p182 = scmp.ne.s32.totalorder %s171, %s172
      %p183 = scmp.eq.s32.totalorder %s26, 0
      %p184 = por %p182, %p183
      %p185 = scmp.ne.s32.totalorder %s171, %s172
      %p186 = scmp.eq.s32.totalorder %s27, 1
      %p187 = por %p185, %p186
      %p189 = scmp.ne.s32.totalorder %s172, %s188
      %p190 = scmp.eq.s32.totalorder %s27, 0
      %p191 = por %p189, %p190
      %p192 = scmp.le.s32.totalorder 1, %s21
      %p193 = scmp.lt.s32.totalorder %s21, 3
      %p194 = pnand %p192, %p193
      %p195 = pneg %p194
      // Predicated region
      $region9: #{tpu_custom_call.1} parent=5 // pred_check
        _
      $region10: #{tpu_custom_call.1} parent=5 // pred_check_branch
        %197 = sbr.rel (%p194) target = $region12
      $region11: #{tpu_custom_call.1} parent=5 // pred_region
        %s198 = ssub.s32 %s21, 1
        // Predicated region
        $region13: #{tpu_custom_call.1} parent=11 // pred_check
          %p199 = pneg %p114
        $region14: #{tpu_custom_call.1} parent=11 // pred_check_branch
          %201 = sbr.rel (%p199) target = $region16
        $region15: #{tpu_custom_call.1} parent=11 // pred_region
          %s203 = ssub.s32 3136, 3136
          %204 = vsyncadd [#allocation6], %s203
          %s205 = sshll.u32 [#allocation7], 4
          %s206 = int_to_ptr.vmem [resolvable:$true] %s205
          %211 = dma.hbm_to_vmem [thread:$0]  %s2, 3136, %s206, [#allocation6], 64, 64, 4
        $region16: #{tpu_custom_call.1} parent=11 // pred_fallthru
          _
        // Predicated region
        $region17: #{tpu_custom_call.1} parent=11 // pred_check
          %p212 = pneg %p135
        $region18: #{tpu_custom_call.1} parent=11 // pred_check_branch
          %214 = sbr.rel (%p212) target = $region20
        $region19: #{tpu_custom_call.1} parent=11 // pred_region
          %s216 = ssub.s32 16, 16
          %217 = vsyncadd [#allocation9], %s216
          %s219 = sshll.u32 [#allocation8], 4
          %s220 = int_to_ptr.vmem [resolvable:$true] %s219
          %222 = dma.hbm_to_vmem [thread:$0]  %s3, 16, %s220, [#allocation9]
        $region20: #{tpu_custom_call.1} parent=11 // pred_fallthru
          _
        // Predicated region
        $region21: #{tpu_custom_call.1} parent=11 // pred_check
          %p223 = pneg %p156
        $region22: #{tpu_custom_call.1} parent=11 // pred_check_branch
          %225 = sbr.rel (%p223) target = $region24
        $region23: #{tpu_custom_call.1} parent=11 // pred_region
          %s227 = ssub.s32 16, 16
          %228 = vsyncadd [#allocation9], %s227
          %s230 = sshll.u32 [#allocation10], 4
          %s231 = int_to_ptr.vmem [resolvable:$true] %s230
          %233 = dma.hbm_to_vmem [thread:$0]  %s4, 16, %s231, [#allocation9]
        $region24: #{tpu_custom_call.1} parent=11 // pred_fallthru
          _
      $region12: #{tpu_custom_call.1} parent=5 // pred_fallthru
        _
      %p234 = scmp.lt.s32.totalorder %s21, 2
      // Predicated region
      $region25: #{tpu_custom_call.1} parent=5 // pred_check
        %p235 = pneg %p234
      $region26: #{tpu_custom_call.1} parent=5 // pred_check_branch
        %237 = sbr.rel (%p235) target = $region28
      $region27: #{tpu_custom_call.1} parent=5 // pred_region
        // Predicated region
        $region29: #{tpu_custom_call.1} parent=27 // pred_check
          %p238 = pneg %p55
        $region30: #{tpu_custom_call.1} parent=27 // pred_check_branch
          %240 = sbr.rel (%p238) target = $region32
        $region31: #{tpu_custom_call.1} parent=27 // pred_region
          %s241 = sand.u32 %s45, 1
          %s242 = scalar_lea.sflag [#allocation3], %s241
          %s243 = sand.u32 %s45, 1
          %s244 = smul.addr %s243, 192
          %s245 = scalar_lea.vmem [#allocation2], %s244
          %s246 = smul.u32 16, %s29
          %s247 = ssub.s32 24, %s246
          %p248 = scmp.lt.s32.totalorder %s247, 16
          %s249 = scalar_select %p248, %s247, 16
          %s250 = smul.u32 64, %s249
          %s251 = smul.u32 %s250, 3
          %s253 = ssub.s32 3072, %s251
          %254 = vsyncadd %s242, %s253
          %p255 = scmp.ne.s32.totalorder 0, %s251
          %s256 = smul.addr %s246, 3
          %s257 = smul.addr %s28, 72
          %s258 = sadd.s32 %s256, %s257
          %s259 = smul.addr %s258, 64
          %s260 = scalar_lea.hbm %s0, %s259
          %s261 = smul.u32 %s249, 3
          %s262 = smul.u32 4, %s261
          %s263 = sshll.u32 %s245, 4
          %s264 = int_to_ptr.vmem [resolvable:$true] %s263
          %s265 = sshll.u32 %s262, 4
          %269 = dma.hbm_to_vmem [thread:$0]  (%p255), %s260, %s265, %s264, %s242, 64, 64, 4
        $region32: #{tpu_custom_call.1} parent=27 // pred_fallthru
          _
        // Predicated region
        $region33: #{tpu_custom_call.1} parent=27 // pred_check
          %p270 = pneg %p87
        $region34: #{tpu_custom_call.1} parent=27 // pred_check_branch
          %272 = sbr.rel (%p270) target = $region36
        $region35: #{tpu_custom_call.1} parent=27 // pred_region
          %s273 = sand.u32 %s21, 1
          %s274 = scalar_lea.sflag [#allocation6], %s273
          %s275 = sand.u32 %s77, 1
          %s276 = smul.addr %s275, 96
          %s277 = scalar_lea.vmem [#allocation5], %s276
          %s278 = sadd.s32 %s29, 1
          %s279 = smul.u32 %s278, 2
          %s280 = smul.u32 8, %s279
          %s282 = ssub.s32 1536, 1536
          %283 = vsyncadd %s274, %s282
          %s284 = smul.addr %s280, 3
          %s285 = smul.addr %s28, 72
          %s286 = sadd.s32 %s284, %s285
          %s287 = smul.addr %s286, 64
          %s288 = scalar_lea.hbm %s1, %s287
          %s289 = sshll.u32 %s277, 4
          %s290 = int_to_ptr.vmem [resolvable:$true] %s289
          %295 = dma.hbm_to_vmem [thread:$0]  %s288, 1536, %s290, %s274, 64, 64, 4
        $region36: #{tpu_custom_call.1} parent=27 // pred_fallthru
          _
      $region28: #{tpu_custom_call.1} parent=5 // pred_fallthru
        _
      %p296 = scmp.le.s32.totalorder 1, %s21
      %p297 = scmp.lt.s32.totalorder %s21, 3
      %p298 = pnand %p296, %p297
      %p299 = pneg %p298
      // Predicated region
      $region37: #{tpu_custom_call.1} parent=5 // pred_check
        _
      $region38: #{tpu_custom_call.1} parent=5 // pred_check_branch
        %301 = sbr.rel (%p298) target = $region40
      $region39: #{tpu_custom_call.1} parent=5 // pred_region
        %s302 = ssub.s32 %s21, 1
        %s303 = sand.u32 %s48, 1
        %s304 = scalar_lea.sflag [#allocation3], %s303
        %s305 = sand.u32 %s48, 1
        %s306 = smul.addr %s305, 192
        %s307 = scalar_lea.vmem [#allocation2], %s306
        // Predicated region
        $region41: #{tpu_custom_call.1} parent=39 // pred_check
          %p308 = pneg %p61
        $region42: #{tpu_custom_call.1} parent=39 // pred_check_branch
          %310 = sbr.rel (%p308) target = $region44
        $region43: #{tpu_custom_call.1} parent=39 // pred_region
          %311 = dma.done %s304, 3072
        $region44: #{tpu_custom_call.1} parent=39 // pred_fallthru
          _
        %s312 = sand.u32 %s26, 1
        %s313 = scalar_lea.sflag [#allocation6], %s312
        %s314 = sand.u32 %s80, 1
        %s315 = smul.addr %s314, 96
        %s316 = scalar_lea.vmem [#allocation5], %s315
        // Predicated region
        $region45: #{tpu_custom_call.1} parent=39 // pred_check
          %p317 = pneg %p93
        $region46: #{tpu_custom_call.1} parent=39 // pred_check_branch
          %319 = sbr.rel (%p317) target = $region48
        $region47: #{tpu_custom_call.1} parent=39 // pred_region
          %320 = dma.done %s313, 1536
        $region48: #{tpu_custom_call.1} parent=39 // pred_fallthru
          _
        // Predicated region
        $region49: #{tpu_custom_call.1} parent=39 // pred_check
          %p321 = pneg %p114
        $region50: #{tpu_custom_call.1} parent=39 // pred_check_branch
          %323 = sbr.rel (%p321) target = $region52
        $region51: #{tpu_custom_call.1} parent=39 // pred_region
          %324 = dma.done [#allocation6], 3136
        $region52: #{tpu_custom_call.1} parent=39 // pred_fallthru
          _
        // Predicated region
        $region53: #{tpu_custom_call.1} parent=39 // pred_check
          %p325 = pneg %p135
        $region54: #{tpu_custom_call.1} parent=39 // pred_check_branch
          %327 = sbr.rel (%p325) target = $region56
        $region55: #{tpu_custom_call.1} parent=39 // pred_region
          %328 = dma.done [#allocation9], 16
        $region56: #{tpu_custom_call.1} parent=39 // pred_fallthru
          _
        // Predicated region
        $region57: #{tpu_custom_call.1} parent=39 // pred_check
          %p329 = pneg %p156
        $region58: #{tpu_custom_call.1} parent=39 // pred_check_branch
          %331 = sbr.rel (%p329) target = $region60
        $region59: #{tpu_custom_call.1} parent=39 // pred_region
          %332 = dma.done [#allocation9], 16
        $region60: #{tpu_custom_call.1} parent=39 // pred_fallthru
          _
        %s333 = sand.u32 %s48, 1
        %s334 = scalar_lea.sflag [#allocation3], %s333
        %s335 = sand.u32 %s48, 1
        %s336 = smul.addr %s335, 192
        %s337 = scalar_lea.vmem [#allocation2], %s336
        %p338 = pneg %p61
        %p339 = pneg %p58
        %s340 = sand.u32 %s26, 1
        %s341 = scalar_lea.sflag [#allocation6], %s340
        %s342 = sand.u32 %s80, 1
        %s343 = smul.addr %s342, 96
        %s344 = scalar_lea.vmem [#allocation5], %s343
        %p345 = pneg %p93
        %p346 = pneg %p90
        %p347 = pneg %p114
        %p348 = pneg %p111
        %p349 = pneg %p135
        %p350 = pneg %p132
        %p351 = pneg %p156
        %p352 = pneg %p153
        %p353 = pneg %p184
        %p354 = pneg %p181
        %s355 = sand.u32 %s171, 1
        %s356 = scalar_lea.sflag [#allocation4], %s355
        %s357 = sand.u32 %s171, 1
        %s358 = smul.addr %s357, 64
        %s359 = scalar_lea.vmem [#allocation11], %s358
        %s360 = smul.u32 16, %s31
        %s361 = ssub.s32 24, %s360
        %p362 = scmp.lt.s32.totalorder %s361, 16
        %s363 = scalar_select %p362, %s361, 16
        %s364 = smul.u32 64, %s363
        %s365 = smul.u32 %s364, 3
        %s366 = sadd.s32 %s31, 1
        %s367 = smul.u32 %s366, 2
        %s368 = smul.u32 8, %s367
        %s369 = smul.u32 8, %s31
        %v371 = vld [vmem:[%s307] sm:$0xf]
        %v372 = vld [vmem:[%s307 + $0x4] sm:$0xf]
        %v373 = vld [vmem:[%s307 + $0x8] sm:$0x7]
        %v374 = vld [vmem:[%s307 + $0xc] sm:$0xf]
        %v375 = vld [vmem:[%s307 + $0x10] sm:$0xf]
        %v376 = vld [vmem:[%s307 + $0x14] sm:$0x7]
        %v377 = vld [vmem:[%s307 + $0x18] sm:$0xf]
        %v378 = vld [vmem:[%s307 + $0x1c] sm:$0xf]
        %v379 = vld [vmem:[%s307 + $0x20] sm:$0x7]
        %v380 = vld [vmem:[%s307 + $0x24] sm:$0xf]
        %v381 = vld [vmem:[%s307 + $0x28] sm:$0xf]
        %v382 = vld [vmem:[%s307 + $0x2c] sm:$0x7]
        %v383 = vld [vmem:[%s307 + $0x30] sm:$0xf]
        %v384 = vld [vmem:[%s307 + $0x34] sm:$0xf]
        %v385 = vld [vmem:[%s307 + $0x38] sm:$0x7]
        %v386 = vld [vmem:[%s307 + $0x3c] sm:$0xf]
        %v387 = vld [vmem:[%s307 + $0x40] sm:$0xf]
        %v388 = vld [vmem:[%s307 + $0x44] sm:$0x7]
        %v389 = vld [vmem:[%s307 + $0x48] sm:$0xf]
        %v390 = vld [vmem:[%s307 + $0x4c] sm:$0xf]
        %v391 = vld [vmem:[%s307 + $0x50] sm:$0x7]
        %v392 = vld [vmem:[%s307 + $0x54] sm:$0xf]
        %v393 = vld [vmem:[%s307 + $0x58] sm:$0xf]
        %v394 = vld [vmem:[%s307 + $0x5c] sm:$0x7]
        %v395 = vld [vmem:[%s307 + $0x60] sm:$0xf]
        %v396 = vld [vmem:[%s307 + $0x64] sm:$0xf]
        %v397 = vld [vmem:[%s307 + $0x68] sm:$0x7]
        %v398 = vld [vmem:[%s307 + $0x6c] sm:$0xf]
        %v399 = vld [vmem:[%s307 + $0x70] sm:$0xf]
        %v400 = vld [vmem:[%s307 + $0x74] sm:$0x7]
        %v401 = vld [vmem:[%s307 + $0x78] sm:$0xf]
        %v402 = vld [vmem:[%s307 + $0x7c] sm:$0xf]
        %v403 = vld [vmem:[%s307 + $0x80] sm:$0x7]
        %v404 = vld [vmem:[%s307 + $0x84] sm:$0xf]
        %v405 = vld [vmem:[%s307 + $0x88] sm:$0xf]
        %v406 = vld [vmem:[%s307 + $0x8c] sm:$0x7]
        %v407 = vld [vmem:[%s307 + $0x90] sm:$0xf]
        %v408 = vld [vmem:[%s307 + $0x94] sm:$0xf]
        %v409 = vld [vmem:[%s307 + $0x98] sm:$0x7]
        %v410 = vld [vmem:[%s307 + $0x9c] sm:$0xf]
        %v411 = vld [vmem:[%s307 + $0xa0] sm:$0xf]
        %v412 = vld [vmem:[%s307 + $0xa4] sm:$0x7]
        %v413 = vld [vmem:[%s307 + $0xa8] sm:$0xf]
        %v414 = vld [vmem:[%s307 + $0xac] sm:$0xf]
        %v415 = vld [vmem:[%s307 + $0xb0] sm:$0x7]
        %v416 = vld [vmem:[%s307 + $0xb4] sm:$0xf]
        %v417 = vld [vmem:[%s307 + $0xb8] sm:$0xf]
        %v418 = vld [vmem:[%s307 + $0xbc] sm:$0x7]
        %v419 = vld [vmem:[%s316] sm:$0xf]
        %v420 = vld [vmem:[%s316 + $0x4] sm:$0xf]
        %v421 = vld [vmem:[%s316 + $0x8] sm:$0x7]
        %v422 = vld [vmem:[%s316 + $0xc] sm:$0xf]
        %v423 = vld [vmem:[%s316 + $0x10] sm:$0xf]
        %v424 = vld [vmem:[%s316 + $0x14] sm:$0x7]
        %v425 = vld [vmem:[%s316 + $0x18] sm:$0xf]
        %v426 = vld [vmem:[%s316 + $0x1c] sm:$0xf]
        %v427 = vld [vmem:[%s316 + $0x20] sm:$0x7]
        %v428 = vld [vmem:[%s316 + $0x24] sm:$0xf]
        %v429 = vld [vmem:[%s316 + $0x28] sm:$0xf]
        %v430 = vld [vmem:[%s316 + $0x2c] sm:$0x7]
        %v431 = vld [vmem:[%s316 + $0x30] sm:$0xf]
        %v432 = vld [vmem:[%s316 + $0x34] sm:$0xf]
        %v433 = vld [vmem:[%s316 + $0x38] sm:$0x7]
        %v450 = vunpack.c.l.b16 %v371
        %v451 = vunpack.c.l.b16 %v372
        %v452 = vunpack.c.l.b16 %v377
        %v453 = vunpack.c.l.b16 %v378
        %v454 = vunpack.c.l.b16 %v383
        %v455 = vunpack.c.l.b16 %v384
        %v456 = vunpack.c.l.b16 %v389
        %v457 = vunpack.c.l.b16 %v390
        %v458 = vunpack.c.l.b16 %v395
        %v459 = vunpack.c.l.b16 %v396
        %v460 = vunpack.c.l.b16 %v401
        %v461 = vunpack.c.l.b16 %v402
        %v462 = vunpack.c.l.b16 %v407
        %v463 = vunpack.c.l.b16 %v408
        %v464 = vunpack.c.l.b16 %v413
        %v465 = vunpack.c.l.b16 %v414
        %v466 = vpack.c.b16 %v451, %v450
        %v467 = vpack.c.b16 %v453, %v452
        %v468 = vpack.c.b16 %v455, %v454
        %v469 = vpack.c.b16 %v457, %v456
        %v470 = vpack.c.b16 %v459, %v458
        %v471 = vpack.c.b16 %v461, %v460
        %v472 = vpack.c.b16 %v463, %v462
        %v473 = vpack.c.b16 %v465, %v464
        %v482 = vunpack.c.l.b16 %v373
        %v483 = vunpack.c.l.b16 %v379
        %v484 = vunpack.c.l.b16 %v385
        %v485 = vunpack.c.l.b16 %v391
        %v486 = vunpack.c.l.b16 %v397
        %v487 = vunpack.c.l.b16 %v403
        %v488 = vunpack.c.l.b16 %v409
        %v489 = vunpack.c.l.b16 %v415
        %v490 = vpack.c.b16 %v482, %v482
        %v491 = vpack.c.b16 %v483, %v483
        %v492 = vpack.c.b16 %v484, %v484
        %v493 = vpack.c.b16 %v485, %v485
        %v494 = vpack.c.b16 %v486, %v486
        %v495 = vpack.c.b16 %v487, %v487
        %v496 = vpack.c.b16 %v488, %v488
        %v497 = vpack.c.b16 %v489, %v489
        %vm498 = vsmask.f32 7424
        %v500 = vshrl.u32 %v466, 16
        %v502 = vshll.u32 %v466, 16
        %v504 = vrot.slane %v502, 1
        %v505 = vor.u32 %v500, %v504
        %v507 = vshll.u32 %v490, 16
        %v509 = vrot.slane %v507, 1
        %v510 = vsel %vm498, %v505, %v509
        %v512 = vshrl.u32 %v467, 16
        %v514 = vshll.u32 %v467, 16
        %v516 = vrot.slane %v514, 1
        %v517 = vor.u32 %v512, %v516
        %v519 = vshll.u32 %v491, 16
        %v521 = vrot.slane %v519, 1
        %v522 = vsel %vm498, %v517, %v521
        %v524 = vshrl.u32 %v468, 16
        %v526 = vshll.u32 %v468, 16
        %v528 = vrot.slane %v526, 1
        %v529 = vor.u32 %v524, %v528
        %v531 = vshll.u32 %v492, 16
        %v533 = vrot.slane %v531, 1
        %v534 = vsel %vm498, %v529, %v533
        %v536 = vshrl.u32 %v469, 16
        %v538 = vshll.u32 %v469, 16
        %v540 = vrot.slane %v538, 1
        %v541 = vor.u32 %v536, %v540
        %v543 = vshll.u32 %v493, 16
        %v545 = vrot.slane %v543, 1
        %v546 = vsel %vm498, %v541, %v545
        %v548 = vshrl.u32 %v470, 16
        %v550 = vshll.u32 %v470, 16
        %v552 = vrot.slane %v550, 1
        %v553 = vor.u32 %v548, %v552
        %v555 = vshll.u32 %v494, 16
        %v557 = vrot.slane %v555, 1
        %v558 = vsel %vm498, %v553, %v557
        %v560 = vshrl.u32 %v471, 16
        %v562 = vshll.u32 %v471, 16
        %v564 = vrot.slane %v562, 1
        %v565 = vor.u32 %v560, %v564
        %v567 = vshll.u32 %v495, 16
        %v569 = vrot.slane %v567, 1
        %v570 = vsel %vm498, %v565, %v569
        %v572 = vshrl.u32 %v472, 16
        %v574 = vshll.u32 %v472, 16
        %v576 = vrot.slane %v574, 1
        %v577 = vor.u32 %v572, %v576
        %v579 = vshll.u32 %v496, 16
        %v581 = vrot.slane %v579, 1
        %v582 = vsel %vm498, %v577, %v581
        %v584 = vshrl.u32 %v473, 16
        %v586 = vshll.u32 %v473, 16
        %v588 = vrot.slane %v586, 1
        %v589 = vor.u32 %v584, %v588
        %v591 = vshll.u32 %v497, 16
        %v593 = vrot.slane %v591, 1
        %v594 = vsel %vm498, %v589, %v593
        %595 = vrot.lane.b32.xlu0 %v510, 8
        %v596 = vpop.permute.xlu0 %595
        %597 = vrot.lane.b32.xlu0 %v522, 8
        %v598 = vpop.permute.xlu0 %597
        %599 = vrot.lane.b32.xlu0 %v534, 8
        %v600 = vpop.permute.xlu0 %599
        %601 = vrot.lane.b32.xlu0 %v546, 8
        %v602 = vpop.permute.xlu0 %601
        %603 = vrot.lane.b32.xlu0 %v558, 8
        %v604 = vpop.permute.xlu0 %603
        %605 = vrot.lane.b32.xlu0 %v570, 8
        %v606 = vpop.permute.xlu0 %605
        %607 = vrot.lane.b32.xlu0 %v582, 8
        %v608 = vpop.permute.xlu0 %607
        %609 = vrot.lane.b32.xlu0 %v594, 8
        %v610 = vpop.permute.xlu0 %609
        %vm611 = vcmask 1046528
        %v612 = vrot.slane %v466, 1
        %v613 = vrot.slane %v490, 1
        %v614 = vsel %vm611, %v612, %v613
        %v615 = vrot.slane %v467, 1
        %v616 = vrot.slane %v491, 1
        %v617 = vsel %vm611, %v615, %v616
        %v618 = vrot.slane %v468, 1
        %v619 = vrot.slane %v492, 1
        %v620 = vsel %vm611, %v618, %v619
        %v621 = vrot.slane %v469, 1
        %v622 = vrot.slane %v493, 1
        %v623 = vsel %vm611, %v621, %v622
        %v624 = vrot.slane %v470, 1
        %v625 = vrot.slane %v494, 1
        %v626 = vsel %vm611, %v624, %v625
        %v627 = vrot.slane %v471, 1
        %v628 = vrot.slane %v495, 1
        %v629 = vsel %vm611, %v627, %v628
        %v630 = vrot.slane %v472, 1
        %v631 = vrot.slane %v496, 1
        %v632 = vsel %vm611, %v630, %v631
        %v633 = vrot.slane %v473, 1
        %v634 = vrot.slane %v497, 1
        %v635 = vsel %vm611, %v633, %v634
        %636 = vrot.lane.b32.xlu0 %v614, 16
        %v637 = vpop.permute.xlu0 %636
        %638 = vrot.lane.b32.xlu0 %v617, 16
        %v639 = vpop.permute.xlu0 %638
        %640 = vrot.lane.b32.xlu0 %v620, 16
        %v641 = vpop.permute.xlu0 %640
        %642 = vrot.lane.b32.xlu0 %v623, 16
        %v643 = vpop.permute.xlu0 %642
        %644 = vrot.lane.b32.xlu0 %v626, 16
        %v645 = vpop.permute.xlu0 %644
        %646 = vrot.lane.b32.xlu0 %v629, 16
        %v647 = vpop.permute.xlu0 %646
        %648 = vrot.lane.b32.xlu0 %v632, 16
        %v649 = vpop.permute.xlu0 %648
        %650 = vrot.lane.b32.xlu0 %v635, 16
        %v651 = vpop.permute.xlu0 %650
        %vm652 = vsmask.f32 6400
        %v653 = vrot.slane %v500, 1
        %v654 = vrot.slane %v502, 2
        %v655 = vor.u32 %v653, %v654
        %v656 = vshrl.u32 %v490, 16
        %v658 = vrot.slane %v656, 1
        %v659 = vrot.slane %v507, 2
        %v660 = vor.u32 %v658, %v659
        %v661 = vsel %vm652, %v655, %v660
        %v662 = vrot.slane %v512, 1
        %v663 = vrot.slane %v514, 2
        %v664 = vor.u32 %v662, %v663
        %v665 = vshrl.u32 %v491, 16
        %v667 = vrot.slane %v665, 1
        %v668 = vrot.slane %v519, 2
        %v669 = vor.u32 %v667, %v668
        %v670 = vsel %vm652, %v664, %v669
        %v671 = vrot.slane %v524, 1
        %v672 = vrot.slane %v526, 2
        %v673 = vor.u32 %v671, %v672
        %v674 = vshrl.u32 %v492, 16
        %v676 = vrot.slane %v674, 1
        %v677 = vrot.slane %v531, 2
        %v678 = vor.u32 %v676, %v677
        %v679 = vsel %vm652, %v673, %v678
        %v680 = vrot.slane %v536, 1
        %v681 = vrot.slane %v538, 2
        %v682 = vor.u32 %v680, %v681
        %v683 = vshrl.u32 %v493, 16
        %v685 = vrot.slane %v683, 1
        %v686 = vrot.slane %v543, 2
        %v687 = vor.u32 %v685, %v686
        %v688 = vsel %vm652, %v682, %v687
        %v689 = vrot.slane %v548, 1
        %v690 = vrot.slane %v550, 2
        %v691 = vor.u32 %v689, %v690
        %v692 = vshrl.u32 %v494, 16
        %v694 = vrot.slane %v692, 1
        %v695 = vrot.slane %v555, 2
        %v696 = vor.u32 %v694, %v695
        %v697 = vsel %vm652, %v691, %v696
        %v698 = vrot.slane %v560, 1
        %v699 = vrot.slane %v562, 2
        %v700 = vor.u32 %v698, %v699
        %v701 = vshrl.u32 %v495, 16
        %v703 = vrot.slane %v701, 1
        %v704 = vrot.slane %v567, 2
        %v705 = vor.u32 %v703, %v704
        %v706 = vsel %vm652, %v700, %v705
        %v707 = vrot.slane %v572, 1
        %v708 = vrot.slane %v574, 2
        %v709 = vor.u32 %v707, %v708
        %v710 = vshrl.u32 %v496, 16
        %v712 = vrot.slane %v710, 1
        %v713 = vrot.slane %v579, 2
        %v714 = vor.u32 %v712, %v713
        %v715 = vsel %vm652, %v709, %v714
        %v716 = vrot.slane %v584, 1
        %v717 = vrot.slane %v586, 2
        %v718 = vor.u32 %v716, %v717
        %v719 = vshrl.u32 %v497, 16
        %v721 = vrot.slane %v719, 1
        %v722 = vrot.slane %v591, 2
        %v723 = vor.u32 %v721, %v722
        %v724 = vsel %vm652, %v718, %v723
        %725 = vrot.lane.b32.xlu0 %v661, 24
        %v726 = vpop.permute.xlu0 %725
        %727 = vrot.lane.b32.xlu0 %v670, 24
        %v728 = vpop.permute.xlu0 %727
        %729 = vrot.lane.b32.xlu0 %v679, 24
        %v730 = vpop.permute.xlu0 %729
        %731 = vrot.lane.b32.xlu0 %v688, 24
        %v732 = vpop.permute.xlu0 %731
        %733 = vrot.lane.b32.xlu0 %v697, 24
        %v734 = vpop.permute.xlu0 %733
        %735 = vrot.lane.b32.xlu0 %v706, 24
        %v736 = vpop.permute.xlu0 %735
        %737 = vrot.lane.b32.xlu0 %v715, 24
        %v738 = vpop.permute.xlu0 %737
        %739 = vrot.lane.b32.xlu0 %v724, 24
        %v740 = vpop.permute.xlu0 %739
        %vm741 = vcmask 1045504
        %v742 = vrot.slane %v466, 2
        %v743 = vrot.slane %v490, 2
        %v744 = vsel %vm741, %v742, %v743
        %v745 = vrot.slane %v467, 2
        %v746 = vrot.slane %v491, 2
        %v747 = vsel %vm741, %v745, %v746
        %v748 = vrot.slane %v468, 2
        %v749 = vrot.slane %v492, 2
        %v750 = vsel %vm741, %v748, %v749
        %v751 = vrot.slane %v469, 2
        %v752 = vrot.slane %v493, 2
        %v753 = vsel %vm741, %v751, %v752
        %v754 = vrot.slane %v470, 2
        %v755 = vrot.slane %v494, 2
        %v756 = vsel %vm741, %v754, %v755
        %v757 = vrot.slane %v471, 2
        %v758 = vrot.slane %v495, 2
        %v759 = vsel %vm741, %v757, %v758
        %v760 = vrot.slane %v472, 2
        %v761 = vrot.slane %v496, 2
        %v762 = vsel %vm741, %v760, %v761
        %v763 = vrot.slane %v473, 2
        %v764 = vrot.slane %v497, 2
        %v765 = vsel %vm741, %v763, %v764
        %766 = vrot.lane.b32.xlu0 %v744, 32
        %v767 = vpop.permute.xlu0 %766
        %768 = vrot.lane.b32.xlu0 %v747, 32
        %v769 = vpop.permute.xlu0 %768
        %770 = vrot.lane.b32.xlu0 %v750, 32
        %v771 = vpop.permute.xlu0 %770
        %772 = vrot.lane.b32.xlu0 %v753, 32
        %v773 = vpop.permute.xlu0 %772
        %774 = vrot.lane.b32.xlu0 %v756, 32
        %v775 = vpop.permute.xlu0 %774
        %776 = vrot.lane.b32.xlu0 %v759, 32
        %v777 = vpop.permute.xlu0 %776
        %778 = vrot.lane.b32.xlu0 %v762, 32
        %v779 = vpop.permute.xlu0 %778
        %780 = vrot.lane.b32.xlu0 %v765, 32
        %v781 = vpop.permute.xlu0 %780
        %vm782 = vsmask.f32 5376
        %v783 = vrot.slane %v500, 2
        %v784 = vrot.slane %v502, 3
        %v785 = vor.u32 %v783, %v784
        %v786 = vrot.slane %v656, 2
        %v787 = vrot.slane %v507, 3
        %v788 = vor.u32 %v786, %v787
        %v789 = vsel %vm782, %v785, %v788
        %v790 = vrot.slane %v512, 2
        %v791 = vrot.slane %v514, 3
        %v792 = vor.u32 %v790, %v791
        %v793 = vrot.slane %v665, 2
        %v794 = vrot.slane %v519, 3
        %v795 = vor.u32 %v793, %v794
        %v796 = vsel %vm782, %v792, %v795
        %v797 = vrot.slane %v524, 2
        %v798 = vrot.slane %v526, 3
        %v799 = vor.u32 %v797, %v798
        %v800 = vrot.slane %v674, 2
        %v801 = vrot.slane %v531, 3
        %v802 = vor.u32 %v800, %v801
        %v803 = vsel %vm782, %v799, %v802
        %v804 = vrot.slane %v536, 2
        %v805 = vrot.slane %v538, 3
        %v806 = vor.u32 %v804, %v805
        %v807 = vrot.slane %v683, 2
        %v808 = vrot.slane %v543, 3
        %v809 = vor.u32 %v807, %v808
        %v810 = vsel %vm782, %v806, %v809
        %v811 = vrot.slane %v548, 2
        %v812 = vrot.slane %v550, 3
        %v813 = vor.u32 %v811, %v812
        %v814 = vrot.slane %v692, 2
        %v815 = vrot.slane %v555, 3
        %v816 = vor.u32 %v814, %v815
        %v817 = vsel %vm782, %v813, %v816
        %v818 = vrot.slane %v560, 2
        %v819 = vrot.slane %v562, 3
        %v820 = vor.u32 %v818, %v819
        %v821 = vrot.slane %v701, 2
        %v822 = vrot.slane %v567, 3
        %v823 = vor.u32 %v821, %v822
        %v824 = vsel %vm782, %v820, %v823
        %v825 = vrot.slane %v572, 2
        %v826 = vrot.slane %v574, 3
        %v827 = vor.u32 %v825, %v826
        %v828 = vrot.slane %v710, 2
        %v829 = vrot.slane %v579, 3
        %v830 = vor.u32 %v828, %v829
        %v831 = vsel %vm782, %v827, %v830
        %v832 = vrot.slane %v584, 2
        %v833 = vrot.slane %v586, 3
        %v834 = vor.u32 %v832, %v833
        %v835 = vrot.slane %v719, 2
        %v836 = vrot.slane %v591, 3
        %v837 = vor.u32 %v835, %v836
        %v838 = vsel %vm782, %v834, %v837
        %839 = vrot.lane.b32.xlu0 %v789, 40
        %v840 = vpop.permute.xlu0 %839
        %841 = vrot.lane.b32.xlu0 %v796, 40
        %v842 = vpop.permute.xlu0 %841
        %843 = vrot.lane.b32.xlu0 %v803, 40
        %v844 = vpop.permute.xlu0 %843
        %845 = vrot.lane.b32.xlu0 %v810, 40
        %v846 = vpop.permute.xlu0 %845
        %847 = vrot.lane.b32.xlu0 %v817, 40
        %v848 = vpop.permute.xlu0 %847
        %849 = vrot.lane.b32.xlu0 %v824, 40
        %v850 = vpop.permute.xlu0 %849
        %851 = vrot.lane.b32.xlu0 %v831, 40
        %v852 = vpop.permute.xlu0 %851
        %853 = vrot.lane.b32.xlu0 %v838, 40
        %v854 = vpop.permute.xlu0 %853
        %vm855 = vcmask 1044480
        %v856 = vrot.slane %v466, 3
        %v857 = vrot.slane %v490, 3
        %v858 = vsel %vm855, %v856, %v857
        %v859 = vrot.slane %v467, 3
        %v860 = vrot.slane %v491, 3
        %v861 = vsel %vm855, %v859, %v860
        %v862 = vrot.slane %v468, 3
        %v863 = vrot.slane %v492, 3
        %v864 = vsel %vm855, %v862, %v863
        %v865 = vrot.slane %v469, 3
        %v866 = vrot.slane %v493, 3
        %v867 = vsel %vm855, %v865, %v866
        %v868 = vrot.slane %v470, 3
        %v869 = vrot.slane %v494, 3
        %v870 = vsel %vm855, %v868, %v869
        %v871 = vrot.slane %v471, 3
        %v872 = vrot.slane %v495, 3
        %v873 = vsel %vm855, %v871, %v872
        %v874 = vrot.slane %v472, 3
        %v875 = vrot.slane %v496, 3
        %v876 = vsel %vm855, %v874, %v875
        %v877 = vrot.slane %v473, 3
        %v878 = vrot.slane %v497, 3
        %v879 = vsel %vm855, %v877, %v878
        %880 = vrot.lane.b32.xlu0 %v858, 48
        %v881 = vpop.permute.xlu0 %880
        %882 = vrot.lane.b32.xlu0 %v861, 48
        %v883 = vpop.permute.xlu0 %882
        %884 = vrot.lane.b32.xlu0 %v864, 48
        %v885 = vpop.permute.xlu0 %884
        %886 = vrot.lane.b32.xlu0 %v867, 48
        %v887 = vpop.permute.xlu0 %886
        %888 = vrot.lane.b32.xlu0 %v870, 48
        %v889 = vpop.permute.xlu0 %888
        %890 = vrot.lane.b32.xlu0 %v873, 48
        %v891 = vpop.permute.xlu0 %890
        %892 = vrot.lane.b32.xlu0 %v876, 48
        %v893 = vpop.permute.xlu0 %892
        %894 = vrot.lane.b32.xlu0 %v879, 48
        %v895 = vpop.permute.xlu0 %894
        %v912 = vunpack.c.l.b16 %v374
        %v913 = vunpack.c.l.b16 %v375
        %v914 = vunpack.c.l.b16 %v380
        %v915 = vunpack.c.l.b16 %v381
        %v916 = vunpack.c.l.b16 %v386
        %v917 = vunpack.c.l.b16 %v387
        %v918 = vunpack.c.l.b16 %v392
        %v919 = vunpack.c.l.b16 %v393
        %v920 = vunpack.c.l.b16 %v398
        %v921 = vunpack.c.l.b16 %v399
        %v922 = vunpack.c.l.b16 %v404
        %v923 = vunpack.c.l.b16 %v405
        %v924 = vunpack.c.l.b16 %v410
        %v925 = vunpack.c.l.b16 %v411
        %v926 = vunpack.c.l.b16 %v416
        %v927 = vunpack.c.l.b16 %v417
        %v928 = vpack.c.b16 %v913, %v912
        %v929 = vpack.c.b16 %v915, %v914
        %v930 = vpack.c.b16 %v917, %v916
        %v931 = vpack.c.b16 %v919, %v918
        %v932 = vpack.c.b16 %v921, %v920
        %v933 = vpack.c.b16 %v923, %v922
        %v934 = vpack.c.b16 %v925, %v924
        %v935 = vpack.c.b16 %v927, %v926
        %936 = vrot.lane.b32.xlu0 %v928, 56
        %v937 = vpop.permute.xlu0 %936
        %938 = vrot.lane.b32.xlu0 %v929, 56
        %v939 = vpop.permute.xlu0 %938
        %940 = vrot.lane.b32.xlu0 %v930, 56
        %v941 = vpop.permute.xlu0 %940
        %942 = vrot.lane.b32.xlu0 %v931, 56
        %v943 = vpop.permute.xlu0 %942
        %944 = vrot.lane.b32.xlu0 %v932, 56
        %v945 = vpop.permute.xlu0 %944
        %946 = vrot.lane.b32.xlu0 %v933, 56
        %v947 = vpop.permute.xlu0 %946
        %948 = vrot.lane.b32.xlu0 %v934, 56
        %v949 = vpop.permute.xlu0 %948
        %950 = vrot.lane.b32.xlu0 %v935, 56
        %v951 = vpop.permute.xlu0 %950
        %v960 = vunpack.c.l.b16 %v376
        %v961 = vunpack.c.l.b16 %v382
        %v962 = vunpack.c.l.b16 %v388
        %v963 = vunpack.c.l.b16 %v394
        %v964 = vunpack.c.l.b16 %v400
        %v965 = vunpack.c.l.b16 %v406
        %v966 = vunpack.c.l.b16 %v412
        %v967 = vunpack.c.l.b16 %v418
        %v968 = vpack.c.b16 %v960, %v960
        %v969 = vpack.c.b16 %v961, %v961
        %v970 = vpack.c.b16 %v962, %v962
        %v971 = vpack.c.b16 %v963, %v963
        %v972 = vpack.c.b16 %v964, %v964
        %v973 = vpack.c.b16 %v965, %v965
        %v974 = vpack.c.b16 %v966, %v966
        %v975 = vpack.c.b16 %v967, %v967
        %v977 = vshrl.u32 %v928, 16
        %v979 = vshll.u32 %v928, 16
        %v981 = vrot.slane %v979, 1
        %v982 = vor.u32 %v977, %v981
        %v984 = vshll.u32 %v968, 16
        %v986 = vrot.slane %v984, 1
        %v987 = vsel %vm498, %v982, %v986
        %v989 = vshrl.u32 %v929, 16
        %v991 = vshll.u32 %v929, 16
        %v993 = vrot.slane %v991, 1
        %v994 = vor.u32 %v989, %v993
        %v996 = vshll.u32 %v969, 16
        %v998 = vrot.slane %v996, 1
        %v999 = vsel %vm498, %v994, %v998
        %v1001 = vshrl.u32 %v930, 16
        %v1003 = vshll.u32 %v930, 16
        %v1005 = vrot.slane %v1003, 1
        %v1006 = vor.u32 %v1001, %v1005
        %v1008 = vshll.u32 %v970, 16
        %v1010 = vrot.slane %v1008, 1
        %v1011 = vsel %vm498, %v1006, %v1010
        %v1013 = vshrl.u32 %v931, 16
        %v1015 = vshll.u32 %v931, 16
        %v1017 = vrot.slane %v1015, 1
        %v1018 = vor.u32 %v1013, %v1017
        %v1020 = vshll.u32 %v971, 16
        %v1022 = vrot.slane %v1020, 1
        %v1023 = vsel %vm498, %v1018, %v1022
        %v1025 = vshrl.u32 %v932, 16
        %v1027 = vshll.u32 %v932, 16
        %v1029 = vrot.slane %v1027, 1
        %v1030 = vor.u32 %v1025, %v1029
        %v1032 = vshll.u32 %v972, 16
        %v1034 = vrot.slane %v1032, 1
        %v1035 = vsel %vm498, %v1030, %v1034
        %v1037 = vshrl.u32 %v933, 16
        %v1039 = vshll.u32 %v933, 16
        %v1041 = vrot.slane %v1039, 1
        %v1042 = vor.u32 %v1037, %v1041
        %v1044 = vshll.u32 %v973, 16
        %v1046 = vrot.slane %v1044, 1
        %v1047 = vsel %vm498, %v1042, %v1046
        %v1049 = vshrl.u32 %v934, 16
        %v1051 = vshll.u32 %v934, 16
        %v1053 = vrot.slane %v1051, 1
        %v1054 = vor.u32 %v1049, %v1053
        %v1056 = vshll.u32 %v974, 16
        %v1058 = vrot.slane %v1056, 1
        %v1059 = vsel %vm498, %v1054, %v1058
        %v1061 = vshrl.u32 %v935, 16
        %v1063 = vshll.u32 %v935, 16
        %v1065 = vrot.slane %v1063, 1
        %v1066 = vor.u32 %v1061, %v1065
        %v1068 = vshll.u32 %v975, 16
        %v1070 = vrot.slane %v1068, 1
        %v1071 = vsel %vm498, %v1066, %v1070
        %1072 = vrot.lane.b32.xlu0 %v987, 64
        %v1073 = vpop.permute.xlu0 %1072
        %1074 = vrot.lane.b32.xlu0 %v999, 64
        %v1075 = vpop.permute.xlu0 %1074
        %1076 = vrot.lane.b32.xlu0 %v1011, 64
        %v1077 = vpop.permute.xlu0 %1076
        %1078 = vrot.lane.b32.xlu0 %v1023, 64
        %v1079 = vpop.permute.xlu0 %1078
        %1080 = vrot.lane.b32.xlu0 %v1035, 64
        %v1081 = vpop.permute.xlu0 %1080
        %1082 = vrot.lane.b32.xlu0 %v1047, 64
        %v1083 = vpop.permute.xlu0 %1082
        %1084 = vrot.lane.b32.xlu0 %v1059, 64
        %v1085 = vpop.permute.xlu0 %1084
        %1086 = vrot.lane.b32.xlu0 %v1071, 64
        %v1087 = vpop.permute.xlu0 %1086
        %v1088 = vrot.slane %v928, 1
        %v1089 = vrot.slane %v968, 1
        %v1090 = vsel %vm611, %v1088, %v1089
        %v1091 = vrot.slane %v929, 1
        %v1092 = vrot.slane %v969, 1
        %v1093 = vsel %vm611, %v1091, %v1092
        %v1094 = vrot.slane %v930, 1
        %v1095 = vrot.slane %v970, 1
        %v1096 = vsel %vm611, %v1094, %v1095
        %v1097 = vrot.slane %v931, 1
        %v1098 = vrot.slane %v971, 1
        %v1099 = vsel %vm611, %v1097, %v1098
        %v1100 = vrot.slane %v932, 1
        %v1101 = vrot.slane %v972, 1
        %v1102 = vsel %vm611, %v1100, %v1101
        %v1103 = vrot.slane %v933, 1
        %v1104 = vrot.slane %v973, 1
        %v1105 = vsel %vm611, %v1103, %v1104
        %v1106 = vrot.slane %v934, 1
        %v1107 = vrot.slane %v974, 1
        %v1108 = vsel %vm611, %v1106, %v1107
        %v1109 = vrot.slane %v935, 1
        %v1110 = vrot.slane %v975, 1
        %v1111 = vsel %vm611, %v1109, %v1110
        %1112 = vrot.lane.b32.xlu0 %v1090, 72
        %v1113 = vpop.permute.xlu0 %1112
        %1114 = vrot.lane.b32.xlu0 %v1093, 72
        %v1115 = vpop.permute.xlu0 %1114
        %1116 = vrot.lane.b32.xlu0 %v1096, 72
        %v1117 = vpop.permute.xlu0 %1116
        %1118 = vrot.lane.b32.xlu0 %v1099, 72
        %v1119 = vpop.permute.xlu0 %1118
        %1120 = vrot.lane.b32.xlu0 %v1102, 72
        %v1121 = vpop.permute.xlu0 %1120
        %1122 = vrot.lane.b32.xlu0 %v1105, 72
        %v1123 = vpop.permute.xlu0 %1122
        %1124 = vrot.lane.b32.xlu0 %v1108, 72
        %v1125 = vpop.permute.xlu0 %1124
        %1126 = vrot.lane.b32.xlu0 %v1111, 72
        %v1127 = vpop.permute.xlu0 %1126
        %v1128 = vrot.slane %v977, 1
        %v1129 = vrot.slane %v979, 2
        %v1130 = vor.u32 %v1128, %v1129
        %v1131 = vshrl.u32 %v968, 16
        %v1133 = vrot.slane %v1131, 1
        %v1134 = vrot.slane %v984, 2
        %v1135 = vor.u32 %v1133, %v1134
        %v1136 = vsel %vm652, %v1130, %v1135
        %v1137 = vrot.slane %v989, 1
        %v1138 = vrot.slane %v991, 2
        %v1139 = vor.u32 %v1137, %v1138
        %v1140 = vshrl.u32 %v969, 16
        %v1142 = vrot.slane %v1140, 1
        %v1143 = vrot.slane %v996, 2
        %v1144 = vor.u32 %v1142, %v1143
        %v1145 = vsel %vm652, %v1139, %v1144
        %v1146 = vrot.slane %v1001, 1
        %v1147 = vrot.slane %v1003, 2
        %v1148 = vor.u32 %v1146, %v1147
        %v1149 = vshrl.u32 %v970, 16
        %v1151 = vrot.slane %v1149, 1
        %v1152 = vrot.slane %v1008, 2
        %v1153 = vor.u32 %v1151, %v1152
        %v1154 = vsel %vm652, %v1148, %v1153
        %v1155 = vrot.slane %v1013, 1
        %v1156 = vrot.slane %v1015, 2
        %v1157 = vor.u32 %v1155, %v1156
        %v1158 = vshrl.u32 %v971, 16
        %v1160 = vrot.slane %v1158, 1
        %v1161 = vrot.slane %v1020, 2
        %v1162 = vor.u32 %v1160, %v1161
        %v1163 = vsel %vm652, %v1157, %v1162
        %v1164 = vrot.slane %v1025, 1
        %v1165 = vrot.slane %v1027, 2
        %v1166 = vor.u32 %v1164, %v1165
        %v1167 = vshrl.u32 %v972, 16
        %v1169 = vrot.slane %v1167, 1
        %v1170 = vrot.slane %v1032, 2
        %v1171 = vor.u32 %v1169, %v1170
        %v1172 = vsel %vm652, %v1166, %v1171
        %v1173 = vrot.slane %v1037, 1
        %v1174 = vrot.slane %v1039, 2
        %v1175 = vor.u32 %v1173, %v1174
        %v1176 = vshrl.u32 %v973, 16
        %v1178 = vrot.slane %v1176, 1
        %v1179 = vrot.slane %v1044, 2
        %v1180 = vor.u32 %v1178, %v1179
        %v1181 = vsel %vm652, %v1175, %v1180
        %v1182 = vrot.slane %v1049, 1
        %v1183 = vrot.slane %v1051, 2
        %v1184 = vor.u32 %v1182, %v1183
        %v1185 = vshrl.u32 %v974, 16
        %v1187 = vrot.slane %v1185, 1
        %v1188 = vrot.slane %v1056, 2
        %v1189 = vor.u32 %v1187, %v1188
        %v1190 = vsel %vm652, %v1184, %v1189
        %v1191 = vrot.slane %v1061, 1
        %v1192 = vrot.slane %v1063, 2
        %v1193 = vor.u32 %v1191, %v1192
        %v1194 = vshrl.u32 %v975, 16
        %v1196 = vrot.slane %v1194, 1
        %v1197 = vrot.slane %v1068, 2
        %v1198 = vor.u32 %v1196, %v1197
        %v1199 = vsel %vm652, %v1193, %v1198
        %1200 = vrot.lane.b32.xlu0 %v1136, 80
        %v1201 = vpop.permute.xlu0 %1200
        %1202 = vrot.lane.b32.xlu0 %v1145, 80
        %v1203 = vpop.permute.xlu0 %1202
        %1204 = vrot.lane.b32.xlu0 %v1154, 80
        %v1205 = vpop.permute.xlu0 %1204
        %1206 = vrot.lane.b32.xlu0 %v1163, 80
        %v1207 = vpop.permute.xlu0 %1206
        %1208 = vrot.lane.b32.xlu0 %v1172, 80
        %v1209 = vpop.permute.xlu0 %1208
        %1210 = vrot.lane.b32.xlu0 %v1181, 80
        %v1211 = vpop.permute.xlu0 %1210
        %1212 = vrot.lane.b32.xlu0 %v1190, 80
        %v1213 = vpop.permute.xlu0 %1212
        %1214 = vrot.lane.b32.xlu0 %v1199, 80
        %v1215 = vpop.permute.xlu0 %1214
        %v1216 = vrot.slane %v928, 2
        %v1217 = vrot.slane %v968, 2
        %v1218 = vsel %vm741, %v1216, %v1217
        %v1219 = vrot.slane %v929, 2
        %v1220 = vrot.slane %v969, 2
        %v1221 = vsel %vm741, %v1219, %v1220
        %v1222 = vrot.slane %v930, 2
        %v1223 = vrot.slane %v970, 2
        %v1224 = vsel %vm741, %v1222, %v1223
        %v1225 = vrot.slane %v931, 2
        %v1226 = vrot.slane %v971, 2
        %v1227 = vsel %vm741, %v1225, %v1226
        %v1228 = vrot.slane %v932, 2
        %v1229 = vrot.slane %v972, 2
        %v1230 = vsel %vm741, %v1228, %v1229
        %v1231 = vrot.slane %v933, 2
        %v1232 = vrot.slane %v973, 2
        %v1233 = vsel %vm741, %v1231, %v1232
        %v1234 = vrot.slane %v934, 2
        %v1235 = vrot.slane %v974, 2
        %v1236 = vsel %vm741, %v1234, %v1235
        %v1237 = vrot.slane %v935, 2
        %v1238 = vrot.slane %v975, 2
        %v1239 = vsel %vm741, %v1237, %v1238
        %1240 = vrot.lane.b32.xlu0 %v1218, 88
        %v1241 = vpop.permute.xlu0 %1240
        %1242 = vrot.lane.b32.xlu0 %v1221, 88
        %v1243 = vpop.permute.xlu0 %1242
        %1244 = vrot.lane.b32.xlu0 %v1224, 88
        %v1245 = vpop.permute.xlu0 %1244
        %1246 = vrot.lane.b32.xlu0 %v1227, 88
        %v1247 = vpop.permute.xlu0 %1246
        %1248 = vrot.lane.b32.xlu0 %v1230, 88
        %v1249 = vpop.permute.xlu0 %1248
        %1250 = vrot.lane.b32.xlu0 %v1233, 88
        %v1251 = vpop.permute.xlu0 %1250
        %1252 = vrot.lane.b32.xlu0 %v1236, 88
        %v1253 = vpop.permute.xlu0 %1252
        %1254 = vrot.lane.b32.xlu0 %v1239, 88
        %v1255 = vpop.permute.xlu0 %1254
        %v1256 = vrot.slane %v977, 2
        %v1257 = vrot.slane %v979, 3
        %v1258 = vor.u32 %v1256, %v1257
        %v1259 = vrot.slane %v1131, 2
        %v1260 = vrot.slane %v984, 3
        %v1261 = vor.u32 %v1259, %v1260
        %v1262 = vsel %vm782, %v1258, %v1261
        %v1263 = vrot.slane %v989, 2
        %v1264 = vrot.slane %v991, 3
        %v1265 = vor.u32 %v1263, %v1264
        %v1266 = vrot.slane %v1140, 2
        %v1267 = vrot.slane %v996, 3
        %v1268 = vor.u32 %v1266, %v1267
        %v1269 = vsel %vm782, %v1265, %v1268
        %v1270 = vrot.slane %v1001, 2
        %v1271 = vrot.slane %v1003, 3
        %v1272 = vor.u32 %v1270, %v1271
        %v1273 = vrot.slane %v1149, 2
        %v1274 = vrot.slane %v1008, 3
        %v1275 = vor.u32 %v1273, %v1274
        %v1276 = vsel %vm782, %v1272, %v1275
        %v1277 = vrot.slane %v1013, 2
        %v1278 = vrot.slane %v1015, 3
        %v1279 = vor.u32 %v1277, %v1278
        %v1280 = vrot.slane %v1158, 2
        %v1281 = vrot.slane %v1020, 3
        %v1282 = vor.u32 %v1280, %v1281
        %v1283 = vsel %vm782, %v1279, %v1282
        %v1284 = vrot.slane %v1025, 2
        %v1285 = vrot.slane %v1027, 3
        %v1286 = vor.u32 %v1284, %v1285
        %v1287 = vrot.slane %v1167, 2
        %v1288 = vrot.slane %v1032, 3
        %v1289 = vor.u32 %v1287, %v1288
        %v1290 = vsel %vm782, %v1286, %v1289
        %v1291 = vrot.slane %v1037, 2
        %v1292 = vrot.slane %v1039, 3
        %v1293 = vor.u32 %v1291, %v1292
        %v1294 = vrot.slane %v1176, 2
        %v1295 = vrot.slane %v1044, 3
        %v1296 = vor.u32 %v1294, %v1295
        %v1297 = vsel %vm782, %v1293, %v1296
        %v1298 = vrot.slane %v1049, 2
        %v1299 = vrot.slane %v1051, 3
        %v1300 = vor.u32 %v1298, %v1299
        %v1301 = vrot.slane %v1185, 2
        %v1302 = vrot.slane %v1056, 3
        %v1303 = vor.u32 %v1301, %v1302
        %v1304 = vsel %vm782, %v1300, %v1303
        %v1305 = vrot.slane %v1061, 2
        %v1306 = vrot.slane %v1063, 3
        %v1307 = vor.u32 %v1305, %v1306
        %v1308 = vrot.slane %v1194, 2
        %v1309 = vrot.slane %v1068, 3
        %v1310 = vor.u32 %v1308, %v1309
        %v1311 = vsel %vm782, %v1307, %v1310
        %1312 = vrot.lane.b32.xlu0 %v1262, 96
        %v1313 = vpop.permute.xlu0 %1312
        %1314 = vrot.lane.b32.xlu0 %v1269, 96
        %v1315 = vpop.permute.xlu0 %1314
        %1316 = vrot.lane.b32.xlu0 %v1276, 96
        %v1317 = vpop.permute.xlu0 %1316
        %1318 = vrot.lane.b32.xlu0 %v1283, 96
        %v1319 = vpop.permute.xlu0 %1318
        %1320 = vrot.lane.b32.xlu0 %v1290, 96
        %v1321 = vpop.permute.xlu0 %1320
        %1322 = vrot.lane.b32.xlu0 %v1297, 96
        %v1323 = vpop.permute.xlu0 %1322
        %1324 = vrot.lane.b32.xlu0 %v1304, 96
        %v1325 = vpop.permute.xlu0 %1324
        %1326 = vrot.lane.b32.xlu0 %v1311, 96
        %v1327 = vpop.permute.xlu0 %1326
        %v1328 = vrot.slane %v928, 3
        %v1329 = vrot.slane %v968, 3
        %v1330 = vsel %vm855, %v1328, %v1329
        %v1331 = vrot.slane %v929, 3
        %v1332 = vrot.slane %v969, 3
        %v1333 = vsel %vm855, %v1331, %v1332
        %v1334 = vrot.slane %v930, 3
        %v1335 = vrot.slane %v970, 3
        %v1336 = vsel %vm855, %v1334, %v1335
        %v1337 = vrot.slane %v931, 3
        %v1338 = vrot.slane %v971, 3
        %v1339 = vsel %vm855, %v1337, %v1338
        %v1340 = vrot.slane %v932, 3
        %v1341 = vrot.slane %v972, 3
        %v1342 = vsel %vm855, %v1340, %v1341
        %v1343 = vrot.slane %v933, 3
        %v1344 = vrot.slane %v973, 3
        %v1345 = vsel %vm855, %v1343, %v1344
        %v1346 = vrot.slane %v934, 3
        %v1347 = vrot.slane %v974, 3
        %v1348 = vsel %vm855, %v1346, %v1347
        %v1349 = vrot.slane %v935, 3
        %v1350 = vrot.slane %v975, 3
        %v1351 = vsel %vm855, %v1349, %v1350
        %1352 = vrot.lane.b32.xlu0 %v1330, 104
        %v1353 = vpop.permute.xlu0 %1352
        %1354 = vrot.lane.b32.xlu0 %v1333, 104
        %v1355 = vpop.permute.xlu0 %1354
        %1356 = vrot.lane.b32.xlu0 %v1336, 104
        %v1357 = vpop.permute.xlu0 %1356
        %1358 = vrot.lane.b32.xlu0 %v1339, 104
        %v1359 = vpop.permute.xlu0 %1358
        %1360 = vrot.lane.b32.xlu0 %v1342, 104
        %v1361 = vpop.permute.xlu0 %1360
        %1362 = vrot.lane.b32.xlu0 %v1345, 104
        %v1363 = vpop.permute.xlu0 %1362
        %1364 = vrot.lane.b32.xlu0 %v1348, 104
        %v1365 = vpop.permute.xlu0 %1364
        %1366 = vrot.lane.b32.xlu0 %v1351, 104
        %v1367 = vpop.permute.xlu0 %1366
        %v1370 = vunpack.c.l.b16 %v419
        %v1371 = vunpack.c.l.b16 %v420
        %v1372 = vpack.c.b16 %v1371, %v1370
        %1373 = vrot.lane.b32.xlu0 %v467, 112
        %v1374 = vpop.permute.xlu0 %1373
        %1375 = vrot.lane.b32.xlu0 %v468, 112
        %v1376 = vpop.permute.xlu0 %1375
        %1377 = vrot.lane.b32.xlu0 %v469, 112
        %v1378 = vpop.permute.xlu0 %1377
        %1379 = vrot.lane.b32.xlu0 %v470, 112
        %v1380 = vpop.permute.xlu0 %1379
        %1381 = vrot.lane.b32.xlu0 %v471, 112
        %v1382 = vpop.permute.xlu0 %1381
        %1383 = vrot.lane.b32.xlu0 %v472, 112
        %v1384 = vpop.permute.xlu0 %1383
        %1385 = vrot.lane.b32.xlu0 %v473, 112
        %v1386 = vpop.permute.xlu0 %1385
        %1387 = vrot.lane.b32.xlu0 %v1372, 112
        %v1388 = vpop.permute.xlu0 %1387
        %v1390 = vunpack.c.l.b16 %v421
        %v1391 = vpack.c.b16 %v1390, %v1390
        %v1393 = vshrl.u32 %v1372, 16
        %v1395 = vshll.u32 %v1372, 16
        %v1397 = vrot.slane %v1395, 1
        %v1398 = vor.u32 %v1393, %v1397
        %v1400 = vshll.u32 %v1391, 16
        %v1402 = vrot.slane %v1400, 1
        %v1403 = vsel %vm498, %v1398, %v1402
        %1404 = vrot.lane.b32.xlu0 %v522, 120
        %v1405 = vpop.permute.xlu0 %1404
        %1406 = vrot.lane.b32.xlu0 %v534, 120
        %v1407 = vpop.permute.xlu0 %1406
        %1408 = vrot.lane.b32.xlu0 %v546, 120
        %v1409 = vpop.permute.xlu0 %1408
        %1410 = vrot.lane.b32.xlu0 %v558, 120
        %v1411 = vpop.permute.xlu0 %1410
        %1412 = vrot.lane.b32.xlu0 %v570, 120
        %v1413 = vpop.permute.xlu0 %1412
        %1414 = vrot.lane.b32.xlu0 %v582, 120
        %v1415 = vpop.permute.xlu0 %1414
        %1416 = vrot.lane.b32.xlu0 %v594, 120
        %v1417 = vpop.permute.xlu0 %1416
        %1418 = vrot.lane.b32.xlu0 %v1403, 120
        %v1419 = vpop.permute.xlu0 %1418
        %vm1420 = vcmask 64512
        %v1422 = vsel %vm1420, %v466, %v596
        %v1424 = vsel %vm1420, %v467, %v598
        %v1426 = vsel %vm1420, %v468, %v600
        %v1428 = vsel %vm1420, %v469, %v602
        %v1430 = vsel %vm1420, %v470, %v604
        %v1432 = vsel %vm1420, %v471, %v606
        %v1434 = vsel %vm1420, %v472, %v608
        %v1436 = vsel %vm1420, %v473, %v610
        %vm1437 = vcmask 130048
        %v1439 = vsel %vm1437, %v1422, %v637
        %v1441 = vsel %vm1437, %v1424, %v639
        %v1443 = vsel %vm1437, %v1426, %v641
        %v1445 = vsel %vm1437, %v1428, %v643
        %v1447 = vsel %vm1437, %v1430, %v645
        %v1449 = vsel %vm1437, %v1432, %v647
        %v1451 = vsel %vm1437, %v1434, %v649
        %v1453 = vsel %vm1437, %v1436, %v651
        %vm1454 = vcmask 195584
        %v1456 = vsel %vm1454, %v1439, %v726
        %v1458 = vsel %vm1454, %v1441, %v728
        %v1460 = vsel %vm1454, %v1443, %v730
        %v1462 = vsel %vm1454, %v1445, %v732
        %v1464 = vsel %vm1454, %v1447, %v734
        %v1466 = vsel %vm1454, %v1449, %v736
        %v1468 = vsel %vm1454, %v1451, %v738
        %v1470 = vsel %vm1454, %v1453, %v740
        %vm1471 = vcmask 261120
        %v1473 = vsel %vm1471, %v1456, %v767
        %v1475 = vsel %vm1471, %v1458, %v769
        %v1477 = vsel %vm1471, %v1460, %v771
        %v1479 = vsel %vm1471, %v1462, %v773
        %v1481 = vsel %vm1471, %v1464, %v775
        %v1483 = vsel %vm1471, %v1466, %v777
        %v1485 = vsel %vm1471, %v1468, %v779
        %v1487 = vsel %vm1471, %v1470, %v781
        %vm1488 = vcmask 326656
        %v1490 = vsel %vm1488, %v1473, %v840
        %v1492 = vsel %vm1488, %v1475, %v842
        %v1494 = vsel %vm1488, %v1477, %v844
        %v1496 = vsel %vm1488, %v1479, %v846
        %v1498 = vsel %vm1488, %v1481, %v848
        %v1500 = vsel %vm1488, %v1483, %v850
        %v1502 = vsel %vm1488, %v1485, %v852
        %v1504 = vsel %vm1488, %v1487, %v854
        %vm1505 = vcmask 392192
        %v1507 = vsel %vm1505, %v1490, %v881
        %v1509 = vsel %vm1505, %v1492, %v883
        %v1511 = vsel %vm1505, %v1494, %v885
        %v1513 = vsel %vm1505, %v1496, %v887
        %v1515 = vsel %vm1505, %v1498, %v889
        %v1517 = vsel %vm1505, %v1500, %v891
        %v1519 = vsel %vm1505, %v1502, %v893
        %v1521 = vsel %vm1505, %v1504, %v895
        %vm1522 = vcmask 457728
        %v1524 = vsel %vm1522, %v1507, %v937
        %v1526 = vsel %vm1522, %v1509, %v939
        %v1528 = vsel %vm1522, %v1511, %v941
        %v1530 = vsel %vm1522, %v1513, %v943
        %v1532 = vsel %vm1522, %v1515, %v945
        %v1534 = vsel %vm1522, %v1517, %v947
        %v1536 = vsel %vm1522, %v1519, %v949
        %v1538 = vsel %vm1522, %v1521, %v951
        %vm1539 = vcmask 523264
        %v1541 = vsel %vm1539, %v1524, %v1073
        %v1543 = vsel %vm1539, %v1526, %v1075
        %v1545 = vsel %vm1539, %v1528, %v1077
        %v1547 = vsel %vm1539, %v1530, %v1079
        %v1549 = vsel %vm1539, %v1532, %v1081
        %v1551 = vsel %vm1539, %v1534, %v1083
        %v1553 = vsel %vm1539, %v1536, %v1085
        %v1555 = vsel %vm1539, %v1538, %v1087
        %vm1556 = vcmask 588800
        %v1558 = vsel %vm1556, %v1541, %v1113
        %v1560 = vsel %vm1556, %v1543, %v1115
        %v1562 = vsel %vm1556, %v1545, %v1117
        %v1564 = vsel %vm1556, %v1547, %v1119
        %v1566 = vsel %vm1556, %v1549, %v1121
        %v1568 = vsel %vm1556, %v1551, %v1123
        %v1570 = vsel %vm1556, %v1553, %v1125
        %v1572 = vsel %vm1556, %v1555, %v1127
        %vm1573 = vcmask 654336
        %v1575 = vsel %vm1573, %v1558, %v1201
        %v1577 = vsel %vm1573, %v1560, %v1203
        %v1579 = vsel %vm1573, %v1562, %v1205
        %v1581 = vsel %vm1573, %v1564, %v1207
        %v1583 = vsel %vm1573, %v1566, %v1209
        %v1585 = vsel %vm1573, %v1568, %v1211
        %v1587 = vsel %vm1573, %v1570, %v1213
        %v1589 = vsel %vm1573, %v1572, %v1215
        %vm1590 = vcmask 719872
        %v1592 = vsel %vm1590, %v1575, %v1241
        %v1594 = vsel %vm1590, %v1577, %v1243
        %v1596 = vsel %vm1590, %v1579, %v1245
        %v1598 = vsel %vm1590, %v1581, %v1247
        %v1600 = vsel %vm1590, %v1583, %v1249
        %v1602 = vsel %vm1590, %v1585, %v1251
        %v1604 = vsel %vm1590, %v1587, %v1253
        %v1606 = vsel %vm1590, %v1589, %v1255
        %vm1607 = vcmask 785408
        %v1609 = vsel %vm1607, %v1592, %v1313
        %v1611 = vsel %vm1607, %v1594, %v1315
        %v1613 = vsel %vm1607, %v1596, %v1317
        %v1615 = vsel %vm1607, %v1598, %v1319
        %v1617 = vsel %vm1607, %v1600, %v1321
        %v1619 = vsel %vm1607, %v1602, %v1323
        %v1621 = vsel %vm1607, %v1604, %v1325
        %v1623 = vsel %vm1607, %v1606, %v1327
        %vm1624 = vcmask 850944
        %v1626 = vsel %vm1624, %v1609, %v1353
        %v1628 = vsel %vm1624, %v1611, %v1355
        %v1630 = vsel %vm1624, %v1613, %v1357
        %v1632 = vsel %vm1624, %v1615, %v1359
        %v1634 = vsel %vm1624, %v1617, %v1361
        %v1636 = vsel %vm1624, %v1619, %v1363
        %v1638 = vsel %vm1624, %v1621, %v1365
        %v1640 = vsel %vm1624, %v1623, %v1367
        %vm1641 = vcmask 916480
        %v1643 = vsel %vm1641, %v1626, %v1374
        %v1645 = vsel %vm1641, %v1628, %v1376
        %v1647 = vsel %vm1641, %v1630, %v1378
        %v1649 = vsel %vm1641, %v1632, %v1380
        %v1651 = vsel %vm1641, %v1634, %v1382
        %v1653 = vsel %vm1641, %v1636, %v1384
        %v1655 = vsel %vm1641, %v1638, %v1386
        %v1657 = vsel %vm1641, %v1640, %v1388
        %vm1658 = vcmask 982016
        %v1660 = vsel %vm1658, %v1643, %v1405
        %v1663 = vsel %vm1658, %v1645, %v1407
        %v1666 = vsel %vm1658, %v1647, %v1409
        %v1669 = vsel %vm1658, %v1649, %v1411
        %v1672 = vsel %vm1658, %v1651, %v1413
        %v1675 = vsel %vm1658, %v1653, %v1415
        %v1678 = vsel %vm1658, %v1655, %v1417
        %v1681 = vsel %vm1658, %v1657, %v1419
        %v1683 = vor.u32 %v665, %v521
        %v1684 = vor.u32 %v674, %v533
        %v1685 = vor.u32 %v683, %v545
        %v1686 = vor.u32 %v692, %v557
        %v1687 = vor.u32 %v701, %v569
        %v1688 = vor.u32 %v710, %v581
        %v1689 = vor.u32 %v719, %v593
        %v1690 = vshrl.u32 %v1391, 16
        %v1692 = vor.u32 %v1690, %v1402
        %1693 = vrot.lane.b32.xlu0 %v1683, 8
        %v1694 = vpop.permute.xlu0 %1693
        %1695 = vrot.lane.b32.xlu0 %v1684, 8
        %v1696 = vpop.permute.xlu0 %1695
        %1697 = vrot.lane.b32.xlu0 %v1685, 8
        %v1698 = vpop.permute.xlu0 %1697
        %1699 = vrot.lane.b32.xlu0 %v1686, 8
        %v1700 = vpop.permute.xlu0 %1699
        %1701 = vrot.lane.b32.xlu0 %v1687, 8
        %v1702 = vpop.permute.xlu0 %1701
        %1703 = vrot.lane.b32.xlu0 %v1688, 8
        %v1704 = vpop.permute.xlu0 %1703
        %1705 = vrot.lane.b32.xlu0 %v1689, 8
        %v1706 = vpop.permute.xlu0 %1705
        %1707 = vrot.lane.b32.xlu0 %v1403, 8
        %v1708 = vpop.permute.xlu0 %1707
        %1709 = vrot.lane.b32.xlu0 %v1692, 8
        %v1710 = vpop.permute.xlu0 %1709
        %v1711 = vrot.slane %v1372, 1
        %v1712 = vrot.slane %v1391, 1
        %v1713 = vsel %vm611, %v1711, %v1712
        %1714 = vrot.lane.b32.xlu0 %v616, 16
        %v1715 = vpop.permute.xlu0 %1714
        %1716 = vrot.lane.b32.xlu0 %v619, 16
        %v1717 = vpop.permute.xlu0 %1716
        %1718 = vrot.lane.b32.xlu0 %v622, 16
        %v1719 = vpop.permute.xlu0 %1718
        %1720 = vrot.lane.b32.xlu0 %v625, 16
        %v1721 = vpop.permute.xlu0 %1720
        %1722 = vrot.lane.b32.xlu0 %v628, 16
        %v1723 = vpop.permute.xlu0 %1722
        %1724 = vrot.lane.b32.xlu0 %v631, 16
        %v1725 = vpop.permute.xlu0 %1724
        %1726 = vrot.lane.b32.xlu0 %v634, 16
        %v1727 = vpop.permute.xlu0 %1726
        %1728 = vrot.lane.b32.xlu0 %v1713, 16
        %v1729 = vpop.permute.xlu0 %1728
        %1730 = vrot.lane.b32.xlu0 %v1712, 16
        %v1731 = vpop.permute.xlu0 %1730
        %v1732 = vrot.slane %v1393, 1
        %v1733 = vrot.slane %v1395, 2
        %v1734 = vor.u32 %v1732, %v1733
        %v1735 = vrot.slane %v1690, 1
        %v1736 = vrot.slane %v1400, 2
        %v1737 = vor.u32 %v1735, %v1736
        %v1738 = vsel %vm652, %v1734, %v1737
        %1739 = vrot.lane.b32.xlu0 %v669, 24
        %v1740 = vpop.permute.xlu0 %1739
        %1741 = vrot.lane.b32.xlu0 %v678, 24
        %v1742 = vpop.permute.xlu0 %1741
        %1743 = vrot.lane.b32.xlu0 %v687, 24
        %v1744 = vpop.permute.xlu0 %1743
        %1745 = vrot.lane.b32.xlu0 %v696, 24
        %v1746 = vpop.permute.xlu0 %1745
        %1747 = vrot.lane.b32.xlu0 %v705, 24
        %v1748 = vpop.permute.xlu0 %1747
        %1749 = vrot.lane.b32.xlu0 %v714, 24
        %v1750 = vpop.permute.xlu0 %1749
        %1751 = vrot.lane.b32.xlu0 %v723, 24
        %v1752 = vpop.permute.xlu0 %1751
        %1753 = vrot.lane.b32.xlu0 %v1738, 24
        %v1754 = vpop.permute.xlu0 %1753
        %1755 = vrot.lane.b32.xlu0 %v1737, 24
        %v1756 = vpop.permute.xlu0 %1755
        %v1757 = vrot.slane %v1372, 2
        %v1758 = vrot.slane %v1391, 2
        %v1759 = vsel %vm741, %v1757, %v1758
        %1760 = vrot.lane.b32.xlu0 %v746, 32
        %v1761 = vpop.permute.xlu0 %1760
        %1762 = vrot.lane.b32.xlu0 %v749, 32
        %v1763 = vpop.permute.xlu0 %1762
        %1764 = vrot.lane.b32.xlu0 %v752, 32
        %v1765 = vpop.permute.xlu0 %1764
        %1766 = vrot.lane.b32.xlu0 %v755, 32
        %v1767 = vpop.permute.xlu0 %1766
        %1768 = vrot.lane.b32.xlu0 %v758, 32
        %v1769 = vpop.permute.xlu0 %1768
        %1770 = vrot.lane.b32.xlu0 %v761, 32
        %v1771 = vpop.permute.xlu0 %1770
        %1772 = vrot.lane.b32.xlu0 %v764, 32
        %v1773 = vpop.permute.xlu0 %1772
        %1774 = vrot.lane.b32.xlu0 %v1759, 32
        %v1775 = vpop.permute.xlu0 %1774
        %1776 = vrot.lane.b32.xlu0 %v1758, 32
        %v1777 = vpop.permute.xlu0 %1776
        %v1780 = vunpack.c.l.b16 %v422
        %v1781 = vunpack.c.l.b16 %v423
        %v1782 = vpack.c.b16 %v1781, %v1780
        %v1783 = vrot.slane %v929, 7
        %v1784 = vrot.slane %v930, 7
        %v1785 = vrot.slane %v931, 7
        %v1786 = vrot.slane %v932, 7
        %v1787 = vrot.slane %v933, 7
        %v1788 = vrot.slane %v934, 7
        %v1789 = vrot.slane %v935, 7
        %v1790 = vrot.slane %v1782, 7
        %1791 = vrot.lane.b32.xlu0 %v1783, 40
        %v1792 = vpop.permute.xlu0 %1791
        %1793 = vrot.lane.b32.xlu0 %v1784, 40
        %v1794 = vpop.permute.xlu0 %1793
        %1795 = vrot.lane.b32.xlu0 %v1785, 40
        %v1796 = vpop.permute.xlu0 %1795
        %1797 = vrot.lane.b32.xlu0 %v1786, 40
        %v1798 = vpop.permute.xlu0 %1797
        %1799 = vrot.lane.b32.xlu0 %v1787, 40
        %v1800 = vpop.permute.xlu0 %1799
        %1801 = vrot.lane.b32.xlu0 %v1788, 40
        %v1802 = vpop.permute.xlu0 %1801
        %1803 = vrot.lane.b32.xlu0 %v1789, 40
        %v1804 = vpop.permute.xlu0 %1803
        %1805 = vrot.lane.b32.xlu0 %v1790, 40
        %v1806 = vpop.permute.xlu0 %1805
        %v1808 = vunpack.c.l.b16 %v424
        %v1809 = vpack.c.b16 %v1808, %v1808
        %vm1810 = vsmask.f32 256
        %v1811 = vrot.slane %v989, 7
        %v1812 = vor.u32 %v1811, %v991
        %v1813 = vsel %vm1810, %v1811, %v996
        %v1814 = vrot.slane %v1001, 7
        %v1815 = vor.u32 %v1814, %v1003
        %v1816 = vsel %vm1810, %v1814, %v1008
        %v1817 = vrot.slane %v1013, 7
        %v1818 = vor.u32 %v1817, %v1015
        %v1819 = vsel %vm1810, %v1817, %v1020
        %v1820 = vrot.slane %v1025, 7
        %v1821 = vor.u32 %v1820, %v1027
        %v1822 = vsel %vm1810, %v1820, %v1032
        %v1823 = vrot.slane %v1037, 7
        %v1824 = vor.u32 %v1823, %v1039
        %v1825 = vsel %vm1810, %v1823, %v1044
        %v1826 = vrot.slane %v1049, 7
        %v1827 = vor.u32 %v1826, %v1051
        %v1828 = vsel %vm1810, %v1826, %v1056
        %v1829 = vrot.slane %v1061, 7
        %v1830 = vor.u32 %v1829, %v1063
        %v1831 = vsel %vm1810, %v1829, %v1068
        %v1833 = vshrl.u32 %v1782, 16
        %v1835 = vrot.slane %v1833, 7
        %v1836 = vshll.u32 %v1782, 16
        %v1838 = vor.u32 %v1835, %v1836
        %v1840 = vshll.u32 %v1809, 16
        %v1842 = vsel %vm1810, %v1835, %v1840
        %1843 = vrot.lane.b32.xlu0 %v1812, 48
        %v1844 = vpop.permute.xlu0 %1843
        %1845 = vrot.lane.b32.xlu0 %v1813, 48
        %v1846 = vpop.permute.xlu0 %1845
        %1847 = vrot.lane.b32.xlu0 %v1815, 48
        %v1848 = vpop.permute.xlu0 %1847
        %1849 = vrot.lane.b32.xlu0 %v1816, 48
        %v1850 = vpop.permute.xlu0 %1849
        %1851 = vrot.lane.b32.xlu0 %v1818, 48
        %v1852 = vpop.permute.xlu0 %1851
        %1853 = vrot.lane.b32.xlu0 %v1819, 48
        %v1854 = vpop.permute.xlu0 %1853
        %1855 = vrot.lane.b32.xlu0 %v1821, 48
        %v1856 = vpop.permute.xlu0 %1855
        %1857 = vrot.lane.b32.xlu0 %v1822, 48
        %v1858 = vpop.permute.xlu0 %1857
        %1859 = vrot.lane.b32.xlu0 %v1824, 48
        %v1860 = vpop.permute.xlu0 %1859
        %1861 = vrot.lane.b32.xlu0 %v1825, 48
        %v1862 = vpop.permute.xlu0 %1861
        %1863 = vrot.lane.b32.xlu0 %v1827, 48
        %v1864 = vpop.permute.xlu0 %1863
        %1865 = vrot.lane.b32.xlu0 %v1828, 48
        %v1866 = vpop.permute.xlu0 %1865
        %1867 = vrot.lane.b32.xlu0 %v1830, 48
        %v1868 = vpop.permute.xlu0 %1867
        %1869 = vrot.lane.b32.xlu0 %v1831, 48
        %v1870 = vpop.permute.xlu0 %1869
        %1871 = vrot.lane.b32.xlu0 %v1838, 48
        %v1872 = vpop.permute.xlu0 %1871
        %1873 = vrot.lane.b32.xlu0 %v1842, 48
        %v1874 = vpop.permute.xlu0 %1873
        %1875 = vrot.lane.b32.xlu0 %v969, 56
        %v1876 = vpop.permute.xlu0 %1875
        %1877 = vrot.lane.b32.xlu0 %v970, 56
        %v1878 = vpop.permute.xlu0 %1877
        %1879 = vrot.lane.b32.xlu0 %v971, 56
        %v1880 = vpop.permute.xlu0 %1879
        %1881 = vrot.lane.b32.xlu0 %v972, 56
        %v1882 = vpop.permute.xlu0 %1881
        %1883 = vrot.lane.b32.xlu0 %v973, 56
        %v1884 = vpop.permute.xlu0 %1883
        %1885 = vrot.lane.b32.xlu0 %v974, 56
        %v1886 = vpop.permute.xlu0 %1885
        %1887 = vrot.lane.b32.xlu0 %v975, 56
        %v1888 = vpop.permute.xlu0 %1887
        %1889 = vrot.lane.b32.xlu0 %v1782, 56
        %v1890 = vpop.permute.xlu0 %1889
        %1891 = vrot.lane.b32.xlu0 %v1809, 56
        %v1892 = vpop.permute.xlu0 %1891
        %v1893 = vor.u32 %v1140, %v998
        %v1894 = vor.u32 %v1149, %v1010
        %v1895 = vor.u32 %v1158, %v1022
        %v1896 = vor.u32 %v1167, %v1034
        %v1897 = vor.u32 %v1176, %v1046
        %v1898 = vor.u32 %v1185, %v1058
        %v1899 = vor.u32 %v1194, %v1070
        %v1900 = vrot.slane %v1836, 1
        %v1901 = vor.u32 %v1833, %v1900
        %v1902 = vrot.slane %v1840, 1
        %v1903 = vsel %vm498, %v1901, %v1902
        %v1904 = vshrl.u32 %v1809, 16
        %v1906 = vor.u32 %v1904, %v1902
        %1907 = vrot.lane.b32.xlu0 %v1893, 64
        %v1908 = vpop.permute.xlu0 %1907
        %1909 = vrot.lane.b32.xlu0 %v1894, 64
        %v1910 = vpop.permute.xlu0 %1909
        %1911 = vrot.lane.b32.xlu0 %v1895, 64
        %v1912 = vpop.permute.xlu0 %1911
        %1913 = vrot.lane.b32.xlu0 %v1896, 64
        %v1914 = vpop.permute.xlu0 %1913
        %1915 = vrot.lane.b32.xlu0 %v1897, 64
        %v1916 = vpop.permute.xlu0 %1915
        %1917 = vrot.lane.b32.xlu0 %v1898, 64
        %v1918 = vpop.permute.xlu0 %1917
        %1919 = vrot.lane.b32.xlu0 %v1899, 64
        %v1920 = vpop.permute.xlu0 %1919
        %1921 = vrot.lane.b32.xlu0 %v1903, 64
        %v1922 = vpop.permute.xlu0 %1921
        %1923 = vrot.lane.b32.xlu0 %v1906, 64
        %v1924 = vpop.permute.xlu0 %1923
        %v1925 = vrot.slane %v1782, 1
        %v1926 = vrot.slane %v1809, 1
        %v1927 = vsel %vm611, %v1925, %v1926
        %1928 = vrot.lane.b32.xlu0 %v1092, 72
        %v1929 = vpop.permute.xlu0 %1928
        %1930 = vrot.lane.b32.xlu0 %v1095, 72
        %v1931 = vpop.permute.xlu0 %1930
        %1932 = vrot.lane.b32.xlu0 %v1098, 72
        %v1933 = vpop.permute.xlu0 %1932
        %1934 = vrot.lane.b32.xlu0 %v1101, 72
        %v1935 = vpop.permute.xlu0 %1934
        %1936 = vrot.lane.b32.xlu0 %v1104, 72
        %v1937 = vpop.permute.xlu0 %1936
        %1938 = vrot.lane.b32.xlu0 %v1107, 72
        %v1939 = vpop.permute.xlu0 %1938
        %1940 = vrot.lane.b32.xlu0 %v1110, 72
        %v1941 = vpop.permute.xlu0 %1940
        %1942 = vrot.lane.b32.xlu0 %v1927, 72
        %v1943 = vpop.permute.xlu0 %1942
        %1944 = vrot.lane.b32.xlu0 %v1926, 72
        %v1945 = vpop.permute.xlu0 %1944
        %v1946 = vrot.slane %v1833, 1
        %v1947 = vrot.slane %v1836, 2
        %v1948 = vor.u32 %v1946, %v1947
        %v1949 = vrot.slane %v1904, 1
        %v1950 = vrot.slane %v1840, 2
        %v1951 = vor.u32 %v1949, %v1950
        %v1952 = vsel %vm652, %v1948, %v1951
        %1953 = vrot.lane.b32.xlu0 %v1144, 80
        %v1954 = vpop.permute.xlu0 %1953
        %1955 = vrot.lane.b32.xlu0 %v1153, 80
        %v1956 = vpop.permute.xlu0 %1955
        %1957 = vrot.lane.b32.xlu0 %v1162, 80
        %v1958 = vpop.permute.xlu0 %1957
        %1959 = vrot.lane.b32.xlu0 %v1171, 80
        %v1960 = vpop.permute.xlu0 %1959
        %1961 = vrot.lane.b32.xlu0 %v1180, 80
        %v1962 = vpop.permute.xlu0 %1961
        %1963 = vrot.lane.b32.xlu0 %v1189, 80
        %v1964 = vpop.permute.xlu0 %1963
        %1965 = vrot.lane.b32.xlu0 %v1198, 80
        %v1966 = vpop.permute.xlu0 %1965
        %1967 = vrot.lane.b32.xlu0 %v1952, 80
        %v1968 = vpop.permute.xlu0 %1967
        %1969 = vrot.lane.b32.xlu0 %v1951, 80
        %v1970 = vpop.permute.xlu0 %1969
        %v1971 = vrot.slane %v1782, 2
        %v1972 = vrot.slane %v1809, 2
        %v1973 = vsel %vm741, %v1971, %v1972
        %1974 = vrot.lane.b32.xlu0 %v1220, 88
        %v1975 = vpop.permute.xlu0 %1974
        %1976 = vrot.lane.b32.xlu0 %v1223, 88
        %v1977 = vpop.permute.xlu0 %1976
        %1978 = vrot.lane.b32.xlu0 %v1226, 88
        %v1979 = vpop.permute.xlu0 %1978
        %1980 = vrot.lane.b32.xlu0 %v1229, 88
        %v1981 = vpop.permute.xlu0 %1980
        %1982 = vrot.lane.b32.xlu0 %v1232, 88
        %v1983 = vpop.permute.xlu0 %1982
        %1984 = vrot.lane.b32.xlu0 %v1235, 88
        %v1985 = vpop.permute.xlu0 %1984
        %1986 = vrot.lane.b32.xlu0 %v1238, 88
        %v1987 = vpop.permute.xlu0 %1986
        %1988 = vrot.lane.b32.xlu0 %v1973, 88
        %v1989 = vpop.permute.xlu0 %1988
        %1990 = vrot.lane.b32.xlu0 %v1972, 88
        %v1991 = vpop.permute.xlu0 %1990
        %v1994 = vunpack.c.l.b16 %v425
        %v1995 = vunpack.c.l.b16 %v426
        %v1996 = vpack.c.b16 %v1995, %v1994
        %v1997 = vrot.slane %v468, 7
        %v1998 = vrot.slane %v469, 7
        %v1999 = vrot.slane %v470, 7
        %v2000 = vrot.slane %v471, 7
        %v2001 = vrot.slane %v472, 7
        %v2002 = vrot.slane %v473, 7
        %v2003 = vrot.slane %v1372, 7
        %v2004 = vrot.slane %v1996, 7
        %2005 = vrot.lane.b32.xlu0 %v1997, 96
        %v2006 = vpop.permute.xlu0 %2005
        %2007 = vrot.lane.b32.xlu0 %v1998, 96
        %v2008 = vpop.permute.xlu0 %2007
        %2009 = vrot.lane.b32.xlu0 %v1999, 96
        %v2010 = vpop.permute.xlu0 %2009
        %2011 = vrot.lane.b32.xlu0 %v2000, 96
        %v2012 = vpop.permute.xlu0 %2011
        %2013 = vrot.lane.b32.xlu0 %v2001, 96
        %v2014 = vpop.permute.xlu0 %2013
        %2015 = vrot.lane.b32.xlu0 %v2002, 96
        %v2016 = vpop.permute.xlu0 %2015
        %2017 = vrot.lane.b32.xlu0 %v2003, 96
        %v2018 = vpop.permute.xlu0 %2017
        %2019 = vrot.lane.b32.xlu0 %v2004, 96
        %v2020 = vpop.permute.xlu0 %2019
        %v2022 = vunpack.c.l.b16 %v427
        %v2023 = vpack.c.b16 %v2022, %v2022
        %v2024 = vrot.slane %v524, 7
        %v2025 = vor.u32 %v2024, %v526
        %v2026 = vsel %vm1810, %v2024, %v531
        %v2027 = vrot.slane %v536, 7
        %v2028 = vor.u32 %v2027, %v538
        %v2029 = vsel %vm1810, %v2027, %v543
        %v2030 = vrot.slane %v548, 7
        %v2031 = vor.u32 %v2030, %v550
        %v2032 = vsel %vm1810, %v2030, %v555
        %v2033 = vrot.slane %v560, 7
        %v2034 = vor.u32 %v2033, %v562
        %v2035 = vsel %vm1810, %v2033, %v567
        %v2036 = vrot.slane %v572, 7
        %v2037 = vor.u32 %v2036, %v574
        %v2038 = vsel %vm1810, %v2036, %v579
        %v2039 = vrot.slane %v584, 7
        %v2040 = vor.u32 %v2039, %v586
        %v2041 = vsel %vm1810, %v2039, %v591
        %v2042 = vrot.slane %v1393, 7
        %v2043 = vor.u32 %v2042, %v1395
        %v2044 = vsel %vm1810, %v2042, %v1400
        %v2046 = vshrl.u32 %v1996, 16
        %v2048 = vrot.slane %v2046, 7
        %v2049 = vshll.u32 %v1996, 16
        %v2051 = vor.u32 %v2048, %v2049
        %v2053 = vshll.u32 %v2023, 16
        %v2055 = vsel %vm1810, %v2048, %v2053
        %2056 = vrot.lane.b32.xlu0 %v2025, 104
        %v2057 = vpop.permute.xlu0 %2056
        %2058 = vrot.lane.b32.xlu0 %v2026, 104
        %v2059 = vpop.permute.xlu0 %2058
        %2060 = vrot.lane.b32.xlu0 %v2028, 104
        %v2061 = vpop.permute.xlu0 %2060
        %2062 = vrot.lane.b32.xlu0 %v2029, 104
        %v2063 = vpop.permute.xlu0 %2062
        %2064 = vrot.lane.b32.xlu0 %v2031, 104
        %v2065 = vpop.permute.xlu0 %2064
        %2066 = vrot.lane.b32.xlu0 %v2032, 104
        %v2067 = vpop.permute.xlu0 %2066
        %2068 = vrot.lane.b32.xlu0 %v2034, 104
        %v2069 = vpop.permute.xlu0 %2068
        %2070 = vrot.lane.b32.xlu0 %v2035, 104
        %v2071 = vpop.permute.xlu0 %2070
        %2072 = vrot.lane.b32.xlu0 %v2037, 104
        %v2073 = vpop.permute.xlu0 %2072
        %2074 = vrot.lane.b32.xlu0 %v2038, 104
        %v2075 = vpop.permute.xlu0 %2074
        %2076 = vrot.lane.b32.xlu0 %v2040, 104
        %v2077 = vpop.permute.xlu0 %2076
        %2078 = vrot.lane.b32.xlu0 %v2041, 104
        %v2079 = vpop.permute.xlu0 %2078
        %2080 = vrot.lane.b32.xlu0 %v2043, 104
        %v2081 = vpop.permute.xlu0 %2080
        %2082 = vrot.lane.b32.xlu0 %v2044, 104
        %v2083 = vpop.permute.xlu0 %2082
        %2084 = vrot.lane.b32.xlu0 %v2051, 104
        %v2085 = vpop.permute.xlu0 %2084
        %2086 = vrot.lane.b32.xlu0 %v2055, 104
        %v2087 = vpop.permute.xlu0 %2086
        %2088 = vrot.lane.b32.xlu0 %v492, 112
        %v2089 = vpop.permute.xlu0 %2088
        %2090 = vrot.lane.b32.xlu0 %v493, 112
        %v2091 = vpop.permute.xlu0 %2090
        %2092 = vrot.lane.b32.xlu0 %v494, 112
        %v2093 = vpop.permute.xlu0 %2092
        %2094 = vrot.lane.b32.xlu0 %v495, 112
        %v2095 = vpop.permute.xlu0 %2094
        %2096 = vrot.lane.b32.xlu0 %v496, 112
        %v2097 = vpop.permute.xlu0 %2096
        %2098 = vrot.lane.b32.xlu0 %v497, 112
        %v2099 = vpop.permute.xlu0 %2098
        %2100 = vrot.lane.b32.xlu0 %v1391, 112
        %v2101 = vpop.permute.xlu0 %2100
        %2102 = vrot.lane.b32.xlu0 %v1996, 112
        %v2103 = vpop.permute.xlu0 %2102
        %2104 = vrot.lane.b32.xlu0 %v2023, 112
        %v2105 = vpop.permute.xlu0 %2104
        %v2106 = vrot.slane %v2049, 1
        %v2107 = vor.u32 %v2046, %v2106
        %v2108 = vrot.slane %v2053, 1
        %v2109 = vsel %vm498, %v2107, %v2108
        %v2110 = vshrl.u32 %v2023, 16
        %v2112 = vor.u32 %v2110, %v2108
        %2113 = vrot.lane.b32.xlu0 %v1684, 120
        %v2114 = vpop.permute.xlu0 %2113
        %2115 = vrot.lane.b32.xlu0 %v1685, 120
        %v2116 = vpop.permute.xlu0 %2115
        %2117 = vrot.lane.b32.xlu0 %v1686, 120
        %v2118 = vpop.permute.xlu0 %2117
        %2119 = vrot.lane.b32.xlu0 %v1687, 120
        %v2120 = vpop.permute.xlu0 %2119
        %2121 = vrot.lane.b32.xlu0 %v1688, 120
        %v2122 = vpop.permute.xlu0 %2121
        %2123 = vrot.lane.b32.xlu0 %v1689, 120
        %v2124 = vpop.permute.xlu0 %2123
        %2125 = vrot.lane.b32.xlu0 %v1692, 120
        %v2126 = vpop.permute.xlu0 %2125
        %2127 = vrot.lane.b32.xlu0 %v2109, 120
        %v2128 = vpop.permute.xlu0 %2127
        %2129 = vrot.lane.b32.xlu0 %v2112, 120
        %v2130 = vpop.permute.xlu0 %2129
        %v2132 = vsel %vm1420, %v491, %v1694
        %v2134 = vsel %vm1420, %v492, %v1696
        %v2136 = vsel %vm1420, %v493, %v1698
        %v2138 = vsel %vm1420, %v494, %v1700
        %v2140 = vsel %vm1420, %v495, %v1702
        %v2142 = vsel %vm1420, %v496, %v1704
        %v2144 = vsel %vm1420, %v497, %v1706
        %v2146 = vsel %vm1420, %v1372, %v1708
        %v2148 = vsel %vm1420, %v1391, %v1710
        %v2150 = vsel %vm1437, %v2132, %v1715
        %v2152 = vsel %vm1437, %v2134, %v1717
        %v2154 = vsel %vm1437, %v2136, %v1719
        %v2156 = vsel %vm1437, %v2138, %v1721
        %v2158 = vsel %vm1437, %v2140, %v1723
        %v2160 = vsel %vm1437, %v2142, %v1725
        %v2162 = vsel %vm1437, %v2144, %v1727
        %v2164 = vsel %vm1437, %v2146, %v1729
        %v2166 = vsel %vm1437, %v2148, %v1731
        %v2168 = vsel %vm1454, %v2150, %v1740
        %v2170 = vsel %vm1454, %v2152, %v1742
        %v2172 = vsel %vm1454, %v2154, %v1744
        %v2174 = vsel %vm1454, %v2156, %v1746
        %v2176 = vsel %vm1454, %v2158, %v1748
        %v2178 = vsel %vm1454, %v2160, %v1750
        %v2180 = vsel %vm1454, %v2162, %v1752
        %v2182 = vsel %vm1454, %v2164, %v1754
        %v2184 = vsel %vm1454, %v2166, %v1756
        %v2186 = vsel %vm1471, %v2168, %v1761
        %v2188 = vsel %vm1471, %v2170, %v1763
        %v2190 = vsel %vm1471, %v2172, %v1765
        %v2192 = vsel %vm1471, %v2174, %v1767
        %v2194 = vsel %vm1471, %v2176, %v1769
        %v2196 = vsel %vm1471, %v2178, %v1771
        %v2198 = vsel %vm1471, %v2180, %v1773
        %v2200 = vsel %vm1471, %v2182, %v1775
        %v2202 = vsel %vm1471, %v2184, %v1777
        %v2204 = vsel %vm1488, %v1475, %v1792
        %v2205 = vsel %vm1488, %v2186, %v1792
        %v2207 = vsel %vm1488, %v1477, %v1794
        %v2208 = vsel %vm1488, %v2188, %v1794
        %v2210 = vsel %vm1488, %v1479, %v1796
        %v2211 = vsel %vm1488, %v2190, %v1796
        %v2213 = vsel %vm1488, %v1481, %v1798
        %v2214 = vsel %vm1488, %v2192, %v1798
        %v2216 = vsel %vm1488, %v1483, %v1800
        %v2217 = vsel %vm1488, %v2194, %v1800
        %v2219 = vsel %vm1488, %v1485, %v1802
        %v2220 = vsel %vm1488, %v2196, %v1802
        %v2222 = vsel %vm1488, %v1487, %v1804
        %v2223 = vsel %vm1488, %v2198, %v1804
        %v2225 = vsel %vm1488, %v2200, %v1806
        %v2226 = vsel %vm1488, %v2202, %v1806
        %v2228 = vsel %vm1505, %v2204, %v1844
        %v2230 = vsel %vm1505, %v2205, %v1846
        %v2232 = vsel %vm1505, %v2207, %v1848
        %v2234 = vsel %vm1505, %v2208, %v1850
        %v2236 = vsel %vm1505, %v2210, %v1852
        %v2238 = vsel %vm1505, %v2211, %v1854
        %v2240 = vsel %vm1505, %v2213, %v1856
        %v2242 = vsel %vm1505, %v2214, %v1858
        %v2244 = vsel %vm1505, %v2216, %v1860
        %v2246 = vsel %vm1505, %v2217, %v1862
        %v2248 = vsel %vm1505, %v2219, %v1864
        %v2250 = vsel %vm1505, %v2220, %v1866
        %v2252 = vsel %vm1505, %v2222, %v1868
        %v2254 = vsel %vm1505, %v2223, %v1870
        %v2256 = vsel %vm1505, %v2225, %v1872
        %v2258 = vsel %vm1505, %v2226, %v1874
        %v2259 = vsel %vm1522, %v2228, %v939
        %v2261 = vsel %vm1522, %v2230, %v1876
        %v2262 = vsel %vm1522, %v2232, %v941
        %v2264 = vsel %vm1522, %v2234, %v1878
        %v2265 = vsel %vm1522, %v2236, %v943
        %v2267 = vsel %vm1522, %v2238, %v1880
        %v2268 = vsel %vm1522, %v2240, %v945
        %v2270 = vsel %vm1522, %v2242, %v1882
        %v2271 = vsel %vm1522, %v2244, %v947
        %v2273 = vsel %vm1522, %v2246, %v1884
        %v2274 = vsel %vm1522, %v2248, %v949
        %v2276 = vsel %vm1522, %v2250, %v1886
        %v2277 = vsel %vm1522, %v2252, %v951
        %v2279 = vsel %vm1522, %v2254, %v1888
        %v2281 = vsel %vm1522, %v2256, %v1890
        %v2283 = vsel %vm1522, %v2258, %v1892
        %v2284 = vsel %vm1539, %v2259, %v1075
        %v2286 = vsel %vm1539, %v2261, %v1908
        %v2287 = vsel %vm1539, %v2262, %v1077
        %v2289 = vsel %vm1539, %v2264, %v1910
        %v2290 = vsel %vm1539, %v2265, %v1079
        %v2292 = vsel %vm1539, %v2267, %v1912
        %v2293 = vsel %vm1539, %v2268, %v1081
        %v2295 = vsel %vm1539, %v2270, %v1914
        %v2296 = vsel %vm1539, %v2271, %v1083
        %v2298 = vsel %vm1539, %v2273, %v1916
        %v2299 = vsel %vm1539, %v2274, %v1085
        %v2301 = vsel %vm1539, %v2276, %v1918
        %v2302 = vsel %vm1539, %v2277, %v1087
        %v2304 = vsel %vm1539, %v2279, %v1920
        %v2306 = vsel %vm1539, %v2281, %v1922
        %v2308 = vsel %vm1539, %v2283, %v1924
        %v2309 = vsel %vm1556, %v2284, %v1115
        %v2311 = vsel %vm1556, %v2286, %v1929
        %v2312 = vsel %vm1556, %v2287, %v1117
        %v2314 = vsel %vm1556, %v2289, %v1931
        %v2315 = vsel %vm1556, %v2290, %v1119
        %v2317 = vsel %vm1556, %v2292, %v1933
        %v2318 = vsel %vm1556, %v2293, %v1121
        %v2320 = vsel %vm1556, %v2295, %v1935
        %v2321 = vsel %vm1556, %v2296, %v1123
        %v2323 = vsel %vm1556, %v2298, %v1937
        %v2324 = vsel %vm1556, %v2299, %v1125
        %v2326 = vsel %vm1556, %v2301, %v1939
        %v2327 = vsel %vm1556, %v2302, %v1127
        %v2329 = vsel %vm1556, %v2304, %v1941
        %v2331 = vsel %vm1556, %v2306, %v1943
        %v2333 = vsel %vm1556, %v2308, %v1945
        %v2334 = vsel %vm1573, %v2309, %v1203
        %v2336 = vsel %vm1573, %v2311, %v1954
        %v2337 = vsel %vm1573, %v2312, %v1205
        %v2339 = vsel %vm1573, %v2314, %v1956
        %v2340 = vsel %vm1573, %v2315, %v1207
        %v2342 = vsel %vm1573, %v2317, %v1958
        %v2343 = vsel %vm1573, %v2318, %v1209
        %v2345 = vsel %vm1573, %v2320, %v1960
        %v2346 = vsel %vm1573, %v2321, %v1211
        %v2348 = vsel %vm1573, %v2323, %v1962
        %v2349 = vsel %vm1573, %v2324, %v1213
        %v2351 = vsel %vm1573, %v2326, %v1964
        %v2352 = vsel %vm1573, %v2327, %v1215
        %v2354 = vsel %vm1573, %v2329, %v1966
        %v2356 = vsel %vm1573, %v2331, %v1968
        %v2358 = vsel %vm1573, %v2333, %v1970
        %v2359 = vsel %vm1590, %v2334, %v1243
        %v2361 = vsel %vm1590, %v2336, %v1975
        %v2362 = vsel %vm1590, %v2337, %v1245
        %v2364 = vsel %vm1590, %v2339, %v1977
        %v2365 = vsel %vm1590, %v2340, %v1247
        %v2367 = vsel %vm1590, %v2342, %v1979
        %v2368 = vsel %vm1590, %v2343, %v1249
        %v2370 = vsel %vm1590, %v2345, %v1981
        %v2371 = vsel %vm1590, %v2346, %v1251
        %v2373 = vsel %vm1590, %v2348, %v1983
        %v2374 = vsel %vm1590, %v2349, %v1253
        %v2376 = vsel %vm1590, %v2351, %v1985
        %v2377 = vsel %vm1590, %v2352, %v1255
        %v2379 = vsel %vm1590, %v2354, %v1987
        %v2381 = vsel %vm1590, %v2356, %v1989
        %v2383 = vsel %vm1590, %v2358, %v1991
        %v2385 = vsel %vm1607, %v2359, %v2006
        %v2386 = vsel %vm1607, %v2361, %v2006
        %v2388 = vsel %vm1607, %v2362, %v2008
        %v2389 = vsel %vm1607, %v2364, %v2008
        %v2391 = vsel %vm1607, %v2365, %v2010
        %v2392 = vsel %vm1607, %v2367, %v2010
        %v2394 = vsel %vm1607, %v2368, %v2012
        %v2395 = vsel %vm1607, %v2370, %v2012
        %v2397 = vsel %vm1607, %v2371, %v2014
        %v2398 = vsel %vm1607, %v2373, %v2014
        %v2400 = vsel %vm1607, %v2374, %v2016
        %v2401 = vsel %vm1607, %v2376, %v2016
        %v2403 = vsel %vm1607, %v2377, %v2018
        %v2404 = vsel %vm1607, %v2379, %v2018
        %v2406 = vsel %vm1607, %v2381, %v2020
        %v2407 = vsel %vm1607, %v2383, %v2020
        %v2409 = vsel %vm1624, %v2385, %v2057
        %v2411 = vsel %vm1624, %v2386, %v2059
        %v2413 = vsel %vm1624, %v2388, %v2061
        %v2415 = vsel %vm1624, %v2389, %v2063
        %v2417 = vsel %vm1624, %v2391, %v2065
        %v2419 = vsel %vm1624, %v2392, %v2067
        %v2421 = vsel %vm1624, %v2394, %v2069
        %v2423 = vsel %vm1624, %v2395, %v2071
        %v2425 = vsel %vm1624, %v2397, %v2073
        %v2427 = vsel %vm1624, %v2398, %v2075
        %v2429 = vsel %vm1624, %v2400, %v2077
        %v2431 = vsel %vm1624, %v2401, %v2079
        %v2433 = vsel %vm1624, %v2403, %v2081
        %v2435 = vsel %vm1624, %v2404, %v2083
        %v2437 = vsel %vm1624, %v2406, %v2085
        %v2439 = vsel %vm1624, %v2407, %v2087
        %v2440 = vsel %vm1641, %v2409, %v1376
        %v2442 = vsel %vm1641, %v2411, %v2089
        %v2443 = vsel %vm1641, %v2413, %v1378
        %v2445 = vsel %vm1641, %v2415, %v2091
        %v2446 = vsel %vm1641, %v2417, %v1380
        %v2448 = vsel %vm1641, %v2419, %v2093
        %v2449 = vsel %vm1641, %v2421, %v1382
        %v2451 = vsel %vm1641, %v2423, %v2095
        %v2452 = vsel %vm1641, %v2425, %v1384
        %v2454 = vsel %vm1641, %v2427, %v2097
        %v2455 = vsel %vm1641, %v2429, %v1386
        %v2457 = vsel %vm1641, %v2431, %v2099
        %v2458 = vsel %vm1641, %v2433, %v1388
        %v2460 = vsel %vm1641, %v2435, %v2101
        %v2462 = vsel %vm1641, %v2437, %v2103
        %v2464 = vsel %vm1641, %v2439, %v2105
        %v2465 = vsel %vm1658, %v2440, %v1407
        %v2467 = vsel %vm1658, %v2442, %v2114
        %v2468 = vsel %vm1658, %v2443, %v1409
        %v2470 = vsel %vm1658, %v2445, %v2116
        %v2471 = vsel %vm1658, %v2446, %v1411
        %v2473 = vsel %vm1658, %v2448, %v2118
        %v2474 = vsel %vm1658, %v2449, %v1413
        %v2476 = vsel %vm1658, %v2451, %v2120
        %v2477 = vsel %vm1658, %v2452, %v1415
        %v2479 = vsel %vm1658, %v2454, %v2122
        %v2480 = vsel %vm1658, %v2455, %v1417
        %v2482 = vsel %vm1658, %v2457, %v2124
        %v2483 = vsel %vm1658, %v2458, %v1419
        %v2485 = vsel %vm1658, %v2460, %v2126
        %v2487 = vsel %vm1658, %v2462, %v2128
        %v2489 = vsel %vm1658, %v2464, %v2130
        %2490 = vrot.lane.b32.xlu0 %v2109, 8
        %v2491 = vpop.permute.xlu0 %2490
        %2492 = vrot.lane.b32.xlu0 %v2112, 8
        %v2493 = vpop.permute.xlu0 %2492
        %v2494 = vrot.slane %v1996, 1
        %v2495 = vrot.slane %v2023, 1
        %v2496 = vsel %vm611, %v2494, %v2495
        %2497 = vrot.lane.b32.xlu0 %v2496, 16
        %v2498 = vpop.permute.xlu0 %2497
        %2499 = vrot.lane.b32.xlu0 %v2495, 16
        %v2500 = vpop.permute.xlu0 %2499
        %v2503 = vunpack.c.l.b16 %v428
        %v2504 = vunpack.c.l.b16 %v429
        %v2505 = vpack.c.b16 %v2504, %v2503
        %v2506 = vrot.slane %v930, 6
        %v2507 = vrot.slane %v931, 6
        %v2508 = vrot.slane %v932, 6
        %v2509 = vrot.slane %v933, 6
        %v2510 = vrot.slane %v934, 6
        %v2511 = vrot.slane %v935, 6
        %v2512 = vrot.slane %v1782, 6
        %v2513 = vrot.slane %v2505, 6
        %2514 = vrot.lane.b32.xlu0 %v2506, 24
        %v2515 = vpop.permute.xlu0 %2514
        %2516 = vrot.lane.b32.xlu0 %v2507, 24
        %v2517 = vpop.permute.xlu0 %2516
        %2518 = vrot.lane.b32.xlu0 %v2508, 24
        %v2519 = vpop.permute.xlu0 %2518
        %2520 = vrot.lane.b32.xlu0 %v2509, 24
        %v2521 = vpop.permute.xlu0 %2520
        %2522 = vrot.lane.b32.xlu0 %v2510, 24
        %v2523 = vpop.permute.xlu0 %2522
        %2524 = vrot.lane.b32.xlu0 %v2511, 24
        %v2525 = vpop.permute.xlu0 %2524
        %2526 = vrot.lane.b32.xlu0 %v2512, 24
        %v2527 = vpop.permute.xlu0 %2526
        %2528 = vrot.lane.b32.xlu0 %v2513, 24
        %v2529 = vpop.permute.xlu0 %2528
        %v2531 = vunpack.c.l.b16 %v430
        %v2532 = vpack.c.b16 %v2531, %v2531
        %vm2533 = vsmask.f32 1280
        %v2534 = vrot.slane %v1001, 6
        %v2535 = vrot.slane %v1003, 7
        %v2536 = vor.u32 %v2534, %v2535
        %v2537 = vrot.slane %v1008, 7
        %v2538 = vsel %vm2533, %v2536, %v2537
        %v2539 = vrot.slane %v1013, 6
        %v2540 = vrot.slane %v1015, 7
        %v2541 = vor.u32 %v2539, %v2540
        %v2542 = vrot.slane %v1020, 7
        %v2543 = vsel %vm2533, %v2541, %v2542
        %v2544 = vrot.slane %v1025, 6
        %v2545 = vrot.slane %v1027, 7
        %v2546 = vor.u32 %v2544, %v2545
        %v2547 = vrot.slane %v1032, 7
        %v2548 = vsel %vm2533, %v2546, %v2547
        %v2549 = vrot.slane %v1037, 6
        %v2550 = vrot.slane %v1039, 7
        %v2551 = vor.u32 %v2549, %v2550
        %v2552 = vrot.slane %v1044, 7
        %v2553 = vsel %vm2533, %v2551, %v2552
        %v2554 = vrot.slane %v1049, 6
        %v2555 = vrot.slane %v1051, 7
        %v2556 = vor.u32 %v2554, %v2555
        %v2557 = vrot.slane %v1056, 7
        %v2558 = vsel %vm2533, %v2556, %v2557
        %v2559 = vrot.slane %v1061, 6
        %v2560 = vrot.slane %v1063, 7
        %v2561 = vor.u32 %v2559, %v2560
        %v2562 = vrot.slane %v1068, 7
        %v2563 = vsel %vm2533, %v2561, %v2562
        %v2564 = vrot.slane %v1833, 6
        %v2565 = vrot.slane %v1836, 7
        %v2566 = vor.u32 %v2564, %v2565
        %v2567 = vrot.slane %v1840, 7
        %v2568 = vsel %vm2533, %v2566, %v2567
        %v2570 = vshrl.u32 %v2505, 16
        %v2572 = vrot.slane %v2570, 6
        %v2573 = vshll.u32 %v2505, 16
        %v2575 = vrot.slane %v2573, 7
        %v2576 = vor.u32 %v2572, %v2575
        %v2578 = vshll.u32 %v2532, 16
        %v2580 = vrot.slane %v2578, 7
        %v2581 = vsel %vm2533, %v2576, %v2580
        %2582 = vrot.lane.b32.xlu0 %v2536, 32
        %v2583 = vpop.permute.xlu0 %2582
        %2584 = vrot.lane.b32.xlu0 %v2538, 32
        %v2585 = vpop.permute.xlu0 %2584
        %2586 = vrot.lane.b32.xlu0 %v2541, 32
        %v2587 = vpop.permute.xlu0 %2586
        %2588 = vrot.lane.b32.xlu0 %v2543, 32
        %v2589 = vpop.permute.xlu0 %2588
        %2590 = vrot.lane.b32.xlu0 %v2546, 32
        %v2591 = vpop.permute.xlu0 %2590
        %2592 = vrot.lane.b32.xlu0 %v2548, 32
        %v2593 = vpop.permute.xlu0 %2592
        %2594 = vrot.lane.b32.xlu0 %v2551, 32
        %v2595 = vpop.permute.xlu0 %2594
        %2596 = vrot.lane.b32.xlu0 %v2553, 32
        %v2597 = vpop.permute.xlu0 %2596
        %2598 = vrot.lane.b32.xlu0 %v2556, 32
        %v2599 = vpop.permute.xlu0 %2598
        %2600 = vrot.lane.b32.xlu0 %v2558, 32
        %v2601 = vpop.permute.xlu0 %2600
        %2602 = vrot.lane.b32.xlu0 %v2561, 32
        %v2603 = vpop.permute.xlu0 %2602
        %2604 = vrot.lane.b32.xlu0 %v2563, 32
        %v2605 = vpop.permute.xlu0 %2604
        %2606 = vrot.lane.b32.xlu0 %v2566, 32
        %v2607 = vpop.permute.xlu0 %2606
        %2608 = vrot.lane.b32.xlu0 %v2568, 32
        %v2609 = vpop.permute.xlu0 %2608
        %2610 = vrot.lane.b32.xlu0 %v2576, 32
        %v2611 = vpop.permute.xlu0 %2610
        %2612 = vrot.lane.b32.xlu0 %v2581, 32
        %v2613 = vpop.permute.xlu0 %2612
        %vm2614 = vcmask 1040384
        %v2615 = vrot.slane %v970, 7
        %v2616 = vsel %vm2614, %v1784, %v2615
        %v2617 = vrot.slane %v971, 7
        %v2618 = vsel %vm2614, %v1785, %v2617
        %v2619 = vrot.slane %v972, 7
        %v2620 = vsel %vm2614, %v1786, %v2619
        %v2621 = vrot.slane %v973, 7
        %v2622 = vsel %vm2614, %v1787, %v2621
        %v2623 = vrot.slane %v974, 7
        %v2624 = vsel %vm2614, %v1788, %v2623
        %v2625 = vrot.slane %v975, 7
        %v2626 = vsel %vm2614, %v1789, %v2625
        %v2627 = vrot.slane %v1809, 7
        %v2628 = vsel %vm2614, %v1790, %v2627
        %v2629 = vrot.slane %v2505, 7
        %v2630 = vrot.slane %v2532, 7
        %v2631 = vsel %vm2614, %v2629, %v2630
        %2632 = vrot.lane.b32.xlu0 %v2616, 40
        %v2633 = vpop.permute.xlu0 %2632
        %2634 = vrot.lane.b32.xlu0 %v2618, 40
        %v2635 = vpop.permute.xlu0 %2634
        %2636 = vrot.lane.b32.xlu0 %v2620, 40
        %v2637 = vpop.permute.xlu0 %2636
        %2638 = vrot.lane.b32.xlu0 %v2622, 40
        %v2639 = vpop.permute.xlu0 %2638
        %2640 = vrot.lane.b32.xlu0 %v2624, 40
        %v2641 = vpop.permute.xlu0 %2640
        %2642 = vrot.lane.b32.xlu0 %v2626, 40
        %v2643 = vpop.permute.xlu0 %2642
        %2644 = vrot.lane.b32.xlu0 %v2628, 40
        %v2645 = vpop.permute.xlu0 %2644
        %2646 = vrot.lane.b32.xlu0 %v2629, 40
        %v2647 = vpop.permute.xlu0 %2646
        %2648 = vrot.lane.b32.xlu0 %v2631, 40
        %v2649 = vpop.permute.xlu0 %2648
        %v2650 = vrot.slane %v1149, 7
        %v2651 = vor.u32 %v2650, %v1008
        %v2652 = vsel %vm1810, %v1814, %v2651
        %v2653 = vrot.slane %v1158, 7
        %v2654 = vor.u32 %v2653, %v1020
        %v2655 = vsel %vm1810, %v1817, %v2654
        %v2656 = vrot.slane %v1167, 7
        %v2657 = vor.u32 %v2656, %v1032
        %v2658 = vsel %vm1810, %v1820, %v2657
        %v2659 = vrot.slane %v1176, 7
        %v2660 = vor.u32 %v2659, %v1044
        %v2661 = vsel %vm1810, %v1823, %v2660
        %v2662 = vrot.slane %v1185, 7
        %v2663 = vor.u32 %v2662, %v1056
        %v2664 = vsel %vm1810, %v1826, %v2663
        %v2665 = vrot.slane %v1194, 7
        %v2666 = vor.u32 %v2665, %v1068
        %v2667 = vsel %vm1810, %v1829, %v2666
        %v2668 = vrot.slane %v1904, 7
        %v2669 = vor.u32 %v2668, %v1840
        %v2670 = vsel %vm1810, %v1835, %v2669
        %v2671 = vrot.slane %v2570, 7
        %v2672 = vor.u32 %v2671, %v2573
        %v2673 = vshrl.u32 %v2532, 16
        %v2675 = vrot.slane %v2673, 7
        %v2676 = vor.u32 %v2675, %v2578
        %v2677 = vsel %vm1810, %v2671, %v2676
        %2678 = vrot.lane.b32.xlu0 %v2652, 48
        %v2679 = vpop.permute.xlu0 %2678
        %2680 = vrot.lane.b32.xlu0 %v2655, 48
        %v2681 = vpop.permute.xlu0 %2680
        %2682 = vrot.lane.b32.xlu0 %v2658, 48
        %v2683 = vpop.permute.xlu0 %2682
        %2684 = vrot.lane.b32.xlu0 %v2661, 48
        %v2685 = vpop.permute.xlu0 %2684
        %2686 = vrot.lane.b32.xlu0 %v2664, 48
        %v2687 = vpop.permute.xlu0 %2686
        %2688 = vrot.lane.b32.xlu0 %v2667, 48
        %v2689 = vpop.permute.xlu0 %2688
        %2690 = vrot.lane.b32.xlu0 %v2670, 48
        %v2691 = vpop.permute.xlu0 %2690
        %2692 = vrot.lane.b32.xlu0 %v2672, 48
        %v2693 = vpop.permute.xlu0 %2692
        %2694 = vrot.lane.b32.xlu0 %v2677, 48
        %v2695 = vpop.permute.xlu0 %2694
        %2696 = vrot.lane.b32.xlu0 %v2505, 56
        %v2697 = vpop.permute.xlu0 %2696
        %2698 = vrot.lane.b32.xlu0 %v2532, 56
        %v2699 = vpop.permute.xlu0 %2698
        %v2700 = vrot.slane %v2573, 1
        %v2701 = vor.u32 %v2570, %v2700
        %v2702 = vrot.slane %v2578, 1
        %v2703 = vsel %vm498, %v2701, %v2702
        %v2704 = vor.u32 %v2673, %v2702
        %2705 = vrot.lane.b32.xlu0 %v2703, 64
        %v2706 = vpop.permute.xlu0 %2705
        %2707 = vrot.lane.b32.xlu0 %v2704, 64
        %v2708 = vpop.permute.xlu0 %2707
        %v2709 = vrot.slane %v2505, 1
        %v2710 = vrot.slane %v2532, 1
        %v2711 = vsel %vm611, %v2709, %v2710
        %2712 = vrot.lane.b32.xlu0 %v2711, 72
        %v2713 = vpop.permute.xlu0 %2712
        %2714 = vrot.lane.b32.xlu0 %v2710, 72
        %v2715 = vpop.permute.xlu0 %2714
        %v2718 = vunpack.c.l.b16 %v431
        %v2719 = vunpack.c.l.b16 %v432
        %v2720 = vpack.c.b16 %v2719, %v2718
        %v2721 = vrot.slane %v469, 6
        %v2722 = vrot.slane %v470, 6
        %v2723 = vrot.slane %v471, 6
        %v2724 = vrot.slane %v472, 6
        %v2725 = vrot.slane %v473, 6
        %v2726 = vrot.slane %v1372, 6
        %v2727 = vrot.slane %v1996, 6
        %v2728 = vrot.slane %v2720, 6
        %2729 = vrot.lane.b32.xlu0 %v2721, 80
        %v2730 = vpop.permute.xlu0 %2729
        %2731 = vrot.lane.b32.xlu0 %v2722, 80
        %v2732 = vpop.permute.xlu0 %2731
        %2733 = vrot.lane.b32.xlu0 %v2723, 80
        %v2734 = vpop.permute.xlu0 %2733
        %2735 = vrot.lane.b32.xlu0 %v2724, 80
        %v2736 = vpop.permute.xlu0 %2735
        %2737 = vrot.lane.b32.xlu0 %v2725, 80
        %v2738 = vpop.permute.xlu0 %2737
        %2739 = vrot.lane.b32.xlu0 %v2726, 80
        %v2740 = vpop.permute.xlu0 %2739
        %2741 = vrot.lane.b32.xlu0 %v2727, 80
        %v2742 = vpop.permute.xlu0 %2741
        %2743 = vrot.lane.b32.xlu0 %v2728, 80
        %v2744 = vpop.permute.xlu0 %2743
        %v2746 = vunpack.c.l.b16 %v433
        %v2747 = vpack.c.b16 %v2746, %v2746
        %v2748 = vrot.slane %v536, 6
        %v2749 = vrot.slane %v538, 7
        %v2750 = vor.u32 %v2748, %v2749
        %v2751 = vrot.slane %v543, 7
        %v2752 = vsel %vm2533, %v2750, %v2751
        %v2753 = vrot.slane %v548, 6
        %v2754 = vrot.slane %v550, 7
        %v2755 = vor.u32 %v2753, %v2754
        %v2756 = vrot.slane %v555, 7
        %v2757 = vsel %vm2533, %v2755, %v2756
        %v2758 = vrot.slane %v560, 6
        %v2759 = vrot.slane %v562, 7
        %v2760 = vor.u32 %v2758, %v2759
        %v2761 = vrot.slane %v567, 7
        %v2762 = vsel %vm2533, %v2760, %v2761
        %v2763 = vrot.slane %v572, 6
        %v2764 = vrot.slane %v574, 7
        %v2765 = vor.u32 %v2763, %v2764
        %v2766 = vrot.slane %v579, 7
        %v2767 = vsel %vm2533, %v2765, %v2766
        %v2768 = vrot.slane %v584, 6
        %v2769 = vrot.slane %v586, 7
        %v2770 = vor.u32 %v2768, %v2769
        %v2771 = vrot.slane %v591, 7
        %v2772 = vsel %vm2533, %v2770, %v2771
        %v2773 = vrot.slane %v1393, 6
        %v2774 = vrot.slane %v1395, 7
        %v2775 = vor.u32 %v2773, %v2774
        %v2776 = vrot.slane %v1400, 7
        %v2777 = vsel %vm2533, %v2775, %v2776
        %v2778 = vrot.slane %v2046, 6
        %v2779 = vrot.slane %v2049, 7
        %v2780 = vor.u32 %v2778, %v2779
        %v2781 = vrot.slane %v2053, 7
        %v2782 = vsel %vm2533, %v2780, %v2781
        %v2784 = vshrl.u32 %v2720, 16
        %v2786 = vrot.slane %v2784, 6
        %v2787 = vshll.u32 %v2720, 16
        %v2789 = vrot.slane %v2787, 7
        %v2790 = vor.u32 %v2786, %v2789
        %v2792 = vshll.u32 %v2747, 16
        %v2794 = vrot.slane %v2792, 7
        %v2795 = vsel %vm2533, %v2790, %v2794
        %2796 = vrot.lane.b32.xlu0 %v2750, 88
        %v2797 = vpop.permute.xlu0 %2796
        %2798 = vrot.lane.b32.xlu0 %v2752, 88
        %v2799 = vpop.permute.xlu0 %2798
        %2800 = vrot.lane.b32.xlu0 %v2755, 88
        %v2801 = vpop.permute.xlu0 %2800
        %2802 = vrot.lane.b32.xlu0 %v2757, 88
        %v2803 = vpop.permute.xlu0 %2802
        %2804 = vrot.lane.b32.xlu0 %v2760, 88
        %v2805 = vpop.permute.xlu0 %2804
        %2806 = vrot.lane.b32.xlu0 %v2762, 88
        %v2807 = vpop.permute.xlu0 %2806
        %2808 = vrot.lane.b32.xlu0 %v2765, 88
        %v2809 = vpop.permute.xlu0 %2808
        %2810 = vrot.lane.b32.xlu0 %v2767, 88
        %v2811 = vpop.permute.xlu0 %2810
        %2812 = vrot.lane.b32.xlu0 %v2770, 88
        %v2813 = vpop.permute.xlu0 %2812
        %2814 = vrot.lane.b32.xlu0 %v2772, 88
        %v2815 = vpop.permute.xlu0 %2814
        %2816 = vrot.lane.b32.xlu0 %v2775, 88
        %v2817 = vpop.permute.xlu0 %2816
        %2818 = vrot.lane.b32.xlu0 %v2777, 88
        %v2819 = vpop.permute.xlu0 %2818
        %2820 = vrot.lane.b32.xlu0 %v2780, 88
        %v2821 = vpop.permute.xlu0 %2820
        %2822 = vrot.lane.b32.xlu0 %v2782, 88
        %v2823 = vpop.permute.xlu0 %2822
        %2824 = vrot.lane.b32.xlu0 %v2790, 88
        %v2825 = vpop.permute.xlu0 %2824
        %2826 = vrot.lane.b32.xlu0 %v2795, 88
        %v2827 = vpop.permute.xlu0 %2826
        %v2828 = vrot.slane %v493, 7
        %v2829 = vsel %vm2614, %v1998, %v2828
        %v2830 = vrot.slane %v494, 7
        %v2831 = vsel %vm2614, %v1999, %v2830
        %v2832 = vrot.slane %v495, 7
        %v2833 = vsel %vm2614, %v2000, %v2832
        %v2834 = vrot.slane %v496, 7
        %v2835 = vsel %vm2614, %v2001, %v2834
        %v2836 = vrot.slane %v497, 7
        %v2837 = vsel %vm2614, %v2002, %v2836
        %v2838 = vrot.slane %v1391, 7
        %v2839 = vsel %vm2614, %v2003, %v2838
        %v2840 = vrot.slane %v2023, 7
        %v2841 = vsel %vm2614, %v2004, %v2840
        %v2842 = vrot.slane %v2720, 7
        %v2843 = vrot.slane %v2747, 7
        %v2844 = vsel %vm2614, %v2842, %v2843
        %2845 = vrot.lane.b32.xlu0 %v2829, 96
        %v2846 = vpop.permute.xlu0 %2845
        %2847 = vrot.lane.b32.xlu0 %v2831, 96
        %v2848 = vpop.permute.xlu0 %2847
        %2849 = vrot.lane.b32.xlu0 %v2833, 96
        %v2850 = vpop.permute.xlu0 %2849
        %2851 = vrot.lane.b32.xlu0 %v2835, 96
        %v2852 = vpop.permute.xlu0 %2851
        %2853 = vrot.lane.b32.xlu0 %v2837, 96
        %v2854 = vpop.permute.xlu0 %2853
        %2855 = vrot.lane.b32.xlu0 %v2839, 96
        %v2856 = vpop.permute.xlu0 %2855
        %2857 = vrot.lane.b32.xlu0 %v2841, 96
        %v2858 = vpop.permute.xlu0 %2857
        %2859 = vrot.lane.b32.xlu0 %v2842, 96
        %v2860 = vpop.permute.xlu0 %2859
        %2861 = vrot.lane.b32.xlu0 %v2844, 96
        %v2862 = vpop.permute.xlu0 %2861
        %v2863 = vrot.slane %v683, 7
        %v2864 = vor.u32 %v2863, %v543
        %v2865 = vsel %vm1810, %v2027, %v2864
        %v2866 = vrot.slane %v692, 7
        %v2867 = vor.u32 %v2866, %v555
        %v2868 = vsel %vm1810, %v2030, %v2867
        %v2869 = vrot.slane %v701, 7
        %v2870 = vor.u32 %v2869, %v567
        %v2871 = vsel %vm1810, %v2033, %v2870
        %v2872 = vrot.slane %v710, 7
        %v2873 = vor.u32 %v2872, %v579
        %v2874 = vsel %vm1810, %v2036, %v2873
        %v2875 = vrot.slane %v719, 7
        %v2876 = vor.u32 %v2875, %v591
        %v2877 = vsel %vm1810, %v2039, %v2876
        %v2878 = vrot.slane %v1690, 7
        %v2879 = vor.u32 %v2878, %v1400
        %v2880 = vsel %vm1810, %v2042, %v2879
        %v2881 = vrot.slane %v2110, 7
        %v2882 = vor.u32 %v2881, %v2053
        %v2883 = vsel %vm1810, %v2048, %v2882
        %v2884 = vrot.slane %v2784, 7
        %v2885 = vor.u32 %v2884, %v2787
        %v2886 = vshrl.u32 %v2747, 16
        %v2888 = vrot.slane %v2886, 7
        %v2889 = vor.u32 %v2888, %v2792
        %v2890 = vsel %vm1810, %v2884, %v2889
        %2891 = vrot.lane.b32.xlu0 %v2865, 104
        %v2892 = vpop.permute.xlu0 %2891
        %2893 = vrot.lane.b32.xlu0 %v2868, 104
        %v2894 = vpop.permute.xlu0 %2893
        %2895 = vrot.lane.b32.xlu0 %v2871, 104
        %v2896 = vpop.permute.xlu0 %2895
        %2897 = vrot.lane.b32.xlu0 %v2874, 104
        %v2898 = vpop.permute.xlu0 %2897
        %2899 = vrot.lane.b32.xlu0 %v2877, 104
        %v2900 = vpop.permute.xlu0 %2899
        %2901 = vrot.lane.b32.xlu0 %v2880, 104
        %v2902 = vpop.permute.xlu0 %2901
        %2903 = vrot.lane.b32.xlu0 %v2883, 104
        %v2904 = vpop.permute.xlu0 %2903
        %2905 = vrot.lane.b32.xlu0 %v2885, 104
        %v2906 = vpop.permute.xlu0 %2905
        %2907 = vrot.lane.b32.xlu0 %v2890, 104
        %v2908 = vpop.permute.xlu0 %2907
        %2909 = vrot.lane.b32.xlu0 %v2720, 112
        %v2910 = vpop.permute.xlu0 %2909
        %2911 = vrot.lane.b32.xlu0 %v2747, 112
        %v2912 = vpop.permute.xlu0 %2911
        %v2913 = vrot.slane %v2787, 1
        %v2914 = vor.u32 %v2784, %v2913
        %v2915 = vrot.slane %v2792, 1
        %v2916 = vsel %vm498, %v2914, %v2915
        %v2917 = vor.u32 %v2886, %v2915
        %2918 = vrot.lane.b32.xlu0 %v2916, 120
        %v2919 = vpop.permute.xlu0 %2918
        %2920 = vrot.lane.b32.xlu0 %v2917, 120
        %v2921 = vpop.permute.xlu0 %2920
        %v2923 = vsel %vm1420, %v1996, %v2491
        %v2925 = vsel %vm1420, %v2023, %v2493
        %v2927 = vsel %vm1437, %v2923, %v2498
        %v2929 = vsel %vm1437, %v2925, %v2500
        %v2931 = vsel %vm1454, %v1443, %v2515
        %v2932 = vsel %vm1454, %v2152, %v2515
        %v2934 = vsel %vm1454, %v1445, %v2517
        %v2935 = vsel %vm1454, %v2154, %v2517
        %v2937 = vsel %vm1454, %v1447, %v2519
        %v2938 = vsel %vm1454, %v2156, %v2519
        %v2940 = vsel %vm1454, %v1449, %v2521
        %v2941 = vsel %vm1454, %v2158, %v2521
        %v2943 = vsel %vm1454, %v1451, %v2523
        %v2944 = vsel %vm1454, %v2160, %v2523
        %v2946 = vsel %vm1454, %v1453, %v2525
        %v2947 = vsel %vm1454, %v2162, %v2525
        %v2949 = vsel %vm1454, %v2164, %v2527
        %v2950 = vsel %vm1454, %v2166, %v2527
        %v2952 = vsel %vm1454, %v2927, %v2529
        %v2953 = vsel %vm1454, %v2929, %v2529
        %v2955 = vsel %vm1471, %v2931, %v2583
        %v2957 = vsel %vm1471, %v2932, %v2585
        %v2959 = vsel %vm1471, %v2934, %v2587
        %v2961 = vsel %vm1471, %v2935, %v2589
        %v2963 = vsel %vm1471, %v2937, %v2591
        %v2965 = vsel %vm1471, %v2938, %v2593
        %v2967 = vsel %vm1471, %v2940, %v2595
        %v2969 = vsel %vm1471, %v2941, %v2597
        %v2971 = vsel %vm1471, %v2943, %v2599
        %v2973 = vsel %vm1471, %v2944, %v2601
        %v2975 = vsel %vm1471, %v2946, %v2603
        %v2977 = vsel %vm1471, %v2947, %v2605
        %v2979 = vsel %vm1471, %v2949, %v2607
        %v2981 = vsel %vm1471, %v2950, %v2609
        %v2983 = vsel %vm1471, %v2952, %v2611
        %v2985 = vsel %vm1471, %v2953, %v2613
        %v2986 = vsel %vm1488, %v2955, %v1794
        %v2988 = vsel %vm1488, %v2957, %v2633
        %v2989 = vsel %vm1488, %v2959, %v1796
        %v2991 = vsel %vm1488, %v2961, %v2635
        %v2992 = vsel %vm1488, %v2963, %v1798
        %v2994 = vsel %vm1488, %v2965, %v2637
        %v2995 = vsel %vm1488, %v2967, %v1800
        %v2997 = vsel %vm1488, %v2969, %v2639
        %v2998 = vsel %vm1488, %v2971, %v1802
        %v3000 = vsel %vm1488, %v2973, %v2641
        %v3001 = vsel %vm1488, %v2975, %v1804
        %v3003 = vsel %vm1488, %v2977, %v2643
        %v3004 = vsel %vm1488, %v2979, %v1806
        %v3006 = vsel %vm1488, %v2981, %v2645
        %v3008 = vsel %vm1488, %v2983, %v2647
        %v3010 = vsel %vm1488, %v2985, %v2649
        %v3011 = vsel %vm1505, %v2986, %v1848
        %v3013 = vsel %vm1505, %v2988, %v2679
        %v3014 = vsel %vm1505, %v2989, %v1852
        %v3016 = vsel %vm1505, %v2991, %v2681
        %v3017 = vsel %vm1505, %v2992, %v1856
        %v3019 = vsel %vm1505, %v2994, %v2683
        %v3020 = vsel %vm1505, %v2995, %v1860
        %v3022 = vsel %vm1505, %v2997, %v2685
        %v3023 = vsel %vm1505, %v2998, %v1864
        %v3025 = vsel %vm1505, %v3000, %v2687
        %v3026 = vsel %vm1505, %v3001, %v1868
        %v3028 = vsel %vm1505, %v3003, %v2689
        %v3029 = vsel %vm1505, %v3004, %v1872
        %v3031 = vsel %vm1505, %v3006, %v2691
        %v3033 = vsel %vm1505, %v3008, %v2693
        %v3035 = vsel %vm1505, %v3010, %v2695
        %v3036 = vsel %vm1522, %v3011, %v941
        %v3037 = vsel %vm1522, %v3013, %v1878
        %v3038 = vsel %vm1522, %v3014, %v943
        %v3039 = vsel %vm1522, %v3016, %v1880
        %v3040 = vsel %vm1522, %v3017, %v945
        %v3041 = vsel %vm1522, %v3019, %v1882
        %v3042 = vsel %vm1522, %v3020, %v947
        %v3043 = vsel %vm1522, %v3022, %v1884
        %v3044 = vsel %vm1522, %v3023, %v949
        %v3045 = vsel %vm1522, %v3025, %v1886
        %v3046 = vsel %vm1522, %v3026, %v951
        %v3047 = vsel %vm1522, %v3028, %v1888
        %v3048 = vsel %vm1522, %v3029, %v1890
        %v3049 = vsel %vm1522, %v3031, %v1892
        %v3051 = vsel %vm1522, %v3033, %v2697
        %v3053 = vsel %vm1522, %v3035, %v2699
        %v3054 = vsel %vm1539, %v3036, %v1077
        %v3055 = vsel %vm1539, %v3037, %v1910
        %v3056 = vsel %vm1539, %v3038, %v1079
        %v3057 = vsel %vm1539, %v3039, %v1912
        %v3058 = vsel %vm1539, %v3040, %v1081
        %v3059 = vsel %vm1539, %v3041, %v1914
        %v3060 = vsel %vm1539, %v3042, %v1083
        %v3061 = vsel %vm1539, %v3043, %v1916
        %v3062 = vsel %vm1539, %v3044, %v1085
        %v3063 = vsel %vm1539, %v3045, %v1918
        %v3064 = vsel %vm1539, %v3046, %v1087
        %v3065 = vsel %vm1539, %v3047, %v1920
        %v3066 = vsel %vm1539, %v3048, %v1922
        %v3067 = vsel %vm1539, %v3049, %v1924
        %v3069 = vsel %vm1539, %v3051, %v2706
        %v3071 = vsel %vm1539, %v3053, %v2708
        %v3072 = vsel %vm1556, %v3054, %v1117
        %v3073 = vsel %vm1556, %v3055, %v1931
        %v3074 = vsel %vm1556, %v3056, %v1119
        %v3075 = vsel %vm1556, %v3057, %v1933
        %v3076 = vsel %vm1556, %v3058, %v1121
        %v3077 = vsel %vm1556, %v3059, %v1935
        %v3078 = vsel %vm1556, %v3060, %v1123
        %v3079 = vsel %vm1556, %v3061, %v1937
        %v3080 = vsel %vm1556, %v3062, %v1125
        %v3081 = vsel %vm1556, %v3063, %v1939
        %v3082 = vsel %vm1556, %v3064, %v1127
        %v3083 = vsel %vm1556, %v3065, %v1941
        %v3084 = vsel %vm1556, %v3066, %v1943
        %v3085 = vsel %vm1556, %v3067, %v1945
        %v3087 = vsel %vm1556, %v3069, %v2713
        %v3089 = vsel %vm1556, %v3071, %v2715
        %v3091 = vsel %vm1573, %v3072, %v2730
        %v3092 = vsel %vm1573, %v3073, %v2730
        %v3094 = vsel %vm1573, %v3074, %v2732
        %v3095 = vsel %vm1573, %v3075, %v2732
        %v3097 = vsel %vm1573, %v3076, %v2734
        %v3098 = vsel %vm1573, %v3077, %v2734
        %v3100 = vsel %vm1573, %v3078, %v2736
        %v3101 = vsel %vm1573, %v3079, %v2736
        %v3103 = vsel %vm1573, %v3080, %v2738
        %v3104 = vsel %vm1573, %v3081, %v2738
        %v3106 = vsel %vm1573, %v3082, %v2740
        %v3107 = vsel %vm1573, %v3083, %v2740
        %v3109 = vsel %vm1573, %v3084, %v2742
        %v3110 = vsel %vm1573, %v3085, %v2742
        %v3112 = vsel %vm1573, %v3087, %v2744
        %v3113 = vsel %vm1573, %v3089, %v2744
        %v3115 = vsel %vm1590, %v3091, %v2797
        %v3117 = vsel %vm1590, %v3092, %v2799
        %v3119 = vsel %vm1590, %v3094, %v2801
        %v3121 = vsel %vm1590, %v3095, %v2803
        %v3123 = vsel %vm1590, %v3097, %v2805
        %v3125 = vsel %vm1590, %v3098, %v2807
        %v3127 = vsel %vm1590, %v3100, %v2809
        %v3129 = vsel %vm1590, %v3101, %v2811
        %v3131 = vsel %vm1590, %v3103, %v2813
        %v3133 = vsel %vm1590, %v3104, %v2815
        %v3135 = vsel %vm1590, %v3106, %v2817
        %v3137 = vsel %vm1590, %v3107, %v2819
        %v3139 = vsel %vm1590, %v3109, %v2821
        %v3141 = vsel %vm1590, %v3110, %v2823
        %v3143 = vsel %vm1590, %v3112, %v2825
        %v3145 = vsel %vm1590, %v3113, %v2827
        %v3146 = vsel %vm1607, %v3115, %v2008
        %v3148 = vsel %vm1607, %v3117, %v2846
        %v3149 = vsel %vm1607, %v3119, %v2010
        %v3151 = vsel %vm1607, %v3121, %v2848
        %v3152 = vsel %vm1607, %v3123, %v2012
        %v3154 = vsel %vm1607, %v3125, %v2850
        %v3155 = vsel %vm1607, %v3127, %v2014
        %v3157 = vsel %vm1607, %v3129, %v2852
        %v3158 = vsel %vm1607, %v3131, %v2016
        %v3160 = vsel %vm1607, %v3133, %v2854
        %v3161 = vsel %vm1607, %v3135, %v2018
        %v3163 = vsel %vm1607, %v3137, %v2856
        %v3164 = vsel %vm1607, %v3139, %v2020
        %v3166 = vsel %vm1607, %v3141, %v2858
        %v3168 = vsel %vm1607, %v3143, %v2860
        %v3170 = vsel %vm1607, %v3145, %v2862
        %v3171 = vsel %vm1624, %v3146, %v2061
        %v3173 = vsel %vm1624, %v3148, %v2892
        %v3174 = vsel %vm1624, %v3149, %v2065
        %v3176 = vsel %vm1624, %v3151, %v2894
        %v3177 = vsel %vm1624, %v3152, %v2069
        %v3179 = vsel %vm1624, %v3154, %v2896
        %v3180 = vsel %vm1624, %v3155, %v2073
        %v3182 = vsel %vm1624, %v3157, %v2898
        %v3183 = vsel %vm1624, %v3158, %v2077
        %v3185 = vsel %vm1624, %v3160, %v2900
        %v3186 = vsel %vm1624, %v3161, %v2081
        %v3188 = vsel %vm1624, %v3163, %v2902
        %v3189 = vsel %vm1624, %v3164, %v2085
        %v3191 = vsel %vm1624, %v3166, %v2904
        %v3193 = vsel %vm1624, %v3168, %v2906
        %v3195 = vsel %vm1624, %v3170, %v2908
        %v3196 = vsel %vm1641, %v3171, %v1378
        %v3197 = vsel %vm1641, %v3173, %v2091
        %v3198 = vsel %vm1641, %v3174, %v1380
        %v3199 = vsel %vm1641, %v3176, %v2093
        %v3200 = vsel %vm1641, %v3177, %v1382
        %v3201 = vsel %vm1641, %v3179, %v2095
        %v3202 = vsel %vm1641, %v3180, %v1384
        %v3203 = vsel %vm1641, %v3182, %v2097
        %v3204 = vsel %vm1641, %v3183, %v1386
        %v3205 = vsel %vm1641, %v3185, %v2099
        %v3206 = vsel %vm1641, %v3186, %v1388
        %v3207 = vsel %vm1641, %v3188, %v2101
        %v3208 = vsel %vm1641, %v3189, %v2103
        %v3209 = vsel %vm1641, %v3191, %v2105
        %v3211 = vsel %vm1641, %v3193, %v2910
        %v3213 = vsel %vm1641, %v3195, %v2912
        %v3214 = vsel %vm1658, %v3196, %v1409
        %v3215 = vsel %vm1658, %v3197, %v2116
        %v3216 = vsel %vm1658, %v3198, %v1411
        %v3217 = vsel %vm1658, %v3199, %v2118
        %v3218 = vsel %vm1658, %v3200, %v1413
        %v3219 = vsel %vm1658, %v3201, %v2120
        %v3220 = vsel %vm1658, %v3202, %v1415
        %v3221 = vsel %vm1658, %v3203, %v2122
        %v3222 = vsel %vm1658, %v3204, %v1417
        %v3223 = vsel %vm1658, %v3205, %v2124
        %v3224 = vsel %vm1658, %v3206, %v1419
        %v3225 = vsel %vm1658, %v3207, %v2126
        %v3226 = vsel %vm1658, %v3208, %v2128
        %v3227 = vsel %vm1658, %v3209, %v2130
        %v3229 = vsel %vm1658, %v3211, %v2919
        %v3231 = vsel %vm1658, %v3213, %v2921
        %v3248 = vrot.slane %v2465, 1
        %v3249 = vrot.slane %v2467, 1
        %v3250 = vsel %vm611, %v3248, %v3249
        %v3251 = vrot.slane %v2468, 1
        %v3252 = vrot.slane %v2470, 1
        %v3253 = vsel %vm611, %v3251, %v3252
        %v3254 = vrot.slane %v2471, 1
        %v3255 = vrot.slane %v2473, 1
        %v3256 = vsel %vm611, %v3254, %v3255
        %v3257 = vrot.slane %v2474, 1
        %v3258 = vrot.slane %v2476, 1
        %v3259 = vsel %vm611, %v3257, %v3258
        %v3260 = vrot.slane %v2477, 1
        %v3261 = vrot.slane %v2479, 1
        %v3262 = vsel %vm611, %v3260, %v3261
        %v3263 = vrot.slane %v2480, 1
        %v3264 = vrot.slane %v2482, 1
        %v3265 = vsel %vm611, %v3263, %v3264
        %v3266 = vrot.slane %v2483, 1
        %v3267 = vrot.slane %v2485, 1
        %v3268 = vsel %vm611, %v3266, %v3267
        %v3269 = vrot.slane %v2487, 1
        %v3270 = vrot.slane %v2489, 1
        %v3271 = vsel %vm611, %v3269, %v3270
        %v3296 = vrot.slane %v3214, 2
        %v3297 = vrot.slane %v3215, 2
        %v3298 = vsel %vm741, %v3296, %v3297
        %v3299 = vrot.slane %v3216, 2
        %v3300 = vrot.slane %v3217, 2
        %v3301 = vsel %vm741, %v3299, %v3300
        %v3302 = vrot.slane %v3218, 2
        %v3303 = vrot.slane %v3219, 2
        %v3304 = vsel %vm741, %v3302, %v3303
        %v3305 = vrot.slane %v3220, 2
        %v3306 = vrot.slane %v3221, 2
        %v3307 = vsel %vm741, %v3305, %v3306
        %v3308 = vrot.slane %v3222, 2
        %v3309 = vrot.slane %v3223, 2
        %v3310 = vsel %vm741, %v3308, %v3309
        %v3311 = vrot.slane %v3224, 2
        %v3312 = vrot.slane %v3225, 2
        %v3313 = vsel %vm741, %v3311, %v3312
        %v3314 = vrot.slane %v3226, 2
        %v3315 = vrot.slane %v3227, 2
        %v3316 = vsel %vm741, %v3314, %v3315
        %v3317 = vrot.slane %v3229, 2
        %v3318 = vrot.slane %v3231, 2
        %v3319 = vsel %vm741, %v3317, %v3318
        %v3328 = vrot.slane %v1372, 3
        %v3329 = vrot.slane %v1391, 3
        %v3330 = vsel %vm855, %v3328, %v3329
        %v3331 = vrot.slane %v1996, 3
        %v3332 = vrot.slane %v2023, 3
        %v3333 = vsel %vm855, %v3331, %v3332
        %v3334 = vrot.slane %v2720, 3
        %v3335 = vrot.slane %v2747, 3
        %v3336 = vsel %vm855, %v3334, %v3335
        %v3337 = vld [vmem:[#allocation7] sm:$0xf]
        %v3338 = vld [vmem:[#allocation7 + $0x4] sm:$0xf]
        %v3339 = vld [vmem:[#allocation7 + $0x8] sm:$0xf]
        %v3340 = vld [vmem:[#allocation7 + $0xc] sm:$0xf]
        %v3341 = vld [vmem:[#allocation7 + $0x10] sm:$0xf]
        %v3342 = vld [vmem:[#allocation7 + $0x14] sm:$0xf]
        %v3343 = vld [vmem:[#allocation7 + $0x18] sm:$0xf]
        %v3344 = vld [vmem:[#allocation7 + $0x1c] sm:$0xf]
        %v3345 = vld [vmem:[#allocation7 + $0x20] sm:$0xf]
        %v3346 = vld [vmem:[#allocation7 + $0x24] sm:$0xf]
        %v3347 = vld [vmem:[#allocation7 + $0x28] sm:$0xf]
        %v3348 = vld [vmem:[#allocation7 + $0x2c] sm:$0xf]
        %v3349 = vld [vmem:[#allocation7 + $0x30] sm:$0xf]
        %v3350 = vld [vmem:[#allocation7 + $0x34] sm:$0xf]
        %v3351 = vld [vmem:[#allocation7 + $0x38] sm:$0xf]
        %v3352 = vld [vmem:[#allocation7 + $0x3c] sm:$0xf]
        %v3353 = vld [vmem:[#allocation7 + $0x40] sm:$0xf]
        %v3354 = vld [vmem:[#allocation7 + $0x44] sm:$0xf]
        %v3355 = vld [vmem:[#allocation7 + $0x48] sm:$0xf]
        %v3356 = vld [vmem:[#allocation7 + $0x4c] sm:$0xf]
        %v3357 = vld [vmem:[#allocation7 + $0x50] sm:$0xf]
        %v3358 = vld [vmem:[#allocation7 + $0x54] sm:$0xf]
        %v3359 = vld [vmem:[#allocation7 + $0x58] sm:$0xf]
        %v3360 = vld [vmem:[#allocation7 + $0x5c] sm:$0xf]
        %v3361 = vld [vmem:[#allocation7 + $0x60] sm:$0xf]
        %v3362 = vld [vmem:[#allocation7 + $0x64] sm:$0xf]
        %v3363 = vld [vmem:[#allocation7 + $0x68] sm:$0xf]
        %v3364 = vld [vmem:[#allocation7 + $0x6c] sm:$0xf]
        %v3365 = vld [vmem:[#allocation7 + $0x70] sm:$0xf]
        %v3366 = vld [vmem:[#allocation7 + $0x74] sm:$0xf]
        %v3367 = vld [vmem:[#allocation7 + $0x78] sm:$0xf]
        %v3368 = vld [vmem:[#allocation7 + $0x7c] sm:$0xf]
        %v3369 = vld [vmem:[#allocation7 + $0x80] sm:$0xf]
        %v3370 = vld [vmem:[#allocation7 + $0x84] sm:$0xf]
        %v3371 = vld [vmem:[#allocation7 + $0x88] sm:$0xf]
        %v3372 = vld [vmem:[#allocation7 + $0x8c] sm:$0xf]
        %v3373 = vld [vmem:[#allocation7 + $0x90] sm:$0xf]
        %v3374 = vld [vmem:[#allocation7 + $0x94] sm:$0xf]
        %v3375 = vld [vmem:[#allocation7 + $0x98] sm:$0xf]
        %v3376 = vld [vmem:[#allocation7 + $0x9c] sm:$0xf]
        %v3377 = vld [vmem:[#allocation7 + $0xa0] sm:$0xf]
        %v3378 = vld [vmem:[#allocation7 + $0xa4] sm:$0xf]
        %v3379 = vld [vmem:[#allocation7 + $0xa8] sm:$0xf]
        %v3380 = vld [vmem:[#allocation7 + $0xac] sm:$0xf]
        %v3381 = vld [vmem:[#allocation7 + $0xb0] sm:$0xf]
        %v3382 = vld [vmem:[#allocation7 + $0xb4] sm:$0xf]
        %v3383 = vld [vmem:[#allocation7 + $0xb8] sm:$0xf]
        %v3384 = vld [vmem:[#allocation7 + $0xbc] sm:$0xf]
        %v3385 = vld [vmem:[#allocation7 + $0xc0] sm:$0xf]
        %v3435 = vunpack.c.l.b16 %v3337
        %v3436 = vunpack.c.l.b16 %v3338
        %v3437 = vunpack.c.l.b16 %v3339
        %v3438 = vunpack.c.l.b16 %v3340
        %v3439 = vunpack.c.l.b16 %v3341
        %v3440 = vunpack.c.l.b16 %v3342
        %v3441 = vunpack.c.l.b16 %v3343
        %v3442 = vunpack.c.l.b16 %v3344
        %v3443 = vunpack.c.l.b16 %v3345
        %v3444 = vunpack.c.l.b16 %v3346
        %v3445 = vunpack.c.l.b16 %v3347
        %v3446 = vunpack.c.l.b16 %v3348
        %v3447 = vunpack.c.l.b16 %v3349
        %v3448 = vunpack.c.l.b16 %v3350
        %v3449 = vunpack.c.l.b16 %v3351
        %v3450 = vunpack.c.l.b16 %v3352
        %v3451 = vunpack.c.l.b16 %v3353
        %v3452 = vunpack.c.l.b16 %v3354
        %v3453 = vunpack.c.l.b16 %v3355
        %v3454 = vunpack.c.l.b16 %v3356
        %v3455 = vunpack.c.l.b16 %v3357
        %v3456 = vunpack.c.l.b16 %v3358
        %v3457 = vunpack.c.l.b16 %v3359
        %v3458 = vunpack.c.l.b16 %v3360
        %v3459 = vunpack.c.l.b16 %v3361
        %v3460 = vunpack.c.l.b16 %v3362
        %v3461 = vunpack.c.l.b16 %v3363
        %v3462 = vunpack.c.l.b16 %v3364
        %v3463 = vunpack.c.l.b16 %v3365
        %v3464 = vunpack.c.l.b16 %v3366
        %v3465 = vunpack.c.l.b16 %v3367
        %v3466 = vunpack.c.l.b16 %v3368
        %v3467 = vunpack.c.l.b16 %v3369
        %v3468 = vunpack.c.l.b16 %v3370
        %v3469 = vunpack.c.l.b16 %v3371
        %v3470 = vunpack.c.l.b16 %v3372
        %v3471 = vunpack.c.l.b16 %v3373
        %v3472 = vunpack.c.l.b16 %v3374
        %v3473 = vunpack.c.l.b16 %v3375
        %v3474 = vunpack.c.l.b16 %v3376
        %v3475 = vunpack.c.l.b16 %v3377
        %v3476 = vunpack.c.l.b16 %v3378
        %v3477 = vunpack.c.l.b16 %v3379
        %v3478 = vunpack.c.l.b16 %v3380
        %v3479 = vunpack.c.l.b16 %v3381
        %v3480 = vunpack.c.l.b16 %v3382
        %v3481 = vunpack.c.l.b16 %v3383
        %v3482 = vunpack.c.l.b16 %v3384
        %v3483 = vunpack.c.l.b16 %v3385
        %v3484 = vpack.c.b16 %v3436, %v3435
        %v3485 = vpack.c.b16 %v3438, %v3437
        %v3486 = vpack.c.b16 %v3440, %v3439
        %v3487 = vpack.c.b16 %v3442, %v3441
        %v3488 = vpack.c.b16 %v3444, %v3443
        %v3489 = vpack.c.b16 %v3446, %v3445
        %v3490 = vpack.c.b16 %v3448, %v3447
        %v3491 = vpack.c.b16 %v3450, %v3449
        %v3492 = vpack.c.b16 %v3452, %v3451
        %v3493 = vpack.c.b16 %v3454, %v3453
        %v3494 = vpack.c.b16 %v3456, %v3455
        %v3495 = vpack.c.b16 %v3458, %v3457
        %v3496 = vpack.c.b16 %v3460, %v3459
        %v3497 = vpack.c.b16 %v3462, %v3461
        %v3498 = vpack.c.b16 %v3464, %v3463
        %v3499 = vpack.c.b16 %v3466, %v3465
        %v3500 = vpack.c.b16 %v3468, %v3467
        %v3501 = vpack.c.b16 %v3470, %v3469
        %v3502 = vpack.c.b16 %v3472, %v3471
        %v3503 = vpack.c.b16 %v3474, %v3473
        %v3504 = vpack.c.b16 %v3476, %v3475
        %v3505 = vpack.c.b16 %v3478, %v3477
        %v3506 = vpack.c.b16 %v3480, %v3479
        %v3507 = vpack.c.b16 %v3482, %v3481
        %v3508 = vpack.c.b16 %v3483, %v3483
        %v3534 = vsel %vm1420, %v867, 0
        %v3537 = vsel %vm1420, %v870, 0
        %v3540 = vsel %vm1420, %v873, 0
        %v3543 = vsel %vm1420, %v876, 0
        %v3546 = vsel %vm1420, %v879, 0
        %v3549 = vsel %vm1420, %v3330, 0
        %v3552 = vsel %vm1420, %v3333, 0
        %v3555 = vsel %vm1420, %v3336, 0
        %vm3557 = vcmask 1043456
        %v3559 = vsel %vm3557, %v3508, 0
        %3561 = vmatprep.subr.bf16.mxu0 0
        %3562 = vmatpush1.bf16.msra.mxu0 %v3484
        %3563 = vmatprep.subr.bf16.mxu0 0
        %3564 = vmatpush1.bf16.msra.mxu0 %v3485
        %3565 = vmatprep.subr.bf16.mxu0 0
        %3566 = vmatpush1.bf16.msra.mxu0 %v3486
        %3567 = vmatprep.subr.bf16.mxu0 0
        %3568 = vmatpush1.bf16.msra.mxu0 %v3487
        %3569 = vmatprep.subr.bf16.mxu0 0
        %3570 = vmatpush1.bf16.msra.mxu0 %v3488
        %3571 = vmatprep.subr.bf16.mxu0 0
        %3572 = vmatpush1.bf16.msra.mxu0 %v3489
        %3573 = vmatprep.subr.bf16.mxu0 0
        %3574 = vmatpush1.bf16.msra.mxu0 %v3490
        %3575 = vmatprep.subr.bf16.mxu0 0
        %3576 = vmatpush1.bf16.msra.mxu0 %v3491
        %3577 = vmatprep.subr.bf16.mxu0 0
        %3578 = vmatpush1.bf16.msra.mxu0 %v3492
        %3579 = vmatprep.subr.bf16.mxu0 0
        %3580 = vmatpush1.bf16.msra.mxu0 %v3493
        %3581 = vmatprep.subr.bf16.mxu0 0
        %3582 = vmatpush1.bf16.msra.mxu0 %v3494
        %3583 = vmatprep.subr.bf16.mxu0 0
        %3584 = vmatpush1.bf16.msra.mxu0 %v3495
        %3585 = vmatprep.subr.bf16.mxu0 0
        %3586 = vmatpush1.bf16.msra.mxu0 %v3496
        %3587 = vmatprep.subr.bf16.mxu0 0
        %3588 = vmatpush1.bf16.msra.mxu0 %v3497
        %3589 = vmatprep.subr.bf16.mxu0 0
        %3590 = vmatpush1.bf16.msra.mxu0 %v3498
        %3591 = vmatprep.subr.bf16.mxu0 0
        %3592 = vmatpush1.bf16.msra.mxu0 %v3499
        %3593 = vmatprep.mubr.bf16.mxu0 %v3250
        %3594 = vmatmul.mubr.bf16.gmra.mrb[0].mxu0 %v1660
        %v3595 = vpop.f32.mrb[0].mxu0
        %v3596 = vadd.f32 0.0, %v3595
        %v3597 = vpop.f32.mrb[0].mxu0
        %v3598 = vpop.f32.mrb[0].mxu0
        %v3599 = vadd.f32 0.0, %v3598
        %v3600 = vpop.f32.mrb[0].mxu0
        %3601 = vmatprep.mubr.bf16.mxu0 %v3253
        %3602 = vmatmul.mubr.bf16.gmra.mrb[0].mxu0 %v1663
        %v3603 = vpop.f32.mrb[0].mxu0
        %v3604 = vadd.f32 0.0, %v3603
        %v3605 = vpop.f32.mrb[0].mxu0
        %v3606 = vpop.f32.mrb[0].mxu0
        %v3607 = vadd.f32 0.0, %v3606
        %v3608 = vpop.f32.mrb[0].mxu0
        %3609 = vmatprep.mubr.bf16.mxu0 %v3256
        %3610 = vmatmul.mubr.bf16.gmra.mrb[0].mxu0 %v1666
        %v3611 = vpop.f32.mrb[0].mxu0
        %v3612 = vadd.f32 0.0, %v3611
        %v3613 = vpop.f32.mrb[0].mxu0
        %v3614 = vpop.f32.mrb[0].mxu0
        %v3615 = vadd.f32 0.0, %v3614
        %v3616 = vpop.f32.mrb[0].mxu0
        %3617 = vmatprep.mubr.bf16.mxu0 %v3259
        %3618 = vmatmul.mubr.bf16.gmra.mrb[0].mxu0 %v1669
        %v3619 = vpop.f32.mrb[0].mxu0
        %v3620 = vadd.f32 0.0, %v3619
        %v3621 = vpop.f32.mrb[0].mxu0
        %v3622 = vpop.f32.mrb[0].mxu0
        %v3623 = vadd.f32 0.0, %v3622
        %v3624 = vpop.f32.mrb[0].mxu0
        %3625 = vmatprep.mubr.bf16.mxu0 %v3262
        %3626 = vmatmul.mubr.bf16.gmra.mrb[0].mxu0 %v1672
        %v3627 = vpop.f32.mrb[0].mxu0
        %v3628 = vadd.f32 0.0, %v3627
        %v3629 = vpop.f32.mrb[0].mxu0
        %v3630 = vpop.f32.mrb[0].mxu0
        %v3631 = vadd.f32 0.0, %v3630
        %v3632 = vpop.f32.mrb[0].mxu0
        %3633 = vmatprep.mubr.bf16.mxu0 %v3265
        %3634 = vmatmul.mubr.bf16.gmra.mrb[0].mxu0 %v1675
        %v3635 = vpop.f32.mrb[0].mxu0
        %v3636 = vadd.f32 0.0, %v3635
        %v3637 = vpop.f32.mrb[0].mxu0
        %v3638 = vpop.f32.mrb[0].mxu0
        %v3639 = vadd.f32 0.0, %v3638
        %v3640 = vpop.f32.mrb[0].mxu0
        %3641 = vmatprep.mubr.bf16.mxu0 %v3268
        %3642 = vmatmul.mubr.bf16.gmra.mrb[0].mxu0 %v1678
        %v3643 = vpop.f32.mrb[0].mxu0
        %v3644 = vadd.f32 0.0, %v3643
        %v3645 = vpop.f32.mrb[0].mxu0
        %v3646 = vpop.f32.mrb[0].mxu0
        %v3647 = vadd.f32 0.0, %v3646
        %v3648 = vpop.f32.mrb[0].mxu0
        %3649 = vmatprep.mubr.bf16.mxu0 %v3271
        %3650 = vmatmul.mubr.bf16.gmra.mrb[0].mxu0 %v1681
        %v3651 = vpop.f32.mrb[0].mxu0
        %v3652 = vadd.f32 0.0, %v3651
        %v3653 = vpop.f32.mrb[0].mxu0
        %v3654 = vpop.f32.mrb[0].mxu0
        %v3655 = vadd.f32 0.0, %v3654
        %v3656 = vpop.f32.mrb[0].mxu0
        %3657 = vdwg.mxu0
        %3658 = vmatprep.subr.bf16.mxu0 0
        %3659 = vmatpush1.bf16.msra.mxu0 %v3500
        %3660 = vmatprep.subr.bf16.mxu0 0
        %3661 = vmatpush1.bf16.msra.mxu0 %v3501
        %3662 = vmatprep.subr.bf16.mxu0 0
        %3663 = vmatpush1.bf16.msra.mxu0 %v3502
        %3664 = vmatprep.subr.bf16.mxu0 0
        %3665 = vmatpush1.bf16.msra.mxu0 %v3503
        %3666 = vmatprep.subr.bf16.mxu0 0
        %3667 = vmatpush1.bf16.msra.mxu0 %v3504
        %3668 = vmatprep.subr.bf16.mxu0 0
        %3669 = vmatpush1.bf16.msra.mxu0 %v3505
        %3670 = vmatprep.subr.bf16.mxu0 0
        %3671 = vmatpush1.bf16.msra.mxu0 %v3506
        %3672 = vmatprep.subr.bf16.mxu0 0
        %3673 = vmatpush1.bf16.msra.mxu0 %v3507
        %3674 = vmatprep.subr.bf16.mxu0 0
        %3675 = vmatpush1.bf16.msra.mxu0 %v3559
        %3676 = vmatprep.subr.bf16.mxu0 0
        %3677 = vmatpush1.bf16.msra.mxu0 0
        %3678 = vmatprep.subr.bf16.mxu0 0
        %3679 = vmatpush1.bf16.msra.mxu0 0
        %3680 = vmatprep.subr.bf16.mxu0 0
        %3681 = vmatpush1.bf16.msra.mxu0 0
        %3682 = vmatprep.subr.bf16.mxu0 0
        %3683 = vmatpush1.bf16.msra.mxu0 0
        %3684 = vmatprep.subr.bf16.mxu0 0
        %3685 = vmatpush1.bf16.msra.mxu0 0
        %3686 = vmatprep.subr.bf16.mxu0 0
        %3687 = vmatpush1.bf16.msra.mxu0 0
        %3688 = vmatprep.subr.bf16.mxu0 0
        %3689 = vmatpush1.bf16.msra.mxu0 0
        %3690 = vmatprep.mubr.bf16.mxu0 %v3534
        %3691 = vmatmul.mubr.bf16.gmra.mrb[0].mxu0 %v3298
        %v3692 = vpop.f32.mrb[0].mxu0
        %v3693 = vadd.f32 %v3596, %v3692
        %v3694 = vpop.f32.mrb[0].mxu0
        %v3695 = vpop.f32.mrb[0].mxu0
        %v3696 = vadd.f32 %v3599, %v3695
        %v3697 = vpop.f32.mrb[0].mxu0
        %3698 = vmatprep.mubr.bf16.mxu0 %v3537
        %3699 = vmatmul.mubr.bf16.gmra.mrb[0].mxu0 %v3301
        %v3700 = vpop.f32.mrb[0].mxu0
        %v3701 = vadd.f32 %v3604, %v3700
        %v3702 = vpop.f32.mrb[0].mxu0
        %v3703 = vpop.f32.mrb[0].mxu0
        %v3704 = vadd.f32 %v3607, %v3703
        %v3705 = vpop.f32.mrb[0].mxu0
        %3706 = vmatprep.mubr.bf16.mxu0 %v3540
        %3707 = vmatmul.mubr.bf16.gmra.mrb[0].mxu0 %v3304
        %v3708 = vpop.f32.mrb[0].mxu0
        %v3709 = vadd.f32 %v3612, %v3708
        %v3710 = vpop.f32.mrb[0].mxu0
        %v3711 = vpop.f32.mrb[0].mxu0
        %v3712 = vadd.f32 %v3615, %v3711
        %v3713 = vpop.f32.mrb[0].mxu0
        %3714 = vmatprep.mubr.bf16.mxu0 %v3543
        %3715 = vmatmul.mubr.bf16.gmra.mrb[0].mxu0 %v3307
        %v3716 = vpop.f32.mrb[0].mxu0
        %v3717 = vadd.f32 %v3620, %v3716
        %v3718 = vpop.f32.mrb[0].mxu0
        %v3719 = vpop.f32.mrb[0].mxu0
        %v3720 = vadd.f32 %v3623, %v3719
        %v3721 = vpop.f32.mrb[0].mxu0
        %3722 = vmatprep.mubr.bf16.mxu0 %v3546
        %3723 = vmatmul.mubr.bf16.gmra.mrb[0].mxu0 %v3310
        %v3724 = vpop.f32.mrb[0].mxu0
        %v3725 = vadd.f32 %v3628, %v3724
        %v3726 = vpop.f32.mrb[0].mxu0
        %v3727 = vpop.f32.mrb[0].mxu0
        %v3728 = vadd.f32 %v3631, %v3727
        %v3729 = vpop.f32.mrb[0].mxu0
        %3730 = vmatprep.mubr.bf16.mxu0 %v3549
        %3731 = vmatmul.mubr.bf16.gmra.mrb[0].mxu0 %v3313
        %v3732 = vpop.f32.mrb[0].mxu0
        %v3733 = vadd.f32 %v3636, %v3732
        %v3734 = vpop.f32.mrb[0].mxu0
        %v3735 = vpop.f32.mrb[0].mxu0
        %v3736 = vadd.f32 %v3639, %v3735
        %v3737 = vpop.f32.mrb[0].mxu0
        %3738 = vmatprep.mubr.bf16.mxu0 %v3552
        %3739 = vmatmul.mubr.bf16.gmra.mrb[0].mxu0 %v3316
        %v3740 = vpop.f32.mrb[0].mxu0
        %v3741 = vadd.f32 %v3644, %v3740
        %v3742 = vpop.f32.mrb[0].mxu0
        %v3743 = vpop.f32.mrb[0].mxu0
        %v3744 = vadd.f32 %v3647, %v3743
        %v3745 = vpop.f32.mrb[0].mxu0
        %3746 = vmatprep.mubr.bf16.mxu0 %v3555
        %3747 = vmatmul.mubr.bf16.gmra.mrb[0].mxu0 %v3319
        %v3748 = vpop.f32.mrb[0].mxu0
        %v3749 = vadd.f32 %v3652, %v3748
        %v3750 = vpop.f32.mrb[0].mxu0
        %v3751 = vpop.f32.mrb[0].mxu0
        %v3752 = vadd.f32 %v3655, %v3751
        %v3753 = vpop.f32.mrb[0].mxu0
        %3754 = vdwg.mxu0
        %v3755 = vld [vmem:[#allocation8] sm:$0x1]
        %v3757 = vlaneseq
        %v3758 = vshrl.u32 %v3757, 7
        %v3759 = vsub.s32 0, %v3758
        %v3760 = vrot.slane %v3755, %v3759
        %v3762 = vmul.f32 %v3693, %v3760
        %v3763 = vmul.f32 %v3696, %v3760
        %v3764 = vmul.f32 %v3701, %v3760
        %v3765 = vmul.f32 %v3704, %v3760
        %v3766 = vmul.f32 %v3709, %v3760
        %v3767 = vmul.f32 %v3712, %v3760
        %v3768 = vmul.f32 %v3717, %v3760
        %v3769 = vmul.f32 %v3720, %v3760
        %v3770 = vmul.f32 %v3725, %v3760
        %v3771 = vmul.f32 %v3728, %v3760
        %v3772 = vmul.f32 %v3733, %v3760
        %v3773 = vmul.f32 %v3736, %v3760
        %v3774 = vmul.f32 %v3741, %v3760
        %v3775 = vmul.f32 %v3744, %v3760
        %v3776 = vmul.f32 %v3749, %v3760
        %v3777 = vmul.f32 %v3752, %v3760
        %v3778 = vld [vmem:[#allocation10] sm:$0x1]
        %v3780 = vlaneseq
        %v3781 = vshrl.u32 %v3780, 7
        %v3782 = vsub.s32 0, %v3781
        %v3783 = vrot.slane %v3778, %v3782
        %v3785 = vadd.f32 %v3762, %v3783
        %v3786 = vadd.f32 %v3763, %v3783
        %v3787 = vadd.f32 %v3764, %v3783
        %v3788 = vadd.f32 %v3765, %v3783
        %v3789 = vadd.f32 %v3766, %v3783
        %v3790 = vadd.f32 %v3767, %v3783
        %v3791 = vadd.f32 %v3768, %v3783
        %v3792 = vadd.f32 %v3769, %v3783
        %v3793 = vadd.f32 %v3770, %v3783
        %v3794 = vadd.f32 %v3771, %v3783
        %v3795 = vadd.f32 %v3772, %v3783
        %v3796 = vadd.f32 %v3773, %v3783
        %v3797 = vadd.f32 %v3774, %v3783
        %v3798 = vadd.f32 %v3775, %v3783
        %v3799 = vadd.f32 %v3776, %v3783
        %v3800 = vadd.f32 %v3777, %v3783
        %v3801 = vmax.f32 %v3785, 0.0
        %v3802 = vmax.f32 %v3786, 0.0
        %v3803 = vmax.f32 %v3787, 0.0
        %v3804 = vmax.f32 %v3788, 0.0
        %v3805 = vmax.f32 %v3789, 0.0
        %v3806 = vmax.f32 %v3790, 0.0
        %v3807 = vmax.f32 %v3791, 0.0
        %v3808 = vmax.f32 %v3792, 0.0
        %v3809 = vmax.f32 %v3793, 0.0
        %v3810 = vmax.f32 %v3794, 0.0
        %v3811 = vmax.f32 %v3795, 0.0
        %v3812 = vmax.f32 %v3796, 0.0
        %v3813 = vmax.f32 %v3797, 0.0
        %v3814 = vmax.f32 %v3798, 0.0
        %v3815 = vmax.f32 %v3799, 0.0
        %v3816 = vmax.f32 %v3800, 0.0
        %v3817 = vpack.c.bf16 %v3802, %v3801
        %v3818 = vpack.c.bf16 %v3804, %v3803
        %v3819 = vpack.c.bf16 %v3806, %v3805
        %v3820 = vpack.c.bf16 %v3808, %v3807
        %v3821 = vpack.c.bf16 %v3810, %v3809
        %v3822 = vpack.c.bf16 %v3812, %v3811
        %v3823 = vpack.c.bf16 %v3814, %v3813
        %v3824 = vpack.c.bf16 %v3816, %v3815
        %v3833 = vunpack.c.l.b16 %v3817
        %v3834 = vunpack.c.h.b16 %v3817
        %v3835 = vunpack.c.l.b16 %v3818
        %v3836 = vunpack.c.h.b16 %v3818
        %v3837 = vunpack.c.l.b16 %v3819
        %v3838 = vunpack.c.h.b16 %v3819
        %v3839 = vunpack.c.l.b16 %v3820
        %v3840 = vunpack.c.h.b16 %v3820
        %v3841 = vunpack.c.l.b16 %v3821
        %v3842 = vunpack.c.h.b16 %v3821
        %v3843 = vunpack.c.l.b16 %v3822
        %v3844 = vunpack.c.h.b16 %v3822
        %v3845 = vunpack.c.l.b16 %v3823
        %v3846 = vunpack.c.h.b16 %v3823
        %v3847 = vunpack.c.l.b16 %v3824
        %v3848 = vunpack.c.h.b16 %v3824
        %v3849 = vpack.c.b16 %v3833, %v3833
        %v3850 = vpack.c.b16 %v3834, %v3834
        %v3851 = vpack.c.b16 %v3835, %v3835
        %v3852 = vpack.c.b16 %v3836, %v3836
        %v3853 = vpack.c.b16 %v3837, %v3837
        %v3854 = vpack.c.b16 %v3838, %v3838
        %v3855 = vpack.c.b16 %v3839, %v3839
        %v3856 = vpack.c.b16 %v3840, %v3840
        %v3857 = vpack.c.b16 %v3841, %v3841
        %v3858 = vpack.c.b16 %v3842, %v3842
        %v3859 = vpack.c.b16 %v3843, %v3843
        %v3860 = vpack.c.b16 %v3844, %v3844
        %v3861 = vpack.c.b16 %v3845, %v3845
        %v3862 = vpack.c.b16 %v3846, %v3846
        %v3863 = vpack.c.b16 %v3847, %v3847
        %v3864 = vpack.c.b16 %v3848, %v3848
        %vm3881 = vcmask 519168
        %3882 = vst.msk [vmem:[%s359] sm:$0xf] %vm3881, %v3849
        %3883 = vst.msk [vmem:[%s359 + $0x4] sm:$0xf] %vm3881, %v3850
        %3884 = vst.msk [vmem:[%s359 + $0x8] sm:$0xf] %vm3881, %v3851
        %3885 = vst.msk [vmem:[%s359 + $0xc] sm:$0xf] %vm3881, %v3852
        %3886 = vst.msk [vmem:[%s359 + $0x10] sm:$0xf] %vm3881, %v3853
        %3887 = vst.msk [vmem:[%s359 + $0x14] sm:$0xf] %vm3881, %v3854
        %3888 = vst.msk [vmem:[%s359 + $0x18] sm:$0xf] %vm3881, %v3855
        %3889 = vst.msk [vmem:[%s359 + $0x1c] sm:$0xf] %vm3881, %v3856
        %3890 = vst.msk [vmem:[%s359 + $0x20] sm:$0xf] %vm3881, %v3857
        %3891 = vst.msk [vmem:[%s359 + $0x24] sm:$0xf] %vm3881, %v3858
        %3892 = vst.msk [vmem:[%s359 + $0x28] sm:$0xf] %vm3881, %v3859
        %3893 = vst.msk [vmem:[%s359 + $0x2c] sm:$0xf] %vm3881, %v3860
        %3894 = vst.msk [vmem:[%s359 + $0x30] sm:$0xf] %vm3881, %v3861
        %3895 = vst.msk [vmem:[%s359 + $0x34] sm:$0xf] %vm3881, %v3862
        %3896 = vst.msk [vmem:[%s359 + $0x38] sm:$0xf] %vm3881, %v3863
        %3897 = vst.msk [vmem:[%s359 + $0x3c] sm:$0xf] %vm3881, %v3864
        %s3898 = sand.u32 %s171, 1
        %s3899 = scalar_lea.sflag [#allocation4], %s3898
        %s3900 = sand.u32 %s171, 1
        %s3901 = smul.addr %s3900, 64
        %s3902 = scalar_lea.vmem [#allocation11], %s3901
        // Predicated region
        $region61: #{tpu_custom_call.1} parent=39 // pred_check
          %p3903 = pneg %p181
        $region62: #{tpu_custom_call.1} parent=39 // pred_check_branch
          %3905 = sbr.rel (%p3903) target = $region64
        $region63: #{tpu_custom_call.1} parent=39 // pred_region
          %s3906 = smul.u32 8, %s31
          %s3908 = ssub.s32 1024, 1024
          %3909 = vsyncadd %s3899, %s3908
          %s3910 = smul.addr %s3906, 2
          %s3911 = smul.addr %s30, 16
          %s3912 = sadd.s32 %s3910, %s3911
          %s3913 = smul.addr %s3912, 64
          %s3914 = scalar_lea.hbm %s5, %s3913
          %s3915 = sshll.u32 %s3902, 4
          %s3916 = int_to_ptr.vmem [resolvable:$true] %s3915
          %3921 = dma.vmem_to_hbm [thread:$0]  %s3916, 1024, %s3914, %s3899, 64, 64, 4
        $region64: #{tpu_custom_call.1} parent=39 // pred_fallthru
          _
      $region40: #{tpu_custom_call.1} parent=5 // pred_fallthru
        _
      %p3922 = scmp.le.s32.totalorder 2, %s21
      // Predicated region
      $region65: #{tpu_custom_call.1} parent=5 // pred_check
        %p3923 = pneg %p3922
      $region66: #{tpu_custom_call.1} parent=5 // pred_check_branch
        %3925 = sbr.rel (%p3923) target = $region68
      $region67: #{tpu_custom_call.1} parent=5 // pred_region
        %s3926 = ssub.s32 %s21, 2
        // Predicated region
        $region69: #{tpu_custom_call.1} parent=67 // pred_check
          %p3927 = pneg %p187
        $region70: #{tpu_custom_call.1} parent=67 // pred_check_branch
          %3929 = sbr.rel (%p3927) target = $region72
        $region71: #{tpu_custom_call.1} parent=67 // pred_region
          %s3930 = sand.u32 %s172, 1
          %s3931 = scalar_lea.sflag [#allocation4], %s3930
          %s3932 = sand.u32 %s172, 1
          %s3933 = smul.addr %s3932, 64
          %s3934 = scalar_lea.vmem [#allocation11], %s3933
          %3935 = dma.done %s3931, 1024
        $region72: #{tpu_custom_call.1} parent=67 // pred_fallthru
          _
      $region68: #{tpu_custom_call.1} parent=5 // pred_fallthru
        _
    $region6: #{tpu_custom_call.1} parent=1 // loop_footer
      %s25 = sadd.s32 1, %s21
    $region7: #{tpu_custom_call.1} parent=1 // loop_footer_branch
      %20 = sbr.rel target = $region3
    $region8: #{tpu_custom_call.1} parent=1 // loop_exit
      _
    %3936 = vsyncpa [#allocation3], 1
    %s3937 = scalar_lea.sflag [#allocation3], 1
    %3938 = vsyncpa %s3937, 1
    %3939 = vsyncpa [#allocation6], 1
    %s3940 = scalar_lea.sflag [#allocation6], 1
    %3941 = vsyncpa %s3940, 1
    %3942 = vsyncpa [#allocation9], 1
    %3943 = vsyncpa [#allocation4], 1
    %s3944 = scalar_lea.sflag [#allocation4], 1
    %3945 = vsyncpa %s3944, 1

</llo_original>
